<compile_context>
chip_gen: v7x
topology: tpu7x:2x2x1
jax: 0.10.0
libtpu: 0.0.40
codegen_flags: <defaults>
</compile_context>

<pallas_src>
import functools

import jax
import jax.numpy as jnp
from jax.experimental import pallas as pl
from jax.experimental.pallas import tpu as pltpu

VMEM_LIMIT_BYTES = 48 * 1024 * 1024  # safe on v5e/v6e (128 MiB) and v7x (64 MiB)


# ----------------------------------------------------------------------------
# In-kernel helpers
# ----------------------------------------------------------------------------
def _conv_bn_relu(x, w_ref, scale_ref, shift_ref, mask_ref, patch_ref, W):
    """Fused 3x3 conv (pad=1) + folded BN affine + ReLU, channel-major layout.

    x         : (Cin, H*W) value, spatial row-major on the lane axis
    w_ref     : (Cout, 9*Cin) ref  -- taps ordered (dy, dx) outer, channel inner
    scale_ref : (Cout, 1)  gamma / sqrt(var + eps)
    shift_ref : (Cout, 1)  (conv_bias - mean) * scale + beta
    mask_ref  : (9, H*W)   0/1 border mask per tap (implements zero padding)
    patch_ref : (9*Cin, H*W) VMEM scratch for the fused im2col patch
    returns   : (Cout, H*W)
    """
    cin, hw = x.shape
    tap = 0
    for dy in (-1, 0, 1):
        for dx in (-1, 0, 1):
            s = (-(dy * W + dx)) % hw
            # shifted[:, p] = x[:, p + dy*W + dx]  (wrap-around killed by mask)
            shifted = pltpu.roll(x, s, axis=1) if s else x
            patch_ref[tap * cin:(tap + 1) * cin, :] = (
                shifted * mask_ref[tap:tap + 1, :])
            tap += 1
    # Single fused matmul: K = 9*Cin (27 / 108 / 180), lane-dense output.
    acc = jnp.dot(w_ref[...], patch_ref[...],
                  preferred_element_type=jnp.float32)       # (Cout, H*W)
    return jnp.maximum(acc * scale_ref[...] + shift_ref[...], 0.0)


def _conv1_pool_kernel(x_ref, w_ref, scale_ref, shift_ref, mask_ref,
                       o_ref, patch_ref, *, W):
    """conv1 + BN + ReLU + 2x2 pooling max (decimation done outside)."""
    hw = x_ref.shape[1]
    h = _conv_bn_relu(x_ref[...], w_ref, scale_ref, shift_ref,
                      mask_ref, patch_ref, W)                # (12, H*W)
    # Fold the max of the 2x2 pool into the epilogue via lane rotations.
    # Values at the even/even positions (the only ones kept afterwards) are the
    # exact 2x2-window maxima; other lanes are discarded by the caller.
    hm = jnp.maximum(h, pltpu.roll(h, hw - 1, axis=1))       # max(h[p], h[p+1])
    vm = jnp.maximum(hm, pltpu.roll(hm, hw - W, axis=1))     # + row p+W
    o_ref[...] = vm


def _conv23_fc_kernel(x_ref, w2_ref, s2_ref, b2_ref, w3_ref, s3_ref, b3_ref,
                      wfc_ref, bfc_ref, mask_ref, o_ref, p2_ref, p3_ref, *, W):
    """conv2 -> conv3 -> (NCHW flatten, free in this layout) -> FC, fused."""
    h2 = _conv_bn_relu(x_ref[...], w2_ref, s2_ref, b2_ref,
                       mask_ref, p2_ref, W)                  # (20, S)
    h3 = _conv_bn_relu(h2, w3_ref, s3_ref, b3_ref,
                       mask_ref, p3_ref, W)                  # (32, S)
    # FC: out[j] = sum_{c,s} h3[c,s] * Wfc[j,c,s] + b[j].  num_classes is tiny
    # (2), so an exact f32 multiply+reduce on the VPU/XLU is preferable to a
    # masked K x 2 MXU matmul; K stays lane-dense.
    cols = []
    for j in range(wfc_ref.shape[0]):
        per_chan = jnp.sum(h3 * wfc_ref[j], axis=1, keepdims=True)   # (32, 1)
        cols.append(jnp.sum(per_chan, axis=0, keepdims=True))        # (1, 1)
    o_ref[...] = jnp.concatenate(cols, axis=1) + bfc_ref[...]


# ----------------------------------------------------------------------------
# pallas_call wrappers
# ----------------------------------------------------------------------------
def conv1_bn_relu_poolmax(x_flat, w_mat, scale, shift, mask, *, H, W):
    """x_flat: (N, 3, H*W)  ->  (N, 12, H*W) (2x2 max applied, not decimated)."""
    del H  # H only documents the layout; the kernel needs W and HW.
    N, Cin, HW = x_flat.shape
    Cout = w_mat.shape[0]
    kern = functools.partial(_conv1_pool_kernel, W=W)
    return pl.pallas_call(
        kern,
        out_shape=jax.ShapeDtypeStruct((N, Cout, HW), jnp.float32),
        grid_spec=pltpu.PrefetchScalarGridSpec(
            num_scalar_prefetch=0,
            grid=(N,),
            in_specs=[
                pl.BlockSpec((None, Cin, HW), lambda n: (n, 0, 0)),
                pl.BlockSpec((Cout, 9 * Cin), lambda n: (0, 0)),
                pl.BlockSpec((Cout, 1), lambda n: (0, 0)),
                pl.BlockSpec((Cout, 1), lambda n: (0, 0)),
                pl.BlockSpec((9, HW), lambda n: (0, 0)),
            ],
            out_specs=pl.BlockSpec((None, Cout, HW), lambda n: (n, 0, 0)),
            scratch_shapes=[pltpu.VMEM((9 * Cin, HW), jnp.float32)],
        ),
        compiler_params=pltpu.CompilerParams(
            dimension_semantics=("parallel",),
            vmem_limit_bytes=VMEM_LIMIT_BYTES),
    )(x_flat, w_mat, scale, shift, mask)


def conv23_fc(xp, w2, s2, b2, w3, s3, b3, wfc3, bfc, mask, *, Wp):
    """xp: (N, 12, S) pooled activations -> (N, 1, num_classes) logits."""
    N, C2, S = xp.shape
    Co2 = w2.shape[0]
    Co3 = w3.shape[0]
    ncls = wfc3.shape[0]
    kern = functools.partial(_conv23_fc_kernel, W=Wp)
    return pl.pallas_call(
        kern,
        out_shape=jax.ShapeDtypeStruct((N, 1, ncls), jnp.float32),
        grid_spec=pltpu.PrefetchScalarGridSpec(
            num_scalar_prefetch=0,
            grid=(N,),
            in_specs=[
                pl.BlockSpec((None, C2, S), lambda n: (n, 0, 0)),
                pl.BlockSpec((Co2, 9 * C2), lambda n: (0, 0)),
                pl.BlockSpec((Co2, 1), lambda n: (0, 0)),
                pl.BlockSpec((Co2, 1), lambda n: (0, 0)),
                pl.BlockSpec((Co3, 9 * Co2), lambda n: (0, 0)),
                pl.BlockSpec((Co3, 1), lambda n: (0, 0)),
                pl.BlockSpec((Co3, 1), lambda n: (0, 0)),
                pl.BlockSpec((ncls, Co3, S), lambda n: (0, 0, 0)),
                pl.BlockSpec((1, ncls), lambda n: (0, 0)),
                pl.BlockSpec((9, S), lambda n: (0, 0)),
            ],
            out_specs=pl.BlockSpec((None, 1, ncls), lambda n: (n, 0, 0)),
            scratch_shapes=[pltpu.VMEM((9 * C2, S), jnp.float32),
                            pltpu.VMEM((9 * Co2, S), jnp.float32)],
        ),
        compiler_params=pltpu.CompilerParams(
            dimension_semantics=("parallel",),
            vmem_limit_bytes=VMEM_LIMIT_BYTES),
    )(xp, w2, s2, b2, w3, s3, b3, wfc3, bfc, mask)


# ----------------------------------------------------------------------------
# Host-side helpers (parameter / mask preparation)
# ----------------------------------------------------------------------------
def make_shift_masks(h, w):
    """(9, h*w) 0/1 masks: mask[t, p]=1 iff tap t's source pixel is in-image."""
    ys = jnp.arange(h).reshape(h, 1)
    xs = jnp.arange(w).reshape(1, w)
    rows = []
    for dy in (-1, 0, 1):
        for dx in (-1, 0, 1):
            valid = ((ys + dy >= 0) & (ys + dy < h) &
                     (xs + dx >= 0) & (xs + dx < w))
            rows.append(valid.reshape(1, h * w))
    return jnp.concatenate(rows, axis=0).astype(jnp.float32)


def make_params(key, h, w, num_classes=2, eps=1e-5):
    """Deterministic synthetic parameters (PyTorch layouts + kernel layouts)."""
    ks = jax.random.split(key, 20)
    chans = [(3, 12), (12, 20), (20, 32)]
    params = {}
    ki = 0
    for li, (cin, cout) in enumerate(chans, start=1):
        w_pt = 0.1 * jax.random.normal(ks[ki], (cout, cin, 3, 3), jnp.float32); ki += 1
        b_pt = 0.1 * jax.random.normal(ks[ki], (cout,), jnp.float32); ki += 1
        gamma = 0.5 + jax.random.uniform(ks[ki], (cout,), jnp.float32); ki += 1
        beta = 0.1 * jax.random.normal(ks[ki], (cout,), jnp.float32); ki += 1
        mean = 0.1 * jax.random.normal(ks[ki], (cout,), jnp.float32); ki += 1
        var = 0.5 + jax.random.uniform(ks[ki], (cout,), jnp.float32); ki += 1
        scale1d = gamma / jnp.sqrt(var + eps)
        shift1d = (b_pt - mean) * scale1d + beta
        # (Cout, Cin, ky, kx) -> (Cout, ky, kx, Cin) -> (Cout, 9*Cin); tap order
        # (ky, kx) matches the kernel's (dy, dx) loop order.
        w_mat = jnp.transpose(w_pt, (0, 2, 3, 1)).reshape(cout, 9 * cin)
        params[f"conv{li}"] = dict(
            w_pt=w_pt, b_pt=b_pt, gamma=gamma, beta=beta, mean=mean, var=var,
            w_mat=w_mat, scale=scale1d.reshape(cout, 1),
            shift=shift1d.reshape(cout, 1))
    hp, wp = h // 2, w // 2
    s = hp * wp
    fc_in = 32 * s
    fc_w_pt = 0.01 * jax.random.normal(ks[18], (num_classes, fc_in), jnp.float32)
    fc_b = 0.01 * jax.random.normal(ks[19], (num_classes,), jnp.float32)
    params["fc"] = dict(w_pt=fc_w_pt, b=fc_b,
                        w3d=fc_w_pt.reshape(num_classes, 32, s),
                        b2d=fc_b.reshape(1, num_classes))
    return params


# ----------------------------------------------------------------------------
# Forward pass (Pallas) and pure-JAX reference
# ----------------------------------------------------------------------------
def classify_forward(x_nchw, params):
    n, c, h, w = x_nchw.shape
    hw = h * w
    hp, wp = h // 2, w // 2
    s = hp * wp
    p1, p2, p3, fc = params["conv1"], params["conv2"], params["conv3"], params["fc"]

    mask1 = make_shift_masks(h, w)
    mask2 = make_shift_masks(hp, wp)

    # NCHW is already channel-major: flattening spatial dims is free.
    x_flat = x_nchw.reshape(n, c, hw)

    # Kernel 1: conv1 + BN + ReLU + 2x2 pool max.
    vm = conv1_bn_relu_poolmax(x_flat, p1["w_mat"], p1["scale"], p1["shift"],
                               mask1, H=h, W=w)              # (N, 12, H*W)

    # Stride-2 decimation of the already-maxed output: a pure layout op, done
    # as an XLA strided slice between the two fused kernels.
    pooled = vm.reshape(n, 12, h, w)[:, :, 0::2, 0::2].reshape(n, 12, s)

    # Kernel 2: conv2 + conv3 + flatten + FC.
    out = conv23_fc(pooled, p2["w_mat"], p2["scale"], p2["shift"],
                    p3["w_mat"], p3["scale"], p3["shift"],
                    fc["w3d"], fc["b2d"], mask2, Wp=wp)      # (N, 1, 2)
    return out.reshape(n, -1)


def classify_forward_ref(x_nchw, params, eps=1e-5):
    x = jnp.transpose(x_nchw, (0, 2, 3, 1))  # NHWC

    def block(x, p):
        w_hwio = jnp.transpose(p["w_pt"], (2, 3, 1, 0))
        y = jax.lax.conv_general_dilated(
            x, w_hwio, (1, 1), "SAME",
            dimension_numbers=("NHWC", "HWIO", "NHWC")) + p["b_pt"]
        y = (y - p["mean"]) * p["gamma"] / jnp.sqrt(p["var"] + eps) + p["beta"]
        return jnp.maximum(y, 0.0)

    x = block(x, params["conv1"])
    n, h, w, c = x.shape
    x = x.reshape(n, h // 2, 2, w // 2, 2, c).max(axis=(2, 4))
    x = block(x, params["conv2"])
    x = block(x, params["conv3"])
    x_flat = jnp.transpose(x, (0, 3, 1, 2)).reshape(n, -1)   # NCHW flatten order
    return jnp.dot(x_flat, params["fc"]["w_pt"].T,
                   precision=jax.lax.Precision.HIGHEST) + params["fc"]["b"]


if __name__ == "__main__":
    key = jax.random.PRNGKey(0)
    k_x, k_p = jax.random.split(key)

    N, C, H, W = 2, 3, 32, 32            # small stand-in for (N, 3, 224, 224)
    x = jax.random.normal(k_x, (N, C, H, W), jnp.float32)
    params = make_params(k_p, H, W, num_classes=2)

    fwd = jax.jit(classify_forward)
    out = jax.block_until_ready(fwd(x, params))
    ref = jax.block_until_ready(classify_forward_ref(x, params))

    assert out.shape == (N, 2), out.shape
    assert jnp.allclose(out, ref, atol=2e-3, rtol=2e-3), (out, ref)
    print("KERNEL_OK")
</pallas_src>

<mosaic_0001>
module attributes {stable_mosaic.version = 11 : i64} {
  func.func @_conv1_pool_kernel(%arg0: i32, %arg1: memref<1x3x1024xf32, #tpu.memory_space<vmem>>, %arg2: memref<12x27xf32, #tpu.memory_space<vmem>>, %arg3: memref<12x1xf32, #tpu.memory_space<vmem>>, %arg4: memref<12x1xf32, #tpu.memory_space<vmem>>, %arg5: memref<9x1024xf32, #tpu.memory_space<vmem>>, %arg6: memref<1x12x1024xf32, #tpu.memory_space<vmem>>, %arg7: memref<27x1024xf32, #tpu.memory_space<vmem>>) attributes {dimension_semantics = [#tpu.dimension_semantics<parallel>], iteration_bounds = array<i64: 2>, scalar_prefetch = 0 : i64, scratch_operands = 1 : i64, tpu.core_type = #tpu.core_type<tc>, window_params = [{transform_indices = @transform_0, window_bounds = array<i64: 1, 3, 1024>}, {pipeline_mode = #tpu.pipeline_mode<synchronous>, transform_indices = @transform_1, window_bounds = array<i64: 12, 27>}, {pipeline_mode = #tpu.pipeline_mode<synchronous>, transform_indices = @transform_2, window_bounds = array<i64: 12, 1>}, {pipeline_mode = #tpu.pipeline_mode<synchronous>, transform_indices = @transform_3, window_bounds = array<i64: 12, 1>}, {pipeline_mode = #tpu.pipeline_mode<synchronous>, transform_indices = @transform_4, window_bounds = array<i64: 9, 1024>}, {transform_indices = @transform_5, window_bounds = array<i64: 1, 12, 1024>}]} {
    %c0 = arith.constant 0 : index
    %c0_0 = arith.constant 0 : index
    %c0_1 = arith.constant 0 : index
    %0 = vector.load %arg1[%c0, %c0_0, %c0_1] : memref<1x3x1024xf32, #tpu.memory_space<vmem>>, vector<1x3x1024xf32>
    %1 = vector.shape_cast %0 : vector<1x3x1024xf32> to vector<3x1024xf32>
    %c33_i32 = arith.constant 33 : i32
    %2 = tpu.dynamic_rotate %1 by %c33_i32 dim 1 : vector<3x1024xf32>, i32 -> vector<3x1024xf32>
    %c0_2 = arith.constant 0 : index
    %c0_3 = arith.constant 0 : index
    %3 = vector.load %arg5[%c0_2, %c0_3] : memref<9x1024xf32, #tpu.memory_space<vmem>>, vector<1x1024xf32>
    %4 = vector.broadcast %3 : vector<1x1024xf32> to vector<3x1024xf32>
    %5 = arith.mulf %2, %4 : vector<3x1024xf32>
    %c0_4 = arith.constant 0 : index
    %c0_5 = arith.constant 0 : index
    %6 = vector.load %arg7[%c0_4, %c0_5] : memref<27x1024xf32, #tpu.memory_space<vmem>>, vector<3x1024xf32>
    tpu.vector_store %arg7[%c0_4, %c0_5], %5 {strides = array<i32>} : memref<27x1024xf32, #tpu.memory_space<vmem>>, vector<3x1024xf32>,
    %c32_i32 = arith.constant 32 : i32
    %7 = tpu.dynamic_rotate %1 by %c32_i32 dim 1 : vector<3x1024xf32>, i32 -> vector<3x1024xf32>
    %c1 = arith.constant 1 : index
    %c0_6 = arith.constant 0 : index
    %8 = vector.load %arg5[%c1, %c0_6] : memref<9x1024xf32, #tpu.memory_space<vmem>>, vector<1x1024xf32>
    %9 = vector.broadcast %8 : vector<1x1024xf32> to vector<3x1024xf32>
    %10 = arith.mulf %7, %9 : vector<3x1024xf32>
    %c3 = arith.constant 3 : index
    %c0_7 = arith.constant 0 : index
    %11 = vector.load %arg7[%c3, %c0_7] : memref<27x1024xf32, #tpu.memory_space<vmem>>, vector<3x1024xf32>
    tpu.vector_store %arg7[%c3, %c0_7], %10 {strides = array<i32>} : memref<27x1024xf32, #tpu.memory_space<vmem>>, vector<3x1024xf32>,
    %c31_i32 = arith.constant 31 : i32
    %12 = tpu.dynamic_rotate %1 by %c31_i32 dim 1 : vector<3x1024xf32>, i32 -> vector<3x1024xf32>
    %c2 = arith.constant 2 : index
    %c0_8 = arith.constant 0 : index
    %13 = vector.load %arg5[%c2, %c0_8] : memref<9x1024xf32, #tpu.memory_space<vmem>>, vector<1x1024xf32>
    %14 = vector.broadcast %13 : vector<1x1024xf32> to vector<3x1024xf32>
    %15 = arith.mulf %12, %14 : vector<3x1024xf32>
    %c6 = arith.constant 6 : index
    %c0_9 = arith.constant 0 : index
    %16 = vector.load %arg7[%c6, %c0_9] : memref<27x1024xf32, #tpu.memory_space<vmem>>, vector<3x1024xf32>
    tpu.vector_store %arg7[%c6, %c0_9], %15 {strides = array<i32>} : memref<27x1024xf32, #tpu.memory_space<vmem>>, vector<3x1024xf32>,
    %c1_i32 = arith.constant 1 : i32
    %17 = tpu.dynamic_rotate %1 by %c1_i32 dim 1 : vector<3x1024xf32>, i32 -> vector<3x1024xf32>
    %c3_10 = arith.constant 3 : index
    %c0_11 = arith.constant 0 : index
    %18 = vector.load %arg5[%c3_10, %c0_11] : memref<9x1024xf32, #tpu.memory_space<vmem>>, vector<1x1024xf32>
    %19 = vector.broadcast %18 : vector<1x1024xf32> to vector<3x1024xf32>
    %20 = arith.mulf %17, %19 : vector<3x1024xf32>
    %c9 = arith.constant 9 : index
    %c0_12 = arith.constant 0 : index
    %21 = vector.load %arg7[%c9, %c0_12] : memref<27x1024xf32, #tpu.memory_space<vmem>>, vector<3x1024xf32>
    tpu.vector_store %arg7[%c9, %c0_12], %20 {strides = array<i32>} : memref<27x1024xf32, #tpu.memory_space<vmem>>, vector<3x1024xf32>,
    %c4 = arith.constant 4 : index
    %c0_13 = arith.constant 0 : index
    %22 = vector.load %arg5[%c4, %c0_13] : memref<9x1024xf32, #tpu.memory_space<vmem>>, vector<1x1024xf32>
    %23 = vector.broadcast %22 : vector<1x1024xf32> to vector<3x1024xf32>
    %24 = arith.mulf %1, %23 : vector<3x1024xf32>
    %c12 = arith.constant 12 : index
    %c0_14 = arith.constant 0 : index
    %25 = vector.load %arg7[%c12, %c0_14] : memref<27x1024xf32, #tpu.memory_space<vmem>>, vector<3x1024xf32>
    tpu.vector_store %arg7[%c12, %c0_14], %24 {strides = array<i32>} : memref<27x1024xf32, #tpu.memory_space<vmem>>, vector<3x1024xf32>,
    %c1023_i32 = arith.constant 1023 : i32
    %26 = tpu.dynamic_rotate %1 by %c1023_i32 dim 1 : vector<3x1024xf32>, i32 -> vector<3x1024xf32>
    %c5 = arith.constant 5 : index
    %c0_15 = arith.constant 0 : index
    %27 = vector.load %arg5[%c5, %c0_15] : memref<9x1024xf32, #tpu.memory_space<vmem>>, vector<1x1024xf32>
    %28 = vector.broadcast %27 : vector<1x1024xf32> to vector<3x1024xf32>
    %29 = arith.mulf %26, %28 : vector<3x1024xf32>
    %c15 = arith.constant 15 : index
    %c0_16 = arith.constant 0 : index
    %30 = vector.load %arg7[%c15, %c0_16] : memref<27x1024xf32, #tpu.memory_space<vmem>>, vector<3x1024xf32>
    tpu.vector_store %arg7[%c15, %c0_16], %29 {strides = array<i32>} : memref<27x1024xf32, #tpu.memory_space<vmem>>, vector<3x1024xf32>,
    %c993_i32 = arith.constant 993 : i32
    %31 = tpu.dynamic_rotate %1 by %c993_i32 dim 1 : vector<3x1024xf32>, i32 -> vector<3x1024xf32>
    %c6_17 = arith.constant 6 : index
    %c0_18 = arith.constant 0 : index
    %32 = vector.load %arg5[%c6_17, %c0_18] : memref<9x1024xf32, #tpu.memory_space<vmem>>, vector<1x1024xf32>
    %33 = vector.broadcast %32 : vector<1x1024xf32> to vector<3x1024xf32>
    %34 = arith.mulf %31, %33 : vector<3x1024xf32>
    %c18 = arith.constant 18 : index
    %c0_19 = arith.constant 0 : index
    %35 = vector.load %arg7[%c18, %c0_19] : memref<27x1024xf32, #tpu.memory_space<vmem>>, vector<3x1024xf32>
    tpu.vector_store %arg7[%c18, %c0_19], %34 {strides = array<i32>} : memref<27x1024xf32, #tpu.memory_space<vmem>>, vector<3x1024xf32>,
    %c992_i32 = arith.constant 992 : i32
    %36 = tpu.dynamic_rotate %1 by %c992_i32 dim 1 : vector<3x1024xf32>, i32 -> vector<3x1024xf32>
    %c7 = arith.constant 7 : index
    %c0_20 = arith.constant 0 : index
    %37 = vector.load %arg5[%c7, %c0_20] : memref<9x1024xf32, #tpu.memory_space<vmem>>, vector<1x1024xf32>
    %38 = vector.broadcast %37 : vector<1x1024xf32> to vector<3x1024xf32>
    %39 = arith.mulf %36, %38 : vector<3x1024xf32>
    %c21 = arith.constant 21 : index
    %c0_21 = arith.constant 0 : index
    %40 = vector.load %arg7[%c21, %c0_21] : memref<27x1024xf32, #tpu.memory_space<vmem>>, vector<3x1024xf32>
    tpu.vector_store %arg7[%c21, %c0_21], %39 {strides = array<i32>} : memref<27x1024xf32, #tpu.memory_space<vmem>>, vector<3x1024xf32>,
    %c991_i32 = arith.constant 991 : i32
    %41 = tpu.dynamic_rotate %1 by %c991_i32 dim 1 : vector<3x1024xf32>, i32 -> vector<3x1024xf32>
    %c8 = arith.constant 8 : index
    %c0_22 = arith.constant 0 : index
    %42 = vector.load %arg5[%c8, %c0_22] : memref<9x1024xf32, #tpu.memory_space<vmem>>, vector<1x1024xf32>
    %43 = vector.broadcast %42 : vector<1x1024xf32> to vector<3x1024xf32>
    %44 = arith.mulf %41, %43 : vector<3x1024xf32>
    %c24 = arith.constant 24 : index
    %c0_23 = arith.constant 0 : index
    %45 = vector.load %arg7[%c24, %c0_23] : memref<27x1024xf32, #tpu.memory_space<vmem>>, vector<3x1024xf32>
    tpu.vector_store %arg7[%c24, %c0_23], %44 {strides = array<i32>} : memref<27x1024xf32, #tpu.memory_space<vmem>>, vector<3x1024xf32>,
    %c0_24 = arith.constant 0 : index
    %c0_25 = arith.constant 0 : index
    %46 = vector.load %arg2[%c0_24, %c0_25] : memref<12x27xf32, #tpu.memory_space<vmem>>, vector<12x27xf32>
    %c0_26 = arith.constant 0 : index
    %c0_27 = arith.constant 0 : index
    %47 = vector.load %arg7[%c0_26, %c0_27] : memref<27x1024xf32, #tpu.memory_space<vmem>>, vector<27x1024xf32>
    %cst = arith.constant dense<0.000000e+00> : vector<12x1024xf32>
    %48 = tpu.matmul %46, %47, %cst {dimension_numbers = #tpu.dot_dimension_numbers<[1], [0], [0], [1], [0, 0, 1, 1], [], []>} : vector<12x27xf32>, vector<27x1024xf32>, vector<12x1024xf32> -> vector<12x1024xf32>
    %c0_28 = arith.constant 0 : index
    %c0_29 = arith.constant 0 : index
    %49 = vector.load %arg3[%c0_28, %c0_29] : memref<12x1xf32, #tpu.memory_space<vmem>>, vector<12x1xf32>
    %50 = vector.broadcast %49 : vector<12x1xf32> to vector<12x1024xf32>
    %51 = arith.mulf %48, %50 : vector<12x1024xf32>
    %c0_30 = arith.constant 0 : index
    %c0_31 = arith.constant 0 : index
    %52 = vector.load %arg4[%c0_30, %c0_31] : memref<12x1xf32, #tpu.memory_space<vmem>>, vector<12x1xf32>
    %53 = vector.broadcast %52 : vector<12x1xf32> to vector<12x1024xf32>
    %54 = arith.addf %51, %53 : vector<12x1024xf32>
    %cst_32 = arith.constant 0.000000e+00 : f32
    %55 = vector.broadcast %cst_32 : f32 to vector<12x1024xf32>
    %56 = arith.maximumf %54, %55 : vector<12x1024xf32>
    %c1023_i32_33 = arith.constant 1023 : i32
    %57 = tpu.dynamic_rotate %56 by %c1023_i32_33 dim 1 : vector<12x1024xf32>, i32 -> vector<12x1024xf32>
    %58 = arith.maximumf %56, %57 : vector<12x1024xf32>
    %c992_i32_34 = arith.constant 992 : i32
    %59 = tpu.dynamic_rotate %58 by %c992_i32_34 dim 1 : vector<12x1024xf32>, i32 -> vector<12x1024xf32>
    %60 = arith.maximumf %58, %59 : vector<12x1024xf32>
    %c0_35 = arith.constant 0 : index
    %c0_36 = arith.constant 0 : index
    %c0_37 = arith.constant 0 : index
    %61 = vector.load %arg6[%c0_35, %c0_36, %c0_37] : memref<1x12x1024xf32, #tpu.memory_space<vmem>>, vector<1x12x1024xf32>
    %62 = vector.shape_cast %61 : vector<1x12x1024xf32> to vector<12x1024xf32>
    %63 = vector.shape_cast %60 : vector<12x1024xf32> to vector<1x12x1024xf32>
    tpu.vector_store %arg6[%c0_35, %c0_36, %c0_37], %63 {strides = array<i32>} : memref<1x12x1024xf32, #tpu.memory_space<vmem>>, vector<1x12x1024xf32>,
    return
  }
  func.func @transform_0(%arg0: i32) -> (i32, i32, i32) {
    %c0_i32 = arith.constant 0 : i32
    %c0_i32_0 = arith.constant 0 : i32
    %c0_i32_1 = arith.constant 0 : i32
    return %arg0, %c0_i32, %c0_i32_0 : i32, i32, i32
  }
  func.func @transform_1(%arg0: i32) -> (i32, i32) {
    %c0_i32 = arith.constant 0 : i32
    %c0_i32_0 = arith.constant 0 : i32
    %c0_i32_1 = arith.constant 0 : i32
    return %c0_i32, %c0_i32_0 : i32, i32
  }
  func.func @transform_2(%arg0: i32) -> (i32, i32) {
    %c0_i32 = arith.constant 0 : i32
    %c0_i32_0 = arith.constant 0 : i32
    %c0_i32_1 = arith.constant 0 : i32
    return %c0_i32, %c0_i32_0 : i32, i32
  }
  func.func @transform_3(%arg0: i32) -> (i32, i32) {
    %c0_i32 = arith.constant 0 : i32
    %c0_i32_0 = arith.constant 0 : i32
    %c0_i32_1 = arith.constant 0 : i32
    return %c0_i32, %c0_i32_0 : i32, i32
  }
  func.func @transform_4(%arg0: i32) -> (i32, i32) {
    %c0_i32 = arith.constant 0 : i32
    %c0_i32_0 = arith.constant 0 : i32
    %c0_i32_1 = arith.constant 0 : i32
    return %c0_i32, %c0_i32_0 : i32, i32
  }
  func.func @transform_5(%arg0: i32) -> (i32, i32, i32) {
    %c0_i32 = arith.constant 0 : i32
    %c0_i32_0 = arith.constant 0 : i32
    %c0_i32_1 = arith.constant 0 : i32
    return %arg0, %c0_i32, %c0_i32_0 : i32, i32, i32
  }
}

module attributes {stable_mosaic.version = 11 : i64} {
  func.func @_conv23_fc_kernel(%arg0: i32, %arg1: memref<1x12x256xf32, #tpu.memory_space<vmem>>, %arg2: memref<20x108xf32, #tpu.memory_space<vmem>>, %arg3: memref<20x1xf32, #tpu.memory_space<vmem>>, %arg4: memref<20x1xf32, #tpu.memory_space<vmem>>, %arg5: memref<32x180xf32, #tpu.memory_space<vmem>>, %arg6: memref<32x1xf32, #tpu.memory_space<vmem>>, %arg7: memref<32x1xf32, #tpu.memory_space<vmem>>, %arg8: memref<2x32x256xf32, #tpu.memory_space<vmem>>, %arg9: memref<1x2xf32, #tpu.memory_space<vmem>>, %arg10: memref<9x256xf32, #tpu.memory_space<vmem>>, %arg11: memref<1x1x2xf32, #tpu.memory_space<vmem>>, %arg12: memref<108x256xf32, #tpu.memory_space<vmem>>, %arg13: memref<180x256xf32, #tpu.memory_space<vmem>>) attributes {dimension_semantics = [#tpu.dimension_semantics<parallel>], iteration_bounds = array<i64: 2>, scalar_prefetch = 0 : i64, scratch_operands = 2 : i64, tpu.core_type = #tpu.core_type<tc>, window_params = [{transform_indices = @transform_0, window_bounds = array<i64: 1, 12, 256>}, {pipeline_mode = #tpu.pipeline_mode<synchronous>, transform_indices = @transform_1, window_bounds = array<i64: 20, 108>}, {pipeline_mode = #tpu.pipeline_mode<synchronous>, transform_indices = @transform_2, window_bounds = array<i64: 20, 1>}, {pipeline_mode = #tpu.pipeline_mode<synchronous>, transform_indices = @transform_3, window_bounds = array<i64: 20, 1>}, {pipeline_mode = #tpu.pipeline_mode<synchronous>, transform_indices = @transform_4, window_bounds = array<i64: 32, 180>}, {pipeline_mode = #tpu.pipeline_mode<synchronous>, transform_indices = @transform_5, window_bounds = array<i64: 32, 1>}, {pipeline_mode = #tpu.pipeline_mode<synchronous>, transform_indices = @transform_6, window_bounds = array<i64: 32, 1>}, {pipeline_mode = #tpu.pipeline_mode<synchronous>, transform_indices = @transform_7, window_bounds = array<i64: 2, 32, 256>}, {pipeline_mode = #tpu.pipeline_mode<synchronous>, transform_indices = @transform_8, window_bounds = array<i64: 1, 2>}, {pipeline_mode = #tpu.pipeline_mode<synchronous>, transform_indices = @transform_9, window_bounds = array<i64: 9, 256>}, {transform_indices = @transform_10, window_bounds = array<i64: 1, 1, 2>}]} {
    %c0 = arith.constant 0 : index
    %c0_0 = arith.constant 0 : index
    %c0_1 = arith.constant 0 : index
    %0 = vector.load %arg1[%c0, %c0_0, %c0_1] : memref<1x12x256xf32, #tpu.memory_space<vmem>>, vector<1x12x256xf32>
    %1 = vector.shape_cast %0 : vector<1x12x256xf32> to vector<12x256xf32>
    %c17_i32 = arith.constant 17 : i32
    %2 = tpu.dynamic_rotate %1 by %c17_i32 dim 1 : vector<12x256xf32>, i32 -> vector<12x256xf32>
    %c0_2 = arith.constant 0 : index
    %c0_3 = arith.constant 0 : index
    %3 = vector.load %arg10[%c0_2, %c0_3] : memref<9x256xf32, #tpu.memory_space<vmem>>, vector<1x256xf32>
    %4 = vector.broadcast %3 : vector<1x256xf32> to vector<12x256xf32>
    %5 = arith.mulf %2, %4 : vector<12x256xf32>
    %c0_4 = arith.constant 0 : index
    %c0_5 = arith.constant 0 : index
    %6 = vector.load %arg12[%c0_4, %c0_5] : memref<108x256xf32, #tpu.memory_space<vmem>>, vector<12x256xf32>
    tpu.vector_store %arg12[%c0_4, %c0_5], %5 {strides = array<i32>} : memref<108x256xf32, #tpu.memory_space<vmem>>, vector<12x256xf32>,
    %c16_i32 = arith.constant 16 : i32
    %7 = tpu.dynamic_rotate %1 by %c16_i32 dim 1 : vector<12x256xf32>, i32 -> vector<12x256xf32>
    %c1 = arith.constant 1 : index
    %c0_6 = arith.constant 0 : index
    %8 = vector.load %arg10[%c1, %c0_6] : memref<9x256xf32, #tpu.memory_space<vmem>>, vector<1x256xf32>
    %9 = vector.broadcast %8 : vector<1x256xf32> to vector<12x256xf32>
    %10 = arith.mulf %7, %9 : vector<12x256xf32>
    %c12 = arith.constant 12 : index
    %c0_7 = arith.constant 0 : index
    %11 = vector.load %arg12[%c12, %c0_7] : memref<108x256xf32, #tpu.memory_space<vmem>>, vector<12x256xf32>
    tpu.vector_store %arg12[%c12, %c0_7], %10 {strides = array<i32>} : memref<108x256xf32, #tpu.memory_space<vmem>>, vector<12x256xf32>,
    %c15_i32 = arith.constant 15 : i32
    %12 = tpu.dynamic_rotate %1 by %c15_i32 dim 1 : vector<12x256xf32>, i32 -> vector<12x256xf32>
    %c2 = arith.constant 2 : index
    %c0_8 = arith.constant 0 : index
    %13 = vector.load %arg10[%c2, %c0_8] : memref<9x256xf32, #tpu.memory_space<vmem>>, vector<1x256xf32>
    %14 = vector.broadcast %13 : vector<1x256xf32> to vector<12x256xf32>
    %15 = arith.mulf %12, %14 : vector<12x256xf32>
    %c24 = arith.constant 24 : index
    %c0_9 = arith.constant 0 : index
    %16 = vector.load %arg12[%c24, %c0_9] : memref<108x256xf32, #tpu.memory_space<vmem>>, vector<12x256xf32>
    tpu.vector_store %arg12[%c24, %c0_9], %15 {strides = array<i32>} : memref<108x256xf32, #tpu.memory_space<vmem>>, vector<12x256xf32>,
    %c1_i32 = arith.constant 1 : i32
    %17 = tpu.dynamic_rotate %1 by %c1_i32 dim 1 : vector<12x256xf32>, i32 -> vector<12x256xf32>
    %c3 = arith.constant 3 : index
    %c0_10 = arith.constant 0 : index
    %18 = vector.load %arg10[%c3, %c0_10] : memref<9x256xf32, #tpu.memory_space<vmem>>, vector<1x256xf32>
    %19 = vector.broadcast %18 : vector<1x256xf32> to vector<12x256xf32>
    %20 = arith.mulf %17, %19 : vector<12x256xf32>
    %c36 = arith.constant 36 : index
    %c0_11 = arith.constant 0 : index
    %21 = vector.load %arg12[%c36, %c0_11] : memref<108x256xf32, #tpu.memory_space<vmem>>, vector<12x256xf32>
    tpu.vector_store %arg12[%c36, %c0_11], %20 {strides = array<i32>} : memref<108x256xf32, #tpu.memory_space<vmem>>, vector<12x256xf32>,
    %c4 = arith.constant 4 : index
    %c0_12 = arith.constant 0 : index
    %22 = vector.load %arg10[%c4, %c0_12] : memref<9x256xf32, #tpu.memory_space<vmem>>, vector<1x256xf32>
    %23 = vector.broadcast %22 : vector<1x256xf32> to vector<12x256xf32>
    %24 = arith.mulf %1, %23 : vector<12x256xf32>
    %c48 = arith.constant 48 : index
    %c0_13 = arith.constant 0 : index
    %25 = vector.load %arg12[%c48, %c0_13] : memref<108x256xf32, #tpu.memory_space<vmem>>, vector<12x256xf32>
    tpu.vector_store %arg12[%c48, %c0_13], %24 {strides = array<i32>} : memref<108x256xf32, #tpu.memory_space<vmem>>, vector<12x256xf32>,
    %c255_i32 = arith.constant 255 : i32
    %26 = tpu.dynamic_rotate %1 by %c255_i32 dim 1 : vector<12x256xf32>, i32 -> vector<12x256xf32>
    %c5 = arith.constant 5 : index
    %c0_14 = arith.constant 0 : index
    %27 = vector.load %arg10[%c5, %c0_14] : memref<9x256xf32, #tpu.memory_space<vmem>>, vector<1x256xf32>
    %28 = vector.broadcast %27 : vector<1x256xf32> to vector<12x256xf32>
    %29 = arith.mulf %26, %28 : vector<12x256xf32>
    %c60 = arith.constant 60 : index
    %c0_15 = arith.constant 0 : index
    %30 = vector.load %arg12[%c60, %c0_15] : memref<108x256xf32, #tpu.memory_space<vmem>>, vector<12x256xf32>
    tpu.vector_store %arg12[%c60, %c0_15], %29 {strides = array<i32>} : memref<108x256xf32, #tpu.memory_space<vmem>>, vector<12x256xf32>,
    %c241_i32 = arith.constant 241 : i32
    %31 = tpu.dynamic_rotate %1 by %c241_i32 dim 1 : vector<12x256xf32>, i32 -> vector<12x256xf32>
    %c6 = arith.constant 6 : index
    %c0_16 = arith.constant 0 : index
    %32 = vector.load %arg10[%c6, %c0_16] : memref<9x256xf32, #tpu.memory_space<vmem>>, vector<1x256xf32>
    %33 = vector.broadcast %32 : vector<1x256xf32> to vector<12x256xf32>
    %34 = arith.mulf %31, %33 : vector<12x256xf32>
    %c72 = arith.constant 72 : index
    %c0_17 = arith.constant 0 : index
    %35 = vector.load %arg12[%c72, %c0_17] : memref<108x256xf32, #tpu.memory_space<vmem>>, vector<12x256xf32>
    tpu.vector_store %arg12[%c72, %c0_17], %34 {strides = array<i32>} : memref<108x256xf32, #tpu.memory_space<vmem>>, vector<12x256xf32>,
    %c240_i32 = arith.constant 240 : i32
    %36 = tpu.dynamic_rotate %1 by %c240_i32 dim 1 : vector<12x256xf32>, i32 -> vector<12x256xf32>
    %c7 = arith.constant 7 : index
    %c0_18 = arith.constant 0 : index
    %37 = vector.load %arg10[%c7, %c0_18] : memref<9x256xf32, #tpu.memory_space<vmem>>, vector<1x256xf32>
    %38 = vector.broadcast %37 : vector<1x256xf32> to vector<12x256xf32>
    %39 = arith.mulf %36, %38 : vector<12x256xf32>
    %c84 = arith.constant 84 : index
    %c0_19 = arith.constant 0 : index
    %40 = vector.load %arg12[%c84, %c0_19] : memref<108x256xf32, #tpu.memory_space<vmem>>, vector<12x256xf32>
    tpu.vector_store %arg12[%c84, %c0_19], %39 {strides = array<i32>} : memref<108x256xf32, #tpu.memory_space<vmem>>, vector<12x256xf32>,
    %c239_i32 = arith.constant 239 : i32
    %41 = tpu.dynamic_rotate %1 by %c239_i32 dim 1 : vector<12x256xf32>, i32 -> vector<12x256xf32>
    %c8 = arith.constant 8 : index
    %c0_20 = arith.constant 0 : index
    %42 = vector.load %arg10[%c8, %c0_20] : memref<9x256xf32, #tpu.memory_space<vmem>>, vector<1x256xf32>
    %43 = vector.broadcast %42 : vector<1x256xf32> to vector<12x256xf32>
    %44 = arith.mulf %41, %43 : vector<12x256xf32>
    %c96 = arith.constant 96 : index
    %c0_21 = arith.constant 0 : index
    %45 = vector.load %arg12[%c96, %c0_21] : memref<108x256xf32, #tpu.memory_space<vmem>>, vector<12x256xf32>
    tpu.vector_store %arg12[%c96, %c0_21], %44 {strides = array<i32>} : memref<108x256xf32, #tpu.memory_space<vmem>>, vector<12x256xf32>,
    %c0_22 = arith.constant 0 : index
    %c0_23 = arith.constant 0 : index
    %46 = vector.load %arg2[%c0_22, %c0_23] : memref<20x108xf32, #tpu.memory_space<vmem>>, vector<20x108xf32>
    %c0_24 = arith.constant 0 : index
    %c0_25 = arith.constant 0 : index
    %47 = vector.load %arg12[%c0_24, %c0_25] : memref<108x256xf32, #tpu.memory_space<vmem>>, vector<108x256xf32>
    %cst = arith.constant dense<0.000000e+00> : vector<20x256xf32>
    %48 = tpu.matmul %46, %47, %cst {dimension_numbers = #tpu.dot_dimension_numbers<[1], [0], [0], [1], [0, 0, 1, 1], [], []>} : vector<20x108xf32>, vector<108x256xf32>, vector<20x256xf32> -> vector<20x256xf32>
    %c0_26 = arith.constant 0 : index
    %c0_27 = arith.constant 0 : index
    %49 = vector.load %arg3[%c0_26, %c0_27] : memref<20x1xf32, #tpu.memory_space<vmem>>, vector<20x1xf32>
    %50 = vector.broadcast %49 : vector<20x1xf32> to vector<20x256xf32>
    %51 = arith.mulf %48, %50 : vector<20x256xf32>
    %c0_28 = arith.constant 0 : index
    %c0_29 = arith.constant 0 : index
    %52 = vector.load %arg4[%c0_28, %c0_29] : memref<20x1xf32, #tpu.memory_space<vmem>>, vector<20x1xf32>
    %53 = vector.broadcast %52 : vector<20x1xf32> to vector<20x256xf32>
    %54 = arith.addf %51, %53 : vector<20x256xf32>
    %cst_30 = arith.constant 0.000000e+00 : f32
    %55 = vector.broadcast %cst_30 : f32 to vector<20x256xf32>
    %56 = arith.maximumf %54, %55 : vector<20x256xf32>
    %c17_i32_31 = arith.constant 17 : i32
    %57 = tpu.dynamic_rotate %56 by %c17_i32_31 dim 1 : vector<20x256xf32>, i32 -> vector<20x256xf32>
    %c0_32 = arith.constant 0 : index
    %c0_33 = arith.constant 0 : index
    %58 = vector.load %arg10[%c0_32, %c0_33] : memref<9x256xf32, #tpu.memory_space<vmem>>, vector<1x256xf32>
    %59 = vector.broadcast %58 : vector<1x256xf32> to vector<20x256xf32>
    %60 = arith.mulf %57, %59 : vector<20x256xf32>
    %c0_34 = arith.constant 0 : index
    %c0_35 = arith.constant 0 : index
    %61 = vector.load %arg13[%c0_34, %c0_35] : memref<180x256xf32, #tpu.memory_space<vmem>>, vector<20x256xf32>
    tpu.vector_store %arg13[%c0_34, %c0_35], %60 {strides = array<i32>} : memref<180x256xf32, #tpu.memory_space<vmem>>, vector<20x256xf32>,
    %c16_i32_36 = arith.constant 16 : i32
    %62 = tpu.dynamic_rotate %56 by %c16_i32_36 dim 1 : vector<20x256xf32>, i32 -> vector<20x256xf32>
    %c1_37 = arith.constant 1 : index
    %c0_38 = arith.constant 0 : index
    %63 = vector.load %arg10[%c1_37, %c0_38] : memref<9x256xf32, #tpu.memory_space<vmem>>, vector<1x256xf32>
    %64 = vector.broadcast %63 : vector<1x256xf32> to vector<20x256xf32>
    %65 = arith.mulf %62, %64 : vector<20x256xf32>
    %c20 = arith.constant 20 : index
    %c0_39 = arith.constant 0 : index
    %66 = vector.load %arg13[%c20, %c0_39] : memref<180x256xf32, #tpu.memory_space<vmem>>, vector<20x256xf32>
    tpu.vector_store %arg13[%c20, %c0_39], %65 {strides = array<i32>} : memref<180x256xf32, #tpu.memory_space<vmem>>, vector<20x256xf32>,
    %c15_i32_40 = arith.constant 15 : i32
    %67 = tpu.dynamic_rotate %56 by %c15_i32_40 dim 1 : vector<20x256xf32>, i32 -> vector<20x256xf32>
    %c2_41 = arith.constant 2 : index
    %c0_42 = arith.constant 0 : index
    %68 = vector.load %arg10[%c2_41, %c0_42] : memref<9x256xf32, #tpu.memory_space<vmem>>, vector<1x256xf32>
    %69 = vector.broadcast %68 : vector<1x256xf32> to vector<20x256xf32>
    %70 = arith.mulf %67, %69 : vector<20x256xf32>
    %c40 = arith.constant 40 : index
    %c0_43 = arith.constant 0 : index
    %71 = vector.load %arg13[%c40, %c0_43] : memref<180x256xf32, #tpu.memory_space<vmem>>, vector<20x256xf32>
    tpu.vector_store %arg13[%c40, %c0_43], %70 {strides = array<i32>} : memref<180x256xf32, #tpu.memory_space<vmem>>, vector<20x256xf32>,
    %c1_i32_44 = arith.constant 1 : i32
    %72 = tpu.dynamic_rotate %56 by %c1_i32_44 dim 1 : vector<20x256xf32>, i32 -> vector<20x256xf32>
    %c3_45 = arith.constant 3 : index
    %c0_46 = arith.constant 0 : index
    %73 = vector.load %arg10[%c3_45, %c0_46] : memref<9x256xf32, #tpu.memory_space<vmem>>, vector<1x256xf32>
    %74 = vector.broadcast %73 : vector<1x256xf32> to vector<20x256xf32>
    %75 = arith.mulf %72, %74 : vector<20x256xf32>
    %c60_47 = arith.constant 60 : index
    %c0_48 = arith.constant 0 : index
    %76 = vector.load %arg13[%c60_47, %c0_48] : memref<180x256xf32, #tpu.memory_space<vmem>>, vector<20x256xf32>
    tpu.vector_store %arg13[%c60_47, %c0_48], %75 {strides = array<i32>} : memref<180x256xf32, #tpu.memory_space<vmem>>, vector<20x256xf32>,
    %c4_49 = arith.constant 4 : index
    %c0_50 = arith.constant 0 : index
    %77 = vector.load %arg10[%c4_49, %c0_50] : memref<9x256xf32, #tpu.memory_space<vmem>>, vector<1x256xf32>
    %78 = vector.broadcast %77 : vector<1x256xf32> to vector<20x256xf32>
    %79 = arith.mulf %56, %78 : vector<20x256xf32>
    %c80 = arith.constant 80 : index
    %c0_51 = arith.constant 0 : index
    %80 = vector.load %arg13[%c80, %c0_51] : memref<180x256xf32, #tpu.memory_space<vmem>>, vector<20x256xf32>
    tpu.vector_store %arg13[%c80, %c0_51], %79 {strides = array<i32>} : memref<180x256xf32, #tpu.memory_space<vmem>>, vector<20x256xf32>,
    %c255_i32_52 = arith.constant 255 : i32
    %81 = tpu.dynamic_rotate %56 by %c255_i32_52 dim 1 : vector<20x256xf32>, i32 -> vector<20x256xf32>
    %c5_53 = arith.constant 5 : index
    %c0_54 = arith.constant 0 : index
    %82 = vector.load %arg10[%c5_53, %c0_54] : memref<9x256xf32, #tpu.memory_space<vmem>>, vector<1x256xf32>
    %83 = vector.broadcast %82 : vector<1x256xf32> to vector<20x256xf32>
    %84 = arith.mulf %81, %83 : vector<20x256xf32>
    %c100 = arith.constant 100 : index
    %c0_55 = arith.constant 0 : index
    %85 = vector.load %arg13[%c100, %c0_55] : memref<180x256xf32, #tpu.memory_space<vmem>>, vector<20x256xf32>
    tpu.vector_store %arg13[%c100, %c0_55], %84 {strides = array<i32>} : memref<180x256xf32, #tpu.memory_space<vmem>>, vector<20x256xf32>,
    %c241_i32_56 = arith.constant 241 : i32
    %86 = tpu.dynamic_rotate %56 by %c241_i32_56 dim 1 : vector<20x256xf32>, i32 -> vector<20x256xf32>
    %c6_57 = arith.constant 6 : index
    %c0_58 = arith.constant 0 : index
    %87 = vector.load %arg10[%c6_57, %c0_58] : memref<9x256xf32, #tpu.memory_space<vmem>>, vector<1x256xf32>
    %88 = vector.broadcast %87 : vector<1x256xf32> to vector<20x256xf32>
    %89 = arith.mulf %86, %88 : vector<20x256xf32>
    %c120 = arith.constant 120 : index
    %c0_59 = arith.constant 0 : index
    %90 = vector.load %arg13[%c120, %c0_59] : memref<180x256xf32, #tpu.memory_space<vmem>>, vector<20x256xf32>
    tpu.vector_store %arg13[%c120, %c0_59], %89 {strides = array<i32>} : memref<180x256xf32, #tpu.memory_space<vmem>>, vector<20x256xf32>,
    %c240_i32_60 = arith.constant 240 : i32
    %91 = tpu.dynamic_rotate %56 by %c240_i32_60 dim 1 : vector<20x256xf32>, i32 -> vector<20x256xf32>
    %c7_61 = arith.constant 7 : index
    %c0_62 = arith.constant 0 : index
    %92 = vector.load %arg10[%c7_61, %c0_62] : memref<9x256xf32, #tpu.memory_space<vmem>>, vector<1x256xf32>
    %93 = vector.broadcast %92 : vector<1x256xf32> to vector<20x256xf32>
    %94 = arith.mulf %91, %93 : vector<20x256xf32>
    %c140 = arith.constant 140 : index
    %c0_63 = arith.constant 0 : index
    %95 = vector.load %arg13[%c140, %c0_63] : memref<180x256xf32, #tpu.memory_space<vmem>>, vector<20x256xf32>
    tpu.vector_store %arg13[%c140, %c0_63], %94 {strides = array<i32>} : memref<180x256xf32, #tpu.memory_space<vmem>>, vector<20x256xf32>,
    %c239_i32_64 = arith.constant 239 : i32
    %96 = tpu.dynamic_rotate %56 by %c239_i32_64 dim 1 : vector<20x256xf32>, i32 -> vector<20x256xf32>
    %c8_65 = arith.constant 8 : index
    %c0_66 = arith.constant 0 : index
    %97 = vector.load %arg10[%c8_65, %c0_66] : memref<9x256xf32, #tpu.memory_space<vmem>>, vector<1x256xf32>
    %98 = vector.broadcast %97 : vector<1x256xf32> to vector<20x256xf32>
    %99 = arith.mulf %96, %98 : vector<20x256xf32>
    %c160 = arith.constant 160 : index
    %c0_67 = arith.constant 0 : index
    %100 = vector.load %arg13[%c160, %c0_67] : memref<180x256xf32, #tpu.memory_space<vmem>>, vector<20x256xf32>
    tpu.vector_store %arg13[%c160, %c0_67], %99 {strides = array<i32>} : memref<180x256xf32, #tpu.memory_space<vmem>>, vector<20x256xf32>,
    %c0_68 = arith.constant 0 : index
    %c0_69 = arith.constant 0 : index
    %101 = vector.load %arg5[%c0_68, %c0_69] : memref<32x180xf32, #tpu.memory_space<vmem>>, vector<32x180xf32>
    %c0_70 = arith.constant 0 : index
    %c0_71 = arith.constant 0 : index
    %102 = vector.load %arg13[%c0_70, %c0_71] : memref<180x256xf32, #tpu.memory_space<vmem>>, vector<180x256xf32>
    %cst_72 = arith.constant dense<0.000000e+00> : vector<32x256xf32>
    %103 = tpu.matmul %101, %102, %cst_72 {dimension_numbers = #tpu.dot_dimension_numbers<[1], [0], [0], [1], [0, 0, 1, 1], [], []>} : vector<32x180xf32>, vector<180x256xf32>, vector<32x256xf32> -> vector<32x256xf32>
    %c0_73 = arith.constant 0 : index
    %c0_74 = arith.constant 0 : index
    %104 = vector.load %arg6[%c0_73, %c0_74] : memref<32x1xf32, #tpu.memory_space<vmem>>, vector<32x1xf32>
    %105 = vector.broadcast %104 : vector<32x1xf32> to vector<32x256xf32>
    %106 = arith.mulf %103, %105 : vector<32x256xf32>
    %c0_75 = arith.constant 0 : index
    %c0_76 = arith.constant 0 : index
    %107 = vector.load %arg7[%c0_75, %c0_76] : memref<32x1xf32, #tpu.memory_space<vmem>>, vector<32x1xf32>
    %108 = vector.broadcast %107 : vector<32x1xf32> to vector<32x256xf32>
    %109 = arith.addf %106, %108 : vector<32x256xf32>
    %cst_77 = arith.constant 0.000000e+00 : f32
    %110 = vector.broadcast %cst_77 : f32 to vector<32x256xf32>
    %111 = arith.maximumf %109, %110 : vector<32x256xf32>
    %c0_78 = arith.constant 0 : index
    %c0_79 = arith.constant 0 : index
    %c0_80 = arith.constant 0 : index
    %112 = vector.load %arg8[%c0_78, %c0_79, %c0_80] : memref<2x32x256xf32, #tpu.memory_space<vmem>>, vector<1x32x256xf32>
    %113 = vector.shape_cast %112 : vector<1x32x256xf32> to vector<32x256xf32>
    %114 = arith.mulf %111, %113 : vector<32x256xf32>
    %cst_81 = arith.constant dense<0.000000e+00> : vector<32xf32>
    %115 = vector.multi_reduction <add>, %114, %cst_81 [1] : vector<32x256xf32> to vector<32xf32>
    %116 = vector.shape_cast %115 : vector<32xf32> to vector<32x1xf32>
    %cst_82 = arith.constant dense<0.000000e+00> : vector<1xf32>
    %117 = vector.multi_reduction <add>, %116, %cst_82 [0] : vector<32x1xf32> to vector<1xf32>
    %118 = vector.shape_cast %117 : vector<1xf32> to vector<1x1xf32>
    %c1_83 = arith.constant 1 : index
    %c0_84 = arith.constant 0 : index
    %c0_85 = arith.constant 0 : index
    %119 = vector.load %arg8[%c1_83, %c0_84, %c0_85] : memref<2x32x256xf32, #tpu.memory_space<vmem>>, vector<1x32x256xf32>
    %120 = vector.shape_cast %119 : vector<1x32x256xf32> to vector<32x256xf32>
    %121 = arith.mulf %111, %120 : vector<32x256xf32>
    %cst_86 = arith.constant dense<0.000000e+00> : vector<32xf32>
    %122 = vector.multi_reduction <add>, %121, %cst_86 [1] : vector<32x256xf32> to vector<32xf32>
    %123 = vector.shape_cast %122 : vector<32xf32> to vector<32x1xf32>
    %cst_87 = arith.constant dense<0.000000e+00> : vector<1xf32>
    %124 = vector.multi_reduction <add>, %123, %cst_87 [0] : vector<32x1xf32> to vector<1xf32>
    %125 = vector.shape_cast %124 : vector<1xf32> to vector<1x1xf32>
    %126 = tpu.concatenate %118, %125 in 1 : vector<1x1xf32>, vector<1x1xf32> -> vector<1x2xf32>
    %c0_88 = arith.constant 0 : index
    %c0_89 = arith.constant 0 : index
    %127 = vector.load %arg9[%c0_88, %c0_89] : memref<1x2xf32, #tpu.memory_space<vmem>>, vector<1x2xf32>
    %128 = arith.addf %126, %127 : vector<1x2xf32>
    %c0_90 = arith.constant 0 : index
    %c0_91 = arith.constant 0 : index
    %c0_92 = arith.constant 0 : index
    %129 = vector.load %arg11[%c0_90, %c0_91, %c0_92] : memref<1x1x2xf32, #tpu.memory_space<vmem>>, vector<1x1x2xf32>
    %130 = vector.shape_cast %129 : vector<1x1x2xf32> to vector<1x2xf32>
    %131 = vector.shape_cast %128 : vector<1x2xf32> to vector<1x1x2xf32>
    tpu.vector_store %arg11[%c0_90, %c0_91, %c0_92], %131 {strides = array<i32>} : memref<1x1x2xf32, #tpu.memory_space<vmem>>, vector<1x1x2xf32>,
    return
  }
  func.func @transform_0(%arg0: i32) -> (i32, i32, i32) {
    %c0_i32 = arith.constant 0 : i32
    %c0_i32_0 = arith.constant 0 : i32
    %c0_i32_1 = arith.constant 0 : i32
    return %arg0, %c0_i32, %c0_i32_0 : i32, i32, i32
  }
  func.func @transform_1(%arg0: i32) -> (i32, i32) {
    %c0_i32 = arith.constant 0 : i32
    %c0_i32_0 = arith.constant 0 : i32
    %c0_i32_1 = arith.constant 0 : i32
    return %c0_i32, %c0_i32_0 : i32, i32
  }
  func.func @transform_2(%arg0: i32) -> (i32, i32) {
    %c0_i32 = arith.constant 0 : i32
    %c0_i32_0 = arith.constant 0 : i32
    %c0_i32_1 = arith.constant 0 : i32
    return %c0_i32, %c0_i32_0 : i32, i32
  }
  func.func @transform_3(%arg0: i32) -> (i32, i32) {
    %c0_i32 = arith.constant 0 : i32
    %c0_i32_0 = arith.constant 0 : i32
    %c0_i32_1 = arith.constant 0 : i32
    return %c0_i32, %c0_i32_0 : i32, i32
  }
  func.func @transform_4(%arg0: i32) -> (i32, i32) {
    %c0_i32 = arith.constant 0 : i32
    %c0_i32_0 = arith.constant 0 : i32
    %c0_i32_1 = arith.constant 0 : i32
    return %c0_i32, %c0_i32_0 : i32, i32
  }
  func.func @transform_5(%arg0: i32) -> (i32, i32) {
    %c0_i32 = arith.constant 0 : i32
    %c0_i32_0 = arith.constant 0 : i32
    %c0_i32_1 = arith.constant 0 : i32
    return %c0_i32, %c0_i32_0 : i32, i32
  }
  func.func @transform_6(%arg0: i32) -> (i32, i32) {
    %c0_i32 = arith.constant 0 : i32
    %c0_i32_0 = arith.constant 0 : i32
    %c0_i32_1 = arith.constant 0 : i32
    return %c0_i32, %c0_i32_0 : i32, i32
  }
  func.func @transform_7(%arg0: i32) -> (i32, i32, i32) {
    %c0_i32 = arith.constant 0 : i32
    %c0_i32_0 = arith.constant 0 : i32
    %c0_i32_1 = arith.constant 0 : i32
    %c0_i32_2 = arith.constant 0 : i32
    return %c0_i32, %c0_i32_0, %c0_i32_1 : i32, i32, i32
  }
  func.func @transform_8(%arg0: i32) -> (i32, i32) {
    %c0_i32 = arith.constant 0 : i32
    %c0_i32_0 = arith.constant 0 : i32
    %c0_i32_1 = arith.constant 0 : i32
    return %c0_i32, %c0_i32_0 : i32, i32
  }
  func.func @transform_9(%arg0: i32) -> (i32, i32) {
    %c0_i32 = arith.constant 0 : i32
    %c0_i32_0 = arith.constant 0 : i32
    %c0_i32_1 = arith.constant 0 : i32
    return %c0_i32, %c0_i32_0 : i32, i32
  }
  func.func @transform_10(%arg0: i32) -> (i32, i32, i32) {
    %c0_i32 = arith.constant 0 : i32
    %c0_i32_0 = arith.constant 0 : i32
    %c0_i32_1 = arith.constant 0 : i32
    return %arg0, %c0_i32, %c0_i32_0 : i32, i32, i32
  }
}

</mosaic_0001>

<llo_original>
// kernel: classify_forward.2
$region0: #{classify_forward.2}
  #allocation0 [shape = 'u32[]', space=smem, size = 0x4, offset = 0x4, fixed_abs, tag = 'smem constant byte address 0x4 - core index']
  #allocation1 [shape = 'u32[144,128]{1,0:T(1,128)}', space=vmem, size = 0x12000, scoped, tag = 'internal scratch']
  #allocation2 [shape = 'f32[27,1024]{1,0:T(8,128)}', space=vmem, size = 0x20000, scoped, tag = 'scratch operand']
  %s0 = inlined_call_operand.vmem [shape: f32[2,3,1024], index: 0, kind: input, shape index: {}]
  %s1 = inlined_call_operand.vmem [shape: f32[12,27], index: 1, kind: input, shape index: {}]
  %s2 = inlined_call_operand.vmem [shape: f32[12,1], index: 2, kind: input, shape index: {}]
  %s3 = inlined_call_operand.vmem [shape: f32[12,1], index: 3, kind: input, shape index: {}]
  %s4 = inlined_call_operand.vmem [shape: f32[9,1024], index: 4, kind: input, shape index: {}]
  %s5 = inlined_call_operand.vmem [shape: f32[2,12,1024], index: 5, kind: output, shape index: {}]
  %s6 = sld [smem:[#allocation0]]
  $region53: #{classify_forward.2} parent=0
    _
  %s8 = ssub.s32 1, %s6
  %s9 = scalar_select 0, %s8, %s6
  loop: start=0, step=1, limit=4
  $region2: #{classify_forward.2} parent=0 // loop_pre_header
    _
  $region3: #{classify_forward.2} parent=0 // loop_header
    %s11 = sphi 0, %s15
    %p12 = scmp.ge.s32.totalorder %s11, 4
    %s21 = sphi 0, %s23
    %s24 = sphi 0, %s21
    %s25 = sphi 0, %s24
    %s41 = sphi 0, %s25
    %s45 = sphi 0, %s45
    %s47 = sphi 0, %s45
    %s48 = sphi 0, %s47
    %s62 = sphi 0, %s48
    %s66 = sphi 0, %s66
    %s68 = sphi 0, %s66
    %s69 = sphi 0, %s68
    %s83 = sphi 0, %s69
    %s87 = sphi 0, %s87
    %s89 = sphi 0, %s87
    %s90 = sphi 0, %s89
    %s104 = sphi 0, %s90
    %s108 = sphi 0, %s108
    %s110 = sphi 0, %s108
    %s111 = sphi 0, %s110
    %s125 = sphi 0, %s111
    %s131 = sphi 0, %s133
    %s134 = sphi 0, %s131
    %s135 = sphi 0, %s134
    %s151 = sphi 0, %s135
  $region4: #{classify_forward.2} parent=0 // loop_header_branch
    %14 = sbr.rel (%p12) target = $region8
  $region5: #{classify_forward.2} parent=0 // loop_body
    %s16 = ssub.s32 %s11, 1
    %s17 = ssub.s32 %s11, 2
    %s18 = sadd.s32 %s11, 1
    %s19 = ssub.s32 %s11, %s18
    %p20 = scmp.eq.s32.totalorder %s19, 0
    %s22 = sadd.s32 %s21, 1
    %s23 = scalar_select %p20, %s21, %s22
    %p26 = pneg %p20
    %p27 = scmp.eq.s32.totalorder %s11, 1
    %p28 = por %p26, %p27
    %p29 = scmp.ne.s32.totalorder %s21, %s24
    %p30 = scmp.eq.s32.totalorder %s11, 0
    %p31 = por %p29, %p30
    %p32 = scmp.ne.s32.totalorder %s21, %s24
    %p33 = scmp.eq.s32.totalorder %s16, 1
    %p34 = por %p32, %p33
    %p35 = scmp.ne.s32.totalorder %s24, %s25
    %p36 = scmp.eq.s32.totalorder %s16, 0
    %p37 = por %p35, %p36
    %p38 = scmp.ne.s32.totalorder %s24, %s25
    %p39 = scmp.eq.s32.totalorder %s17, 1
    %p40 = por %p38, %p39
    %p42 = scmp.ne.s32.totalorder %s25, %s41
    %p43 = scmp.eq.s32.totalorder %s17, 0
    %p44 = por %p42, %p43
    %s46 = sadd.s32 %s45, 1
    %p49 = scmp.eq.s32.totalorder %s11, 1
    %p50 = scmp.ne.s32.totalorder %s45, %s47
    %p51 = scmp.eq.s32.totalorder %s11, 0
    %p52 = por %p50, %p51
    %p53 = scmp.ne.s32.totalorder %s45, %s47
    %p54 = scmp.eq.s32.totalorder %s16, 1
    %p55 = por %p53, %p54
    %p56 = scmp.ne.s32.totalorder %s47, %s48
    %p57 = scmp.eq.s32.totalorder %s16, 0
    %p58 = por %p56, %p57
    %p59 = scmp.ne.s32.totalorder %s47, %s48
    %p60 = scmp.eq.s32.totalorder %s17, 1
    %p61 = por %p59, %p60
    %p63 = scmp.ne.s32.totalorder %s48, %s62
    %p64 = scmp.eq.s32.totalorder %s17, 0
    %p65 = por %p63, %p64
    %s67 = sadd.s32 %s66, 1
    %p70 = scmp.eq.s32.totalorder %s11, 1
    %p71 = scmp.ne.s32.totalorder %s66, %s68
    %p72 = scmp.eq.s32.totalorder %s11, 0
    %p73 = por %p71, %p72
    %p74 = scmp.ne.s32.totalorder %s66, %s68
    %p75 = scmp.eq.s32.totalorder %s16, 1
    %p76 = por %p74, %p75
    %p77 = scmp.ne.s32.totalorder %s68, %s69
    %p78 = scmp.eq.s32.totalorder %s16, 0
    %p79 = por %p77, %p78
    %p80 = scmp.ne.s32.totalorder %s68, %s69
    %p81 = scmp.eq.s32.totalorder %s17, 1
    %p82 = por %p80, %p81
    %p84 = scmp.ne.s32.totalorder %s69, %s83
    %p85 = scmp.eq.s32.totalorder %s17, 0
    %p86 = por %p84, %p85
    %s88 = sadd.s32 %s87, 1
    %p91 = scmp.eq.s32.totalorder %s11, 1
    %p92 = scmp.ne.s32.totalorder %s87, %s89
    %p93 = scmp.eq.s32.totalorder %s11, 0
    %p94 = por %p92, %p93
    %p95 = scmp.ne.s32.totalorder %s87, %s89
    %p96 = scmp.eq.s32.totalorder %s16, 1
    %p97 = por %p95, %p96
    %p98 = scmp.ne.s32.totalorder %s89, %s90
    %p99 = scmp.eq.s32.totalorder %s16, 0
    %p100 = por %p98, %p99
    %p101 = scmp.ne.s32.totalorder %s89, %s90
    %p102 = scmp.eq.s32.totalorder %s17, 1
    %p103 = por %p101, %p102
    %p105 = scmp.ne.s32.totalorder %s90, %s104
    %p106 = scmp.eq.s32.totalorder %s17, 0
    %p107 = por %p105, %p106
    %s109 = sadd.s32 %s108, 1
    %p112 = scmp.eq.s32.totalorder %s11, 1
    %p113 = scmp.ne.s32.totalorder %s108, %s110
    %p114 = scmp.eq.s32.totalorder %s11, 0
    %p115 = por %p113, %p114
    %p116 = scmp.ne.s32.totalorder %s108, %s110
    %p117 = scmp.eq.s32.totalorder %s16, 1
    %p118 = por %p116, %p117
    %p119 = scmp.ne.s32.totalorder %s110, %s111
    %p120 = scmp.eq.s32.totalorder %s16, 0
    %p121 = por %p119, %p120
    %p122 = scmp.ne.s32.totalorder %s110, %s111
    %p123 = scmp.eq.s32.totalorder %s17, 1
    %p124 = por %p122, %p123
    %p126 = scmp.ne.s32.totalorder %s111, %s125
    %p127 = scmp.eq.s32.totalorder %s17, 0
    %p128 = por %p126, %p127
    %s129 = ssub.s32 %s11, %s18
    %p130 = scmp.eq.s32.totalorder %s129, 0
    %s132 = sadd.s32 %s131, 1
    %s133 = scalar_select %p130, %s131, %s132
    %p136 = pneg %p130
    %p137 = scmp.eq.s32.totalorder %s11, 1
    %p138 = por %p136, %p137
    %p139 = scmp.ne.s32.totalorder %s131, %s134
    %p140 = scmp.eq.s32.totalorder %s11, 0
    %p141 = por %p139, %p140
    %p142 = scmp.ne.s32.totalorder %s131, %s134
    %p143 = scmp.eq.s32.totalorder %s16, 1
    %p144 = por %p142, %p143
    %p145 = scmp.ne.s32.totalorder %s134, %s135
    %p146 = scmp.eq.s32.totalorder %s16, 0
    %p147 = por %p145, %p146
    %p148 = scmp.ne.s32.totalorder %s134, %s135
    %p149 = scmp.eq.s32.totalorder %s17, 1
    %p150 = por %p148, %p149
    %p152 = scmp.ne.s32.totalorder %s135, %s151
    %p153 = scmp.eq.s32.totalorder %s17, 0
    %p154 = por %p152, %p153
    %p155 = scmp.le.s32.totalorder 1, %s11
    %p156 = scmp.lt.s32.totalorder %s11, 3
    %p157 = pnand %p155, %p156
    %p158 = pneg %p157
    // Predicated region
    $region9: #{classify_forward.2} parent=5 // pred_check
      _
    $region10: #{classify_forward.2} parent=5 // pred_check_branch
      %160 = sbr.rel (%p157) target = $region12
    $region11: #{classify_forward.2} parent=5 // pred_region
      %s161 = ssub.s32 %s11, 1
      // Predicated region
      $region13: #{classify_forward.2} parent=11 // pred_check
        %p162 = pneg %p58
      $region14: #{classify_forward.2} parent=11 // pred_check_branch
        %164 = sbr.rel (%p162) target = $region16
      $region15: #{classify_forward.2} parent=11 // pred_region
        _
      $region16: #{classify_forward.2} parent=11 // pred_fallthru
        _
      // Predicated region
      $region17: #{classify_forward.2} parent=11 // pred_check
        %p165 = pneg %p79
      $region18: #{classify_forward.2} parent=11 // pred_check_branch
        %167 = sbr.rel (%p165) target = $region20
      $region19: #{classify_forward.2} parent=11 // pred_region
        _
      $region20: #{classify_forward.2} parent=11 // pred_fallthru
        _
      // Predicated region
      $region21: #{classify_forward.2} parent=11 // pred_check
        %p168 = pneg %p100
      $region22: #{classify_forward.2} parent=11 // pred_check_branch
        %170 = sbr.rel (%p168) target = $region24
      $region23: #{classify_forward.2} parent=11 // pred_region
        _
      $region24: #{classify_forward.2} parent=11 // pred_fallthru
        _
      // Predicated region
      $region25: #{classify_forward.2} parent=11 // pred_check
        %p171 = pneg %p121
      $region26: #{classify_forward.2} parent=11 // pred_check_branch
        %173 = sbr.rel (%p171) target = $region28
      $region27: #{classify_forward.2} parent=11 // pred_region
        _
      $region28: #{classify_forward.2} parent=11 // pred_fallthru
        _
    $region12: #{classify_forward.2} parent=5 // pred_fallthru
      _
    %p174 = scmp.lt.s32.totalorder %s11, 2
    // Predicated region
    $region29: #{classify_forward.2} parent=5 // pred_check
      %p175 = pneg %p174
    $region30: #{classify_forward.2} parent=5 // pred_check_branch
      %177 = sbr.rel (%p175) target = $region32
    $region31: #{classify_forward.2} parent=5 // pred_region
      // Predicated region
      $region33: #{classify_forward.2} parent=31 // pred_check
        %p178 = pneg %p31
      $region34: #{classify_forward.2} parent=31 // pred_check_branch
        %180 = sbr.rel (%p178) target = $region36
      $region35: #{classify_forward.2} parent=31 // pred_region
        %p181 = scmp.lt.s32.totalorder %s11, 1
        %s182 = scalar_select %p181, %s11, 1
        %s183 = smul.addr %s182, 8
        %s184 = smul.addr %s183, 4
        %s185 = scalar_lea.vmem %s0, %s184
      $region36: #{classify_forward.2} parent=31 // pred_fallthru
        _
    $region32: #{classify_forward.2} parent=5 // pred_fallthru
      _
    %p186 = scmp.le.s32.totalorder 1, %s11
    %p187 = scmp.lt.s32.totalorder %s11, 3
    %p188 = pnand %p186, %p187
    %p189 = pneg %p188
    // Predicated region
    $region37: #{classify_forward.2} parent=5 // pred_check
      _
    $region38: #{classify_forward.2} parent=5 // pred_check_branch
      %191 = sbr.rel (%p188) target = $region40
    $region39: #{classify_forward.2} parent=5 // pred_region
      %s192 = ssub.s32 %s11, 1
      %p193 = scmp.lt.s32.totalorder %s16, 1
      %s194 = scalar_select %p193, %s16, 1
      %s195 = smul.addr %s194, 8
      %s196 = smul.addr %s195, 4
      %s197 = scalar_lea.vmem %s0, %s196
      %p198 = pneg %p37
      %p199 = pneg %p34
      %p200 = pneg %p58
      %p201 = pneg %p55
      %p202 = pneg %p79
      %p203 = pneg %p76
      %p204 = pneg %p100
      %p205 = pneg %p97
      %p206 = pneg %p121
      %p207 = pneg %p118
      %p208 = pneg %p147
      %p209 = pneg %p144
      %p210 = scmp.lt.s32.totalorder %s16, 1
      %s211 = scalar_select %p210, %s16, 1
      %s212 = smul.addr %s211, 16
      %s213 = smul.addr %s212, 8
      %s214 = scalar_lea.vmem %s5, %s213
      %p215 = scmp.lt.s32.totalorder %s16, 1
      %s216 = scalar_select %p215, %s16, 1
      %s217 = smul.addr %s216, 8
      %s218 = smul.addr %s217, 4
      %s219 = scalar_lea.vmem %s0, %s218
      %p220 = scmp.lt.s32.totalorder %s16, 1
      %s221 = scalar_select %p220, %s16, 1
      %s222 = smul.addr %s221, 16
      %s223 = smul.addr %s222, 8
      %s224 = scalar_lea.vmem %s5, %s223
      %v225 = vld [vmem:[%s219] sm:$0x77]
      %v226 = vld [vmem:[%s219 + $0x8] sm:$0x77]
      %v227 = vld [vmem:[%s219 + $0x10] sm:$0x77]
      %v228 = vld [vmem:[%s219 + $0x18] sm:$0x77]
      %v233 = vcombine.high %v225, %v225
      %v234 = vcombine.high %v226, %v226
      %v235 = vcombine.high %v227, %v227
      %v236 = vcombine.high %v228, %v228
      %241 = vrot.lane.b32.xlu0 %v225, 33
      %v242 = vpop.permute.xlu0 %241
      %243 = vrot.lane.b32.xlu0 %v233, 33
      %v244 = vpop.permute.xlu0 %243
      %245 = vrot.lane.b32.xlu0 %v226, 33
      %v246 = vpop.permute.xlu0 %245
      %247 = vrot.lane.b32.xlu0 %v234, 33
      %v248 = vpop.permute.xlu0 %247
      %249 = vrot.lane.b32.xlu0 %v227, 33
      %v250 = vpop.permute.xlu0 %249
      %251 = vrot.lane.b32.xlu0 %v235, 33
      %v252 = vpop.permute.xlu0 %251
      %253 = vrot.lane.b32.xlu0 %v228, 33
      %v254 = vpop.permute.xlu0 %253
      %255 = vrot.lane.b32.xlu0 %v236, 33
      %v256 = vpop.permute.xlu0 %255
      %v257 = vlaneseq
      %v258 = vand.u32 %v257, 127
      %vm259 = vcmp.lt.s32.totalorder %v258, 33
      %v260 = vsel %vm259, %v254, %v256
      %v261 = vsel %vm259, %v252, %v254
      %v262 = vsel %vm259, %v250, %v252
      %v263 = vsel %vm259, %v248, %v250
      %v264 = vsel %vm259, %v246, %v248
      %v265 = vsel %vm259, %v244, %v246
      %v266 = vsel %vm259, %v242, %v244
      %v267 = vsel %vm259, %v256, %v242
      %v268 = vld [vmem:[%s4] ss:$8 sm:$0xf]
      %v269 = vld [vmem:[%s4] ss:$8 sm:$0xf0]
      %v270 = vor.u32 %v268, %v269
      %v272 = vlaneseq
      %v273 = vshrl.u32 %v272, 7
      %v274 = vsub.s32 0, %v273
      %v275 = vrot.slane %v270, %v274
      %v276 = vlaneseq
      %v277 = vshrl.u32 %v276, 7
      %v278 = vsub.s32 1, %v277
      %v279 = vrot.slane %v270, %v278
      %v280 = vlaneseq
      %v281 = vshrl.u32 %v280, 7
      %v282 = vsub.s32 2, %v281
      %v283 = vrot.slane %v270, %v282
      %v284 = vlaneseq
      %v285 = vshrl.u32 %v284, 7
      %v286 = vsub.s32 3, %v285
      %v287 = vrot.slane %v270, %v286
      %v288 = vlaneseq
      %v289 = vshrl.u32 %v288, 7
      %v290 = vsub.s32 4, %v289
      %v291 = vrot.slane %v270, %v290
      %v292 = vlaneseq
      %v293 = vshrl.u32 %v292, 7
      %v294 = vsub.s32 5, %v293
      %v295 = vrot.slane %v270, %v294
      %v296 = vlaneseq
      %v297 = vshrl.u32 %v296, 7
      %v298 = vsub.s32 6, %v297
      %v299 = vrot.slane %v270, %v298
      %v300 = vlaneseq
      %v301 = vshrl.u32 %v300, 7
      %v302 = vsub.s32 7, %v301
      %v303 = vrot.slane %v270, %v302
      %v312 = vmul.f32 %v267, %v275
      %v313 = vmul.f32 %v266, %v279
      %v314 = vmul.f32 %v265, %v283
      %v315 = vmul.f32 %v264, %v287
      %v316 = vmul.f32 %v263, %v291
      %v317 = vmul.f32 %v262, %v295
      %v318 = vmul.f32 %v261, %v299
      %v319 = vmul.f32 %v260, %v303
      %320 = vst [vmem:[#allocation2] sm:$0x7] %v312
      %321 = vst [vmem:[#allocation2 + $0x8] sm:$0x7] %v313
      %322 = vst [vmem:[#allocation2 + $0x10] sm:$0x7] %v314
      %323 = vst [vmem:[#allocation2 + $0x18] sm:$0x7] %v315
      %324 = vst [vmem:[#allocation2 + $0x20] sm:$0x7] %v316
      %325 = vst [vmem:[#allocation2 + $0x28] sm:$0x7] %v317
      %326 = vst [vmem:[#allocation2 + $0x30] sm:$0x7] %v318
      %327 = vst [vmem:[#allocation2 + $0x38] sm:$0x7] %v319
      %328 = vrot.lane.b32.xlu0 %v225, 32
      %v329 = vpop.permute.xlu0 %328
      %330 = vrot.lane.b32.xlu0 %v233, 32
      %v331 = vpop.permute.xlu0 %330
      %332 = vrot.lane.b32.xlu0 %v226, 32
      %v333 = vpop.permute.xlu0 %332
      %334 = vrot.lane.b32.xlu0 %v234, 32
      %v335 = vpop.permute.xlu0 %334
      %336 = vrot.lane.b32.xlu0 %v227, 32
      %v337 = vpop.permute.xlu0 %336
      %338 = vrot.lane.b32.xlu0 %v235, 32
      %v339 = vpop.permute.xlu0 %338
      %340 = vrot.lane.b32.xlu0 %v228, 32
      %v341 = vpop.permute.xlu0 %340
      %342 = vrot.lane.b32.xlu0 %v236, 32
      %v343 = vpop.permute.xlu0 %342
      %vm344 = vcmp.lt.s32.totalorder %v258, 32
      %v345 = vsel %vm344, %v341, %v343
      %v346 = vsel %vm344, %v339, %v341
      %v347 = vsel %vm344, %v337, %v339
      %v348 = vsel %vm344, %v335, %v337
      %v349 = vsel %vm344, %v333, %v335
      %v350 = vsel %vm344, %v331, %v333
      %v351 = vsel %vm344, %v329, %v331
      %v352 = vsel %vm344, %v343, %v329
      %s353 = scalar_lea.vmem %s4, 1
      %v354 = vld [vmem:[%s353] ss:$8 sm:$0xf]
      %v355 = vld [vmem:[%s353] ss:$8 sm:$0xf0]
      %v356 = vor.u32 %v354, %v355
      %v358 = vlaneseq
      %v359 = vshrl.u32 %v358, 7
      %v360 = vsub.s32 0, %v359
      %v361 = vrot.slane %v356, %v360
      %v362 = vlaneseq
      %v363 = vshrl.u32 %v362, 7
      %v364 = vsub.s32 1, %v363
      %v365 = vrot.slane %v356, %v364
      %v366 = vlaneseq
      %v367 = vshrl.u32 %v366, 7
      %v368 = vsub.s32 2, %v367
      %v369 = vrot.slane %v356, %v368
      %v370 = vlaneseq
      %v371 = vshrl.u32 %v370, 7
      %v372 = vsub.s32 3, %v371
      %v373 = vrot.slane %v356, %v372
      %v374 = vlaneseq
      %v375 = vshrl.u32 %v374, 7
      %v376 = vsub.s32 4, %v375
      %v377 = vrot.slane %v356, %v376
      %v378 = vlaneseq
      %v379 = vshrl.u32 %v378, 7
      %v380 = vsub.s32 5, %v379
      %v381 = vrot.slane %v356, %v380
      %v382 = vlaneseq
      %v383 = vshrl.u32 %v382, 7
      %v384 = vsub.s32 6, %v383
      %v385 = vrot.slane %v356, %v384
      %v386 = vlaneseq
      %v387 = vshrl.u32 %v386, 7
      %v388 = vsub.s32 7, %v387
      %v389 = vrot.slane %v356, %v388
      %v398 = vmul.f32 %v352, %v361
      %v399 = vmul.f32 %v351, %v365
      %v400 = vmul.f32 %v350, %v369
      %v401 = vmul.f32 %v349, %v373
      %v402 = vmul.f32 %v348, %v377
      %v403 = vmul.f32 %v347, %v381
      %v404 = vmul.f32 %v346, %v385
      %v405 = vmul.f32 %v345, %v389
      %v414 = vrot.slane %v398, 5
      %v415 = vrot.slane %v399, 5
      %v416 = vrot.slane %v400, 5
      %v417 = vrot.slane %v401, 5
      %v418 = vrot.slane %v402, 5
      %v419 = vrot.slane %v403, 5
      %v420 = vrot.slane %v404, 5
      %v421 = vrot.slane %v405, 5
      %430 = vst [vmem:[#allocation2] sm:$0x38] %v414
      %431 = vst [vmem:[#allocation2 + $0x8] sm:$0x38] %v415
      %432 = vst [vmem:[#allocation2 + $0x10] sm:$0x38] %v416
      %433 = vst [vmem:[#allocation2 + $0x18] sm:$0x38] %v417
      %434 = vst [vmem:[#allocation2 + $0x20] sm:$0x38] %v418
      %435 = vst [vmem:[#allocation2 + $0x28] sm:$0x38] %v419
      %436 = vst [vmem:[#allocation2 + $0x30] sm:$0x38] %v420
      %437 = vst [vmem:[#allocation2 + $0x38] sm:$0x38] %v421
      %438 = vrot.lane.b32.xlu0 %v225, 31
      %v439 = vpop.permute.xlu0 %438
      %440 = vrot.lane.b32.xlu0 %v233, 31
      %v441 = vpop.permute.xlu0 %440
      %442 = vrot.lane.b32.xlu0 %v226, 31
      %v443 = vpop.permute.xlu0 %442
      %444 = vrot.lane.b32.xlu0 %v234, 31
      %v445 = vpop.permute.xlu0 %444
      %446 = vrot.lane.b32.xlu0 %v227, 31
      %v447 = vpop.permute.xlu0 %446
      %448 = vrot.lane.b32.xlu0 %v235, 31
      %v449 = vpop.permute.xlu0 %448
      %450 = vrot.lane.b32.xlu0 %v228, 31
      %v451 = vpop.permute.xlu0 %450
      %452 = vrot.lane.b32.xlu0 %v236, 31
      %v453 = vpop.permute.xlu0 %452
      %vm454 = vcmp.lt.s32.totalorder %v258, 31
      %v455 = vsel %vm454, %v451, %v453
      %v456 = vsel %vm454, %v449, %v451
      %v457 = vsel %vm454, %v447, %v449
      %v458 = vsel %vm454, %v445, %v447
      %v459 = vsel %vm454, %v443, %v445
      %v460 = vsel %vm454, %v441, %v443
      %v461 = vsel %vm454, %v439, %v441
      %v462 = vsel %vm454, %v453, %v439
      %s463 = scalar_lea.vmem %s4, 2
      %v464 = vld [vmem:[%s463] ss:$8 sm:$0xf]
      %v465 = vld [vmem:[%s463] ss:$8 sm:$0xf0]
      %v466 = vor.u32 %v464, %v465
      %v468 = vlaneseq
      %v469 = vshrl.u32 %v468, 7
      %v470 = vsub.s32 0, %v469
      %v471 = vrot.slane %v466, %v470
      %v472 = vlaneseq
      %v473 = vshrl.u32 %v472, 7
      %v474 = vsub.s32 1, %v473
      %v475 = vrot.slane %v466, %v474
      %v476 = vlaneseq
      %v477 = vshrl.u32 %v476, 7
      %v478 = vsub.s32 2, %v477
      %v479 = vrot.slane %v466, %v478
      %v480 = vlaneseq
      %v481 = vshrl.u32 %v480, 7
      %v482 = vsub.s32 3, %v481
      %v483 = vrot.slane %v466, %v482
      %v484 = vlaneseq
      %v485 = vshrl.u32 %v484, 7
      %v486 = vsub.s32 4, %v485
      %v487 = vrot.slane %v466, %v486
      %v488 = vlaneseq
      %v489 = vshrl.u32 %v488, 7
      %v490 = vsub.s32 5, %v489
      %v491 = vrot.slane %v466, %v490
      %v492 = vlaneseq
      %v493 = vshrl.u32 %v492, 7
      %v494 = vsub.s32 6, %v493
      %v495 = vrot.slane %v466, %v494
      %v496 = vlaneseq
      %v497 = vshrl.u32 %v496, 7
      %v498 = vsub.s32 7, %v497
      %v499 = vrot.slane %v466, %v498
      %v508 = vmul.f32 %v462, %v471
      %v509 = vmul.f32 %v461, %v475
      %v510 = vmul.f32 %v460, %v479
      %v511 = vmul.f32 %v459, %v483
      %v512 = vmul.f32 %v458, %v487
      %v513 = vmul.f32 %v457, %v491
      %v514 = vmul.f32 %v456, %v495
      %v515 = vmul.f32 %v455, %v499
      %v524 = vrot.slane %v508, 2
      %v525 = vrot.slane %v509, 2
      %v526 = vrot.slane %v510, 2
      %v527 = vrot.slane %v511, 2
      %v528 = vrot.slane %v512, 2
      %v529 = vrot.slane %v513, 2
      %v530 = vrot.slane %v514, 2
      %v531 = vrot.slane %v515, 2
      %540 = vst [vmem:[#allocation2] sm:$0xc0] %v524
      %541 = vst [vmem:[#allocation2 + $0x8] sm:$0xc0] %v525
      %542 = vst [vmem:[#allocation2 + $0x10] sm:$0xc0] %v526
      %543 = vst [vmem:[#allocation2 + $0x18] sm:$0xc0] %v527
      %544 = vst [vmem:[#allocation2 + $0x20] sm:$0xc0] %v528
      %545 = vst [vmem:[#allocation2 + $0x28] sm:$0xc0] %v529
      %546 = vst [vmem:[#allocation2 + $0x30] sm:$0xc0] %v530
      %547 = vst [vmem:[#allocation2 + $0x38] sm:$0xc0] %v531
      %548 = vst [vmem:[#allocation2 + $0x40] sm:$0x1] %v524
      %549 = vst [vmem:[#allocation2 + $0x48] sm:$0x1] %v525
      %550 = vst [vmem:[#allocation2 + $0x50] sm:$0x1] %v526
      %551 = vst [vmem:[#allocation2 + $0x58] sm:$0x1] %v527
      %552 = vst [vmem:[#allocation2 + $0x60] sm:$0x1] %v528
      %553 = vst [vmem:[#allocation2 + $0x68] sm:$0x1] %v529
      %554 = vst [vmem:[#allocation2 + $0x70] sm:$0x1] %v530
      %555 = vst [vmem:[#allocation2 + $0x78] sm:$0x1] %v531
      %556 = vrot.lane.b32.xlu0 %v225, 1
      %v557 = vpop.permute.xlu0 %556
      %558 = vrot.lane.b32.xlu0 %v233, 1
      %v559 = vpop.permute.xlu0 %558
      %560 = vrot.lane.b32.xlu0 %v226, 1
      %v561 = vpop.permute.xlu0 %560
      %562 = vrot.lane.b32.xlu0 %v234, 1
      %v563 = vpop.permute.xlu0 %562
      %564 = vrot.lane.b32.xlu0 %v227, 1
      %v565 = vpop.permute.xlu0 %564
      %566 = vrot.lane.b32.xlu0 %v235, 1
      %v567 = vpop.permute.xlu0 %566
      %568 = vrot.lane.b32.xlu0 %v228, 1
      %v569 = vpop.permute.xlu0 %568
      %570 = vrot.lane.b32.xlu0 %v236, 1
      %v571 = vpop.permute.xlu0 %570
      %vm572 = vcmp.lt.s32.totalorder %v258, 1
      %v573 = vsel %vm572, %v569, %v571
      %v574 = vsel %vm572, %v567, %v569
      %v575 = vsel %vm572, %v565, %v567
      %v576 = vsel %vm572, %v563, %v565
      %v577 = vsel %vm572, %v561, %v563
      %v578 = vsel %vm572, %v559, %v561
      %v579 = vsel %vm572, %v557, %v559
      %v580 = vsel %vm572, %v571, %v557
      %s581 = scalar_lea.vmem %s4, 3
      %v582 = vld [vmem:[%s581] ss:$8 sm:$0xf]
      %v583 = vld [vmem:[%s581] ss:$8 sm:$0xf0]
      %v584 = vor.u32 %v582, %v583
      %v586 = vlaneseq
      %v587 = vshrl.u32 %v586, 7
      %v588 = vsub.s32 0, %v587
      %v589 = vrot.slane %v584, %v588
      %v590 = vlaneseq
      %v591 = vshrl.u32 %v590, 7
      %v592 = vsub.s32 1, %v591
      %v593 = vrot.slane %v584, %v592
      %v594 = vlaneseq
      %v595 = vshrl.u32 %v594, 7
      %v596 = vsub.s32 2, %v595
      %v597 = vrot.slane %v584, %v596
      %v598 = vlaneseq
      %v599 = vshrl.u32 %v598, 7
      %v600 = vsub.s32 3, %v599
      %v601 = vrot.slane %v584, %v600
      %v602 = vlaneseq
      %v603 = vshrl.u32 %v602, 7
      %v604 = vsub.s32 4, %v603
      %v605 = vrot.slane %v584, %v604
      %v606 = vlaneseq
      %v607 = vshrl.u32 %v606, 7
      %v608 = vsub.s32 5, %v607
      %v609 = vrot.slane %v584, %v608
      %v610 = vlaneseq
      %v611 = vshrl.u32 %v610, 7
      %v612 = vsub.s32 6, %v611
      %v613 = vrot.slane %v584, %v612
      %v614 = vlaneseq
      %v615 = vshrl.u32 %v614, 7
      %v616 = vsub.s32 7, %v615
      %v617 = vrot.slane %v584, %v616
      %v626 = vmul.f32 %v580, %v589
      %v627 = vmul.f32 %v579, %v593
      %v628 = vmul.f32 %v578, %v597
      %v629 = vmul.f32 %v577, %v601
      %v630 = vmul.f32 %v576, %v605
      %v631 = vmul.f32 %v575, %v609
      %v632 = vmul.f32 %v574, %v613
      %v633 = vmul.f32 %v573, %v617
      %v642 = vrot.slane %v626, 7
      %v643 = vrot.slane %v627, 7
      %v644 = vrot.slane %v628, 7
      %v645 = vrot.slane %v629, 7
      %v646 = vrot.slane %v630, 7
      %v647 = vrot.slane %v631, 7
      %v648 = vrot.slane %v632, 7
      %v649 = vrot.slane %v633, 7
      %658 = vst [vmem:[#allocation2 + $0x40] sm:$0xe] %v642
      %659 = vst [vmem:[#allocation2 + $0x48] sm:$0xe] %v643
      %660 = vst [vmem:[#allocation2 + $0x50] sm:$0xe] %v644
      %661 = vst [vmem:[#allocation2 + $0x58] sm:$0xe] %v645
      %662 = vst [vmem:[#allocation2 + $0x60] sm:$0xe] %v646
      %663 = vst [vmem:[#allocation2 + $0x68] sm:$0xe] %v647
      %664 = vst [vmem:[#allocation2 + $0x70] sm:$0xe] %v648
      %665 = vst [vmem:[#allocation2 + $0x78] sm:$0xe] %v649
      %s666 = scalar_lea.vmem %s4, 4
      %v667 = vld [vmem:[%s666] ss:$8 sm:$0xf]
      %v668 = vld [vmem:[%s666] ss:$8 sm:$0xf0]
      %v669 = vor.u32 %v667, %v668
      %v671 = vlaneseq
      %v672 = vshrl.u32 %v671, 7
      %v673 = vsub.s32 0, %v672
      %v674 = vrot.slane %v669, %v673
      %v675 = vlaneseq
      %v676 = vshrl.u32 %v675, 7
      %v677 = vsub.s32 1, %v676
      %v678 = vrot.slane %v669, %v677
      %v679 = vlaneseq
      %v680 = vshrl.u32 %v679, 7
      %v681 = vsub.s32 2, %v680
      %v682 = vrot.slane %v669, %v681
      %v683 = vlaneseq
      %v684 = vshrl.u32 %v683, 7
      %v685 = vsub.s32 3, %v684
      %v686 = vrot.slane %v669, %v685
      %v687 = vlaneseq
      %v688 = vshrl.u32 %v687, 7
      %v689 = vsub.s32 4, %v688
      %v690 = vrot.slane %v669, %v689
      %v691 = vlaneseq
      %v692 = vshrl.u32 %v691, 7
      %v693 = vsub.s32 5, %v692
      %v694 = vrot.slane %v669, %v693
      %v695 = vlaneseq
      %v696 = vshrl.u32 %v695, 7
      %v697 = vsub.s32 6, %v696
      %v698 = vrot.slane %v669, %v697
      %v699 = vlaneseq
      %v700 = vshrl.u32 %v699, 7
      %v701 = vsub.s32 7, %v700
      %v702 = vrot.slane %v669, %v701
      %v703 = vcombine.low %v674, %v678
      %v704 = vcombine.low %v682, %v686
      %v705 = vcombine.low %v690, %v694
      %v706 = vcombine.low %v698, %v702
      %v711 = vmul.f32 %v225, %v703
      %v712 = vmul.f32 %v226, %v704
      %v713 = vmul.f32 %v227, %v705
      %v714 = vmul.f32 %v228, %v706
      %v719 = vcombine.low %v711, %v711
      %v720 = vcombine.low %v712, %v712
      %v721 = vcombine.low %v713, %v713
      %v722 = vcombine.low %v714, %v714
      %727 = vst [vmem:[#allocation2 + $0x40] sm:$0x70] %v719
      %728 = vst [vmem:[#allocation2 + $0x48] sm:$0x70] %v711
      %729 = vst [vmem:[#allocation2 + $0x50] sm:$0x70] %v720
      %730 = vst [vmem:[#allocation2 + $0x58] sm:$0x70] %v712
      %731 = vst [vmem:[#allocation2 + $0x60] sm:$0x70] %v721
      %732 = vst [vmem:[#allocation2 + $0x68] sm:$0x70] %v713
      %733 = vst [vmem:[#allocation2 + $0x70] sm:$0x70] %v722
      %734 = vst [vmem:[#allocation2 + $0x78] sm:$0x70] %v714
      %735 = vrot.lane.b32.xlu0 %v225, 127
      %v736 = vpop.permute.xlu0 %735
      %737 = vrot.lane.b32.xlu0 %v233, 127
      %v738 = vpop.permute.xlu0 %737
      %739 = vrot.lane.b32.xlu0 %v226, 127
      %v740 = vpop.permute.xlu0 %739
      %741 = vrot.lane.b32.xlu0 %v234, 127
      %v742 = vpop.permute.xlu0 %741
      %743 = vrot.lane.b32.xlu0 %v227, 127
      %v744 = vpop.permute.xlu0 %743
      %745 = vrot.lane.b32.xlu0 %v235, 127
      %v746 = vpop.permute.xlu0 %745
      %747 = vrot.lane.b32.xlu0 %v228, 127
      %v748 = vpop.permute.xlu0 %747
      %749 = vrot.lane.b32.xlu0 %v236, 127
      %v750 = vpop.permute.xlu0 %749
      %vm751 = vcmp.lt.s32.totalorder %v258, 127
      %v752 = vsel %vm751, %v748, %v750
      %v753 = vsel %vm751, %v746, %v748
      %v754 = vsel %vm751, %v744, %v746
      %v755 = vsel %vm751, %v742, %v744
      %v756 = vsel %vm751, %v740, %v742
      %v757 = vsel %vm751, %v738, %v740
      %v758 = vsel %vm751, %v736, %v738
      %v759 = vsel %vm751, %v750, %v736
      %s760 = scalar_lea.vmem %s4, 5
      %v761 = vld [vmem:[%s760] ss:$8 sm:$0xf]
      %v762 = vld [vmem:[%s760] ss:$8 sm:$0xf0]
      %v763 = vor.u32 %v761, %v762
      %v765 = vlaneseq
      %v766 = vshrl.u32 %v765, 7
      %v767 = vsub.s32 0, %v766
      %v768 = vrot.slane %v763, %v767
      %v769 = vlaneseq
      %v770 = vshrl.u32 %v769, 7
      %v771 = vsub.s32 1, %v770
      %v772 = vrot.slane %v763, %v771
      %v773 = vlaneseq
      %v774 = vshrl.u32 %v773, 7
      %v775 = vsub.s32 2, %v774
      %v776 = vrot.slane %v763, %v775
      %v777 = vlaneseq
      %v778 = vshrl.u32 %v777, 7
      %v779 = vsub.s32 3, %v778
      %v780 = vrot.slane %v763, %v779
      %v781 = vlaneseq
      %v782 = vshrl.u32 %v781, 7
      %v783 = vsub.s32 4, %v782
      %v784 = vrot.slane %v763, %v783
      %v785 = vlaneseq
      %v786 = vshrl.u32 %v785, 7
      %v787 = vsub.s32 5, %v786
      %v788 = vrot.slane %v763, %v787
      %v789 = vlaneseq
      %v790 = vshrl.u32 %v789, 7
      %v791 = vsub.s32 6, %v790
      %v792 = vrot.slane %v763, %v791
      %v793 = vlaneseq
      %v794 = vshrl.u32 %v793, 7
      %v795 = vsub.s32 7, %v794
      %v796 = vrot.slane %v763, %v795
      %v805 = vmul.f32 %v758, %v768
      %v806 = vmul.f32 %v757, %v772
      %v807 = vmul.f32 %v756, %v776
      %v808 = vmul.f32 %v755, %v780
      %v809 = vmul.f32 %v754, %v784
      %v810 = vmul.f32 %v753, %v788
      %v811 = vmul.f32 %v752, %v792
      %v812 = vmul.f32 %v759, %v796
      %v821 = vrot.slane %v805, 1
      %v822 = vrot.slane %v806, 1
      %v823 = vrot.slane %v807, 1
      %v824 = vrot.slane %v808, 1
      %v825 = vrot.slane %v809, 1
      %v826 = vrot.slane %v810, 1
      %v827 = vrot.slane %v811, 1
      %v828 = vrot.slane %v812, 1
      %837 = vst [vmem:[#allocation2 + $0x40] sm:$0x80] %v821
      %838 = vst [vmem:[#allocation2 + $0x48] sm:$0x80] %v822
      %839 = vst [vmem:[#allocation2 + $0x50] sm:$0x80] %v823
      %840 = vst [vmem:[#allocation2 + $0x58] sm:$0x80] %v824
      %841 = vst [vmem:[#allocation2 + $0x60] sm:$0x80] %v825
      %842 = vst [vmem:[#allocation2 + $0x68] sm:$0x80] %v826
      %843 = vst [vmem:[#allocation2 + $0x70] sm:$0x80] %v827
      %844 = vst [vmem:[#allocation2 + $0x78] sm:$0x80] %v828
      %845 = vst [vmem:[#allocation2 + $0x80] sm:$0x3] %v821
      %846 = vst [vmem:[#allocation2 + $0x88] sm:$0x3] %v822
      %847 = vst [vmem:[#allocation2 + $0x90] sm:$0x3] %v823
      %848 = vst [vmem:[#allocation2 + $0x98] sm:$0x3] %v824
      %849 = vst [vmem:[#allocation2 + $0xa0] sm:$0x3] %v825
      %850 = vst [vmem:[#allocation2 + $0xa8] sm:$0x3] %v826
      %851 = vst [vmem:[#allocation2 + $0xb0] sm:$0x3] %v827
      %852 = vst [vmem:[#allocation2 + $0xb8] sm:$0x3] %v828
      %853 = vrot.lane.b32.xlu0 %v225, 97
      %v854 = vpop.permute.xlu0 %853
      %855 = vrot.lane.b32.xlu0 %v233, 97
      %v856 = vpop.permute.xlu0 %855
      %857 = vrot.lane.b32.xlu0 %v226, 97
      %v858 = vpop.permute.xlu0 %857
      %859 = vrot.lane.b32.xlu0 %v234, 97
      %v860 = vpop.permute.xlu0 %859
      %861 = vrot.lane.b32.xlu0 %v227, 97
      %v862 = vpop.permute.xlu0 %861
      %863 = vrot.lane.b32.xlu0 %v235, 97
      %v864 = vpop.permute.xlu0 %863
      %865 = vrot.lane.b32.xlu0 %v228, 97
      %v866 = vpop.permute.xlu0 %865
      %867 = vrot.lane.b32.xlu0 %v236, 97
      %v868 = vpop.permute.xlu0 %867
      %vm869 = vcmp.lt.s32.totalorder %v258, 97
      %v870 = vsel %vm869, %v866, %v868
      %v871 = vsel %vm869, %v864, %v866
      %v872 = vsel %vm869, %v862, %v864
      %v873 = vsel %vm869, %v860, %v862
      %v874 = vsel %vm869, %v858, %v860
      %v875 = vsel %vm869, %v856, %v858
      %v876 = vsel %vm869, %v854, %v856
      %v877 = vsel %vm869, %v868, %v854
      %s878 = scalar_lea.vmem %s4, 6
      %v879 = vld [vmem:[%s878] ss:$8 sm:$0xf]
      %v880 = vld [vmem:[%s878] ss:$8 sm:$0xf0]
      %v881 = vor.u32 %v879, %v880
      %v883 = vlaneseq
      %v884 = vshrl.u32 %v883, 7
      %v885 = vsub.s32 0, %v884
      %v886 = vrot.slane %v881, %v885
      %v887 = vlaneseq
      %v888 = vshrl.u32 %v887, 7
      %v889 = vsub.s32 1, %v888
      %v890 = vrot.slane %v881, %v889
      %v891 = vlaneseq
      %v892 = vshrl.u32 %v891, 7
      %v893 = vsub.s32 2, %v892
      %v894 = vrot.slane %v881, %v893
      %v895 = vlaneseq
      %v896 = vshrl.u32 %v895, 7
      %v897 = vsub.s32 3, %v896
      %v898 = vrot.slane %v881, %v897
      %v899 = vlaneseq
      %v900 = vshrl.u32 %v899, 7
      %v901 = vsub.s32 4, %v900
      %v902 = vrot.slane %v881, %v901
      %v903 = vlaneseq
      %v904 = vshrl.u32 %v903, 7
      %v905 = vsub.s32 5, %v904
      %v906 = vrot.slane %v881, %v905
      %v907 = vlaneseq
      %v908 = vshrl.u32 %v907, 7
      %v909 = vsub.s32 6, %v908
      %v910 = vrot.slane %v881, %v909
      %v911 = vlaneseq
      %v912 = vshrl.u32 %v911, 7
      %v913 = vsub.s32 7, %v912
      %v914 = vrot.slane %v881, %v913
      %v923 = vmul.f32 %v876, %v886
      %v924 = vmul.f32 %v875, %v890
      %v925 = vmul.f32 %v874, %v894
      %v926 = vmul.f32 %v873, %v898
      %v927 = vmul.f32 %v872, %v902
      %v928 = vmul.f32 %v871, %v906
      %v929 = vmul.f32 %v870, %v910
      %v930 = vmul.f32 %v877, %v914
      %v939 = vrot.slane %v923, 6
      %v940 = vrot.slane %v924, 6
      %v941 = vrot.slane %v925, 6
      %v942 = vrot.slane %v926, 6
      %v943 = vrot.slane %v927, 6
      %v944 = vrot.slane %v928, 6
      %v945 = vrot.slane %v929, 6
      %v946 = vrot.slane %v930, 6
      %955 = vst [vmem:[#allocation2 + $0x80] sm:$0x1c] %v939
      %956 = vst [vmem:[#allocation2 + $0x88] sm:$0x1c] %v940
      %957 = vst [vmem:[#allocation2 + $0x90] sm:$0x1c] %v941
      %958 = vst [vmem:[#allocation2 + $0x98] sm:$0x1c] %v942
      %959 = vst [vmem:[#allocation2 + $0xa0] sm:$0x1c] %v943
      %960 = vst [vmem:[#allocation2 + $0xa8] sm:$0x1c] %v944
      %961 = vst [vmem:[#allocation2 + $0xb0] sm:$0x1c] %v945
      %962 = vst [vmem:[#allocation2 + $0xb8] sm:$0x1c] %v946
      %963 = vrot.lane.b32.xlu0 %v225, 96
      %v964 = vpop.permute.xlu0 %963
      %965 = vrot.lane.b32.xlu0 %v233, 96
      %v966 = vpop.permute.xlu0 %965
      %967 = vrot.lane.b32.xlu0 %v226, 96
      %v968 = vpop.permute.xlu0 %967
      %969 = vrot.lane.b32.xlu0 %v234, 96
      %v970 = vpop.permute.xlu0 %969
      %971 = vrot.lane.b32.xlu0 %v227, 96
      %v972 = vpop.permute.xlu0 %971
      %973 = vrot.lane.b32.xlu0 %v235, 96
      %v974 = vpop.permute.xlu0 %973
      %975 = vrot.lane.b32.xlu0 %v228, 96
      %v976 = vpop.permute.xlu0 %975
      %977 = vrot.lane.b32.xlu0 %v236, 96
      %v978 = vpop.permute.xlu0 %977
      %vm979 = vcmp.lt.s32.totalorder %v258, 96
      %v980 = vsel %vm979, %v976, %v978
      %v981 = vsel %vm979, %v974, %v976
      %v982 = vsel %vm979, %v972, %v974
      %v983 = vsel %vm979, %v970, %v972
      %v984 = vsel %vm979, %v968, %v970
      %v985 = vsel %vm979, %v966, %v968
      %v986 = vsel %vm979, %v964, %v966
      %v987 = vsel %vm979, %v978, %v964
      %s988 = scalar_lea.vmem %s4, 7
      %v989 = vld [vmem:[%s988] ss:$8 sm:$0xf]
      %v990 = vld [vmem:[%s988] ss:$8 sm:$0xf0]
      %v991 = vor.u32 %v989, %v990
      %v993 = vlaneseq
      %v994 = vshrl.u32 %v993, 7
      %v995 = vsub.s32 0, %v994
      %v996 = vrot.slane %v991, %v995
      %v997 = vlaneseq
      %v998 = vshrl.u32 %v997, 7
      %v999 = vsub.s32 1, %v998
      %v1000 = vrot.slane %v991, %v999
      %v1001 = vlaneseq
      %v1002 = vshrl.u32 %v1001, 7
      %v1003 = vsub.s32 2, %v1002
      %v1004 = vrot.slane %v991, %v1003
      %v1005 = vlaneseq
      %v1006 = vshrl.u32 %v1005, 7
      %v1007 = vsub.s32 3, %v1006
      %v1008 = vrot.slane %v991, %v1007
      %v1009 = vlaneseq
      %v1010 = vshrl.u32 %v1009, 7
      %v1011 = vsub.s32 4, %v1010
      %v1012 = vrot.slane %v991, %v1011
      %v1013 = vlaneseq
      %v1014 = vshrl.u32 %v1013, 7
      %v1015 = vsub.s32 5, %v1014
      %v1016 = vrot.slane %v991, %v1015
      %v1017 = vlaneseq
      %v1018 = vshrl.u32 %v1017, 7
      %v1019 = vsub.s32 6, %v1018
      %v1020 = vrot.slane %v991, %v1019
      %v1021 = vlaneseq
      %v1022 = vshrl.u32 %v1021, 7
      %v1023 = vsub.s32 7, %v1022
      %v1024 = vrot.slane %v991, %v1023
      %v1033 = vmul.f32 %v986, %v996
      %v1034 = vmul.f32 %v985, %v1000
      %v1035 = vmul.f32 %v984, %v1004
      %v1036 = vmul.f32 %v983, %v1008
      %v1037 = vmul.f32 %v982, %v1012
      %v1038 = vmul.f32 %v981, %v1016
      %v1039 = vmul.f32 %v980, %v1020
      %v1040 = vmul.f32 %v987, %v1024
      %v1049 = vrot.slane %v1033, 3
      %v1050 = vrot.slane %v1034, 3
      %v1051 = vrot.slane %v1035, 3
      %v1052 = vrot.slane %v1036, 3
      %v1053 = vrot.slane %v1037, 3
      %v1054 = vrot.slane %v1038, 3
      %v1055 = vrot.slane %v1039, 3
      %v1056 = vrot.slane %v1040, 3
      %1065 = vst [vmem:[#allocation2 + $0x80] sm:$0xe0] %v1049
      %1066 = vst [vmem:[#allocation2 + $0x88] sm:$0xe0] %v1050
      %1067 = vst [vmem:[#allocation2 + $0x90] sm:$0xe0] %v1051
      %1068 = vst [vmem:[#allocation2 + $0x98] sm:$0xe0] %v1052
      %1069 = vst [vmem:[#allocation2 + $0xa0] sm:$0xe0] %v1053
      %1070 = vst [vmem:[#allocation2 + $0xa8] sm:$0xe0] %v1054
      %1071 = vst [vmem:[#allocation2 + $0xb0] sm:$0xe0] %v1055
      %1072 = vst [vmem:[#allocation2 + $0xb8] sm:$0xe0] %v1056
      %1073 = vrot.lane.b32.xlu0 %v225, 95
      %v1074 = vpop.permute.xlu0 %1073
      %1075 = vrot.lane.b32.xlu0 %v233, 95
      %v1076 = vpop.permute.xlu0 %1075
      %1077 = vrot.lane.b32.xlu0 %v226, 95
      %v1078 = vpop.permute.xlu0 %1077
      %1079 = vrot.lane.b32.xlu0 %v234, 95
      %v1080 = vpop.permute.xlu0 %1079
      %1081 = vrot.lane.b32.xlu0 %v227, 95
      %v1082 = vpop.permute.xlu0 %1081
      %1083 = vrot.lane.b32.xlu0 %v235, 95
      %v1084 = vpop.permute.xlu0 %1083
      %1085 = vrot.lane.b32.xlu0 %v228, 95
      %v1086 = vpop.permute.xlu0 %1085
      %1087 = vrot.lane.b32.xlu0 %v236, 95
      %v1088 = vpop.permute.xlu0 %1087
      %vm1089 = vcmp.lt.s32.totalorder %v258, 95
      %v1090 = vsel %vm1089, %v1086, %v1088
      %v1091 = vsel %vm1089, %v1084, %v1086
      %v1092 = vsel %vm1089, %v1082, %v1084
      %v1093 = vsel %vm1089, %v1080, %v1082
      %v1094 = vsel %vm1089, %v1078, %v1080
      %v1095 = vsel %vm1089, %v1076, %v1078
      %v1096 = vsel %vm1089, %v1074, %v1076
      %v1097 = vsel %vm1089, %v1088, %v1074
      %s1098 = scalar_lea.vmem %s4, 64
      %v1099 = vld [vmem:[%s1098] ss:$8 sm:$0xf]
      %v1100 = vld [vmem:[%s1098] ss:$8 sm:$0xf0]
      %v1101 = vor.u32 %v1099, %v1100
      %v1103 = vlaneseq
      %v1104 = vshrl.u32 %v1103, 7
      %v1105 = vsub.s32 0, %v1104
      %v1106 = vrot.slane %v1101, %v1105
      %v1107 = vlaneseq
      %v1108 = vshrl.u32 %v1107, 7
      %v1109 = vsub.s32 1, %v1108
      %v1110 = vrot.slane %v1101, %v1109
      %v1111 = vlaneseq
      %v1112 = vshrl.u32 %v1111, 7
      %v1113 = vsub.s32 2, %v1112
      %v1114 = vrot.slane %v1101, %v1113
      %v1115 = vlaneseq
      %v1116 = vshrl.u32 %v1115, 7
      %v1117 = vsub.s32 3, %v1116
      %v1118 = vrot.slane %v1101, %v1117
      %v1119 = vlaneseq
      %v1120 = vshrl.u32 %v1119, 7
      %v1121 = vsub.s32 4, %v1120
      %v1122 = vrot.slane %v1101, %v1121
      %v1123 = vlaneseq
      %v1124 = vshrl.u32 %v1123, 7
      %v1125 = vsub.s32 5, %v1124
      %v1126 = vrot.slane %v1101, %v1125
      %v1127 = vlaneseq
      %v1128 = vshrl.u32 %v1127, 7
      %v1129 = vsub.s32 6, %v1128
      %v1130 = vrot.slane %v1101, %v1129
      %v1131 = vlaneseq
      %v1132 = vshrl.u32 %v1131, 7
      %v1133 = vsub.s32 7, %v1132
      %v1134 = vrot.slane %v1101, %v1133
      %v1143 = vmul.f32 %v1096, %v1106
      %v1144 = vmul.f32 %v1095, %v1110
      %v1145 = vmul.f32 %v1094, %v1114
      %v1146 = vmul.f32 %v1093, %v1118
      %v1147 = vmul.f32 %v1092, %v1122
      %v1148 = vmul.f32 %v1091, %v1126
      %v1149 = vmul.f32 %v1090, %v1130
      %v1150 = vmul.f32 %v1097, %v1134
      %1151 = vst [vmem:[#allocation2 + $0xc0] sm:$0x7] %v1143
      %1152 = vst [vmem:[#allocation2 + $0xc8] sm:$0x7] %v1144
      %1153 = vst [vmem:[#allocation2 + $0xd0] sm:$0x7] %v1145
      %1154 = vst [vmem:[#allocation2 + $0xd8] sm:$0x7] %v1146
      %1155 = vst [vmem:[#allocation2 + $0xe0] sm:$0x7] %v1147
      %1156 = vst [vmem:[#allocation2 + $0xe8] sm:$0x7] %v1148
      %1157 = vst [vmem:[#allocation2 + $0xf0] sm:$0x7] %v1149
      %1158 = vst [vmem:[#allocation2 + $0xf8] sm:$0x7] %v1150
      %v1159 = vld [vmem:[%s1] sm:$0xff]
      %v1160 = vld [vmem:[%s1 + $0x8] sm:$0xf]
      %v1161 = vld [vmem:[#allocation2] sm:$0xff]
      %v1162 = vld [vmem:[#allocation2 + $0x8] sm:$0xff]
      %v1163 = vld [vmem:[#allocation2 + $0x10] sm:$0xff]
      %v1164 = vld [vmem:[#allocation2 + $0x18] sm:$0xff]
      %v1165 = vld [vmem:[#allocation2 + $0x20] sm:$0xff]
      %v1166 = vld [vmem:[#allocation2 + $0x28] sm:$0xff]
      %v1167 = vld [vmem:[#allocation2 + $0x30] sm:$0xff]
      %v1168 = vld [vmem:[#allocation2 + $0x38] sm:$0xff]
      %v1169 = vld [vmem:[#allocation2 + $0x40] sm:$0xff]
      %v1170 = vld [vmem:[#allocation2 + $0x48] sm:$0xff]
      %v1171 = vld [vmem:[#allocation2 + $0x50] sm:$0xff]
      %v1172 = vld [vmem:[#allocation2 + $0x58] sm:$0xff]
      %v1173 = vld [vmem:[#allocation2 + $0x60] sm:$0xff]
      %v1174 = vld [vmem:[#allocation2 + $0x68] sm:$0xff]
      %v1175 = vld [vmem:[#allocation2 + $0x70] sm:$0xff]
      %v1176 = vld [vmem:[#allocation2 + $0x78] sm:$0xff]
      %v1177 = vld [vmem:[#allocation2 + $0x80] sm:$0xff]
      %v1178 = vld [vmem:[#allocation2 + $0x88] sm:$0xff]
      %v1179 = vld [vmem:[#allocation2 + $0x90] sm:$0xff]
      %v1180 = vld [vmem:[#allocation2 + $0x98] sm:$0xff]
      %v1181 = vld [vmem:[#allocation2 + $0xa0] sm:$0xff]
      %v1182 = vld [vmem:[#allocation2 + $0xa8] sm:$0xff]
      %v1183 = vld [vmem:[#allocation2 + $0xb0] sm:$0xff]
      %v1184 = vld [vmem:[#allocation2 + $0xb8] sm:$0xff]
      %v1185 = vld [vmem:[#allocation2 + $0xc0] sm:$0x7]
      %v1186 = vld [vmem:[#allocation2 + $0xc8] sm:$0x7]
      %v1187 = vld [vmem:[#allocation2 + $0xd0] sm:$0x7]
      %v1188 = vld [vmem:[#allocation2 + $0xd8] sm:$0x7]
      %v1189 = vld [vmem:[#allocation2 + $0xe0] sm:$0x7]
      %v1190 = vld [vmem:[#allocation2 + $0xe8] sm:$0x7]
      %v1191 = vld [vmem:[#allocation2 + $0xf0] sm:$0x7]
      %v1192 = vld [vmem:[#allocation2 + $0xf8] sm:$0x7]
      %vm1193 = vcmask 220160
      %v1195 = vsel %vm1193, %v1159, 0
      %v1198 = vsel %vm1193, %v1160, 0
      %vm1200 = vcmask 1042432
      %v1202 = vsel %vm1200, %v1185, 0
      %v1205 = vsel %vm1200, %v1186, 0
      %v1208 = vsel %vm1200, %v1187, 0
      %v1211 = vsel %vm1200, %v1188, 0
      %v1214 = vsel %vm1200, %v1189, 0
      %v1217 = vsel %vm1200, %v1190, 0
      %v1220 = vsel %vm1200, %v1191, 0
      %v1223 = vsel %vm1200, %v1192, 0
      %1225 = vmatprep.subr.mxu0 %v1162
      %1226 = vmatpush1.msra.mxu0 %v1161
      %1227 = vmatprep.subr.mxu0 %v1170
      %1228 = vmatpush1.msra.mxu0 %v1169
      %1229 = vmatprep.subr.mxu0 %v1178
      %1230 = vmatpush1.msra.mxu0 %v1177
      %1231 = vmatprep.subr.mxu0 %v1205
      %1232 = vmatpush1.msra.mxu0 %v1202
      %1233 = vmatprep.subr.mxu0 0.0
      %1234 = vmatpush1.msra.mxu0 0.0
      %1235 = vmatprep.subr.mxu0 0.0
      %1236 = vmatpush1.msra.mxu0 0.0
      %1237 = vmatprep.subr.mxu0 0.0
      %1238 = vmatpush1.msra.mxu0 0.0
      %1239 = vmatprep.subr.mxu0 0.0
      %1240 = vmatpush1.msra.mxu0 0.0
      %1241 = vmatprep.subr.mxu0 0.0
      %1242 = vmatpush1.msra.mxu0 0.0
      %1243 = vmatprep.subr.mxu0 0.0
      %1244 = vmatpush1.msra.mxu0 0.0
      %1245 = vmatprep.subr.mxu0 0.0
      %1246 = vmatpush1.msra.mxu0 0.0
      %1247 = vmatprep.subr.mxu0 0.0
      %1248 = vmatpush1.msra.mxu0 0.0
      %1249 = vmatprep.subr.mxu0 0.0
      %1250 = vmatpush1.msra.mxu0 0.0
      %1251 = vmatprep.subr.mxu0 0.0
      %1252 = vmatpush1.msra.mxu0 0.0
      %1253 = vmatprep.subr.mxu0 0.0
      %1254 = vmatpush1.msra.mxu0 0.0
      %1255 = vmatprep.subr.mxu0 0.0
      %1256 = vmatpush1.msra.mxu0 0.0
      %1257 = vmatprep.subr.mxu0 0.0
      %1258 = vmatpush1.msra.mxu0 0.0
      %1259 = vmatprep.subr.mxu0 0.0
      %1260 = vmatpush1.msra.mxu0 0.0
      %1261 = vmatprep.subr.mxu0 0.0
      %1262 = vmatpush1.msra.mxu0 0.0
      %1263 = vmatprep.subr.mxu0 0.0
      %1264 = vmatpush1.msra.mxu0 0.0
      %1265 = vmatprep.subr.mxu0 0.0
      %1266 = vmatpush1.msra.mxu0 0.0
      %1267 = vmatprep.subr.mxu0 0.0
      %1268 = vmatpush1.msra.mxu0 0.0
      %1269 = vmatprep.subr.mxu0 0.0
      %1270 = vmatpush1.msra.mxu0 0.0
      %1271 = vmatprep.subr.mxu0 0.0
      %1272 = vmatpush1.msra.mxu0 0.0
      %1273 = vmatprep.subr.mxu0 0.0
      %1274 = vmatpush1.msra.mxu0 0.0
      %1275 = vmatprep.subr.mxu0 0.0
      %1276 = vmatpush1.msra.mxu0 0.0
      %1277 = vmatprep.subr.mxu0 0.0
      %1278 = vmatpush1.msra.mxu0 0.0
      %1279 = vmatprep.subr.mxu0 0.0
      %1280 = vmatpush1.msra.mxu0 0.0
      %1281 = vmatprep.subr.mxu0 0.0
      %1282 = vmatpush1.msra.mxu0 0.0
      %1283 = vmatprep.subr.mxu0 0.0
      %1284 = vmatpush1.msra.mxu0 0.0
      %1285 = vmatprep.subr.mxu0 0.0
      %1286 = vmatpush1.msra.mxu0 0.0
      %1287 = vmatprep.subr.mxu0 0.0
      %1288 = vmatpush1.msra.mxu0 0.0
      %1289 = vmatprep.mubr.f32.mxu0 0.0
      %1290 = vmatmul.mubr.f32.gmra.mrb[0].mxu0 %v1195
      %v1291 = vpop.f32.mrb[0].mxu0
      %v1292 = vadd.f32 0.0, %v1291
      %v1293 = vpop.f32.mrb[0].mxu0
      %v1294 = vadd.f32 0.0, %v1293
      %1295 = vmatprep.mubr.f32.mxu0 0.0
      %1296 = vmatmul.mubr.f32.gmra.mrb[0].mxu0 %v1198
      %v1297 = vpop.f32.mrb[0].mxu0
      %v1298 = vadd.f32 0.0, %v1297
      %v1299 = vpop.f32.mrb[0].mxu0
      %v1300 = vadd.f32 0.0, %v1299
      %1301 = vdwg.mxu0
      %1302 = vmatprep.subr.mxu0 %v1164
      %1303 = vmatpush1.msra.mxu0 %v1163
      %1304 = vmatprep.subr.mxu0 %v1172
      %1305 = vmatpush1.msra.mxu0 %v1171
      %1306 = vmatprep.subr.mxu0 %v1180
      %1307 = vmatpush1.msra.mxu0 %v1179
      %1308 = vmatprep.subr.mxu0 %v1211
      %1309 = vmatpush1.msra.mxu0 %v1208
      %1310 = vmatprep.subr.mxu0 0.0
      %1311 = vmatpush1.msra.mxu0 0.0
      %1312 = vmatprep.subr.mxu0 0.0
      %1313 = vmatpush1.msra.mxu0 0.0
      %1314 = vmatprep.subr.mxu0 0.0
      %1315 = vmatpush1.msra.mxu0 0.0
      %1316 = vmatprep.subr.mxu0 0.0
      %1317 = vmatpush1.msra.mxu0 0.0
      %1318 = vmatprep.subr.mxu0 0.0
      %1319 = vmatpush1.msra.mxu0 0.0
      %1320 = vmatprep.subr.mxu0 0.0
      %1321 = vmatpush1.msra.mxu0 0.0
      %1322 = vmatprep.subr.mxu0 0.0
      %1323 = vmatpush1.msra.mxu0 0.0
      %1324 = vmatprep.subr.mxu0 0.0
      %1325 = vmatpush1.msra.mxu0 0.0
      %1326 = vmatprep.subr.mxu0 0.0
      %1327 = vmatpush1.msra.mxu0 0.0
      %1328 = vmatprep.subr.mxu0 0.0
      %1329 = vmatpush1.msra.mxu0 0.0
      %1330 = vmatprep.subr.mxu0 0.0
      %1331 = vmatpush1.msra.mxu0 0.0
      %1332 = vmatprep.subr.mxu0 0.0
      %1333 = vmatpush1.msra.mxu0 0.0
      %1334 = vmatprep.subr.mxu0 0.0
      %1335 = vmatpush1.msra.mxu0 0.0
      %1336 = vmatprep.subr.mxu0 0.0
      %1337 = vmatpush1.msra.mxu0 0.0
      %1338 = vmatprep.subr.mxu0 0.0
      %1339 = vmatpush1.msra.mxu0 0.0
      %1340 = vmatprep.subr.mxu0 0.0
      %1341 = vmatpush1.msra.mxu0 0.0
      %1342 = vmatprep.subr.mxu0 0.0
      %1343 = vmatpush1.msra.mxu0 0.0
      %1344 = vmatprep.subr.mxu0 0.0
      %1345 = vmatpush1.msra.mxu0 0.0
      %1346 = vmatprep.subr.mxu0 0.0
      %1347 = vmatpush1.msra.mxu0 0.0
      %1348 = vmatprep.subr.mxu0 0.0
      %1349 = vmatpush1.msra.mxu0 0.0
      %1350 = vmatprep.subr.mxu0 0.0
      %1351 = vmatpush1.msra.mxu0 0.0
      %1352 = vmatprep.subr.mxu0 0.0
      %1353 = vmatpush1.msra.mxu0 0.0
      %1354 = vmatprep.subr.mxu0 0.0
      %1355 = vmatpush1.msra.mxu0 0.0
      %1356 = vmatprep.subr.mxu0 0.0
      %1357 = vmatpush1.msra.mxu0 0.0
      %1358 = vmatprep.subr.mxu0 0.0
      %1359 = vmatpush1.msra.mxu0 0.0
      %1360 = vmatprep.subr.mxu0 0.0
      %1361 = vmatpush1.msra.mxu0 0.0
      %1362 = vmatprep.subr.mxu0 0.0
      %1363 = vmatpush1.msra.mxu0 0.0
      %1364 = vmatprep.subr.mxu0 0.0
      %1365 = vmatpush1.msra.mxu0 0.0
      %1366 = vmatprep.mubr.f32.mxu0 0.0
      %1367 = vmatmul.mubr.f32.gmra.mrb[0].mxu0 %v1195
      %v1368 = vpop.f32.mrb[0].mxu0
      %v1369 = vadd.f32 0.0, %v1368
      %v1370 = vpop.f32.mrb[0].mxu0
      %v1371 = vadd.f32 0.0, %v1370
      %1372 = vmatprep.mubr.f32.mxu0 0.0
      %1373 = vmatmul.mubr.f32.gmra.mrb[0].mxu0 %v1198
      %v1374 = vpop.f32.mrb[0].mxu0
      %v1375 = vadd.f32 0.0, %v1374
      %v1376 = vpop.f32.mrb[0].mxu0
      %v1377 = vadd.f32 0.0, %v1376
      %1378 = vdwg.mxu0
      %1379 = vmatprep.subr.mxu0 %v1166
      %1380 = vmatpush1.msra.mxu0 %v1165
      %1381 = vmatprep.subr.mxu0 %v1174
      %1382 = vmatpush1.msra.mxu0 %v1173
      %1383 = vmatprep.subr.mxu0 %v1182
      %1384 = vmatpush1.msra.mxu0 %v1181
      %1385 = vmatprep.subr.mxu0 %v1217
      %1386 = vmatpush1.msra.mxu0 %v1214
      %1387 = vmatprep.subr.mxu0 0.0
      %1388 = vmatpush1.msra.mxu0 0.0
      %1389 = vmatprep.subr.mxu0 0.0
      %1390 = vmatpush1.msra.mxu0 0.0
      %1391 = vmatprep.subr.mxu0 0.0
      %1392 = vmatpush1.msra.mxu0 0.0
      %1393 = vmatprep.subr.mxu0 0.0
      %1394 = vmatpush1.msra.mxu0 0.0
      %1395 = vmatprep.subr.mxu0 0.0
      %1396 = vmatpush1.msra.mxu0 0.0
      %1397 = vmatprep.subr.mxu0 0.0
      %1398 = vmatpush1.msra.mxu0 0.0
      %1399 = vmatprep.subr.mxu0 0.0
      %1400 = vmatpush1.msra.mxu0 0.0
      %1401 = vmatprep.subr.mxu0 0.0
      %1402 = vmatpush1.msra.mxu0 0.0
      %1403 = vmatprep.subr.mxu0 0.0
      %1404 = vmatpush1.msra.mxu0 0.0
      %1405 = vmatprep.subr.mxu0 0.0
      %1406 = vmatpush1.msra.mxu0 0.0
      %1407 = vmatprep.subr.mxu0 0.0
      %1408 = vmatpush1.msra.mxu0 0.0
      %1409 = vmatprep.subr.mxu0 0.0
      %1410 = vmatpush1.msra.mxu0 0.0
      %1411 = vmatprep.subr.mxu0 0.0
      %1412 = vmatpush1.msra.mxu0 0.0
      %1413 = vmatprep.subr.mxu0 0.0
      %1414 = vmatpush1.msra.mxu0 0.0
      %1415 = vmatprep.subr.mxu0 0.0
      %1416 = vmatpush1.msra.mxu0 0.0
      %1417 = vmatprep.subr.mxu0 0.0
      %1418 = vmatpush1.msra.mxu0 0.0
      %1419 = vmatprep.subr.mxu0 0.0
      %1420 = vmatpush1.msra.mxu0 0.0
      %1421 = vmatprep.subr.mxu0 0.0
      %1422 = vmatpush1.msra.mxu0 0.0
      %1423 = vmatprep.subr.mxu0 0.0
      %1424 = vmatpush1.msra.mxu0 0.0
      %1425 = vmatprep.subr.mxu0 0.0
      %1426 = vmatpush1.msra.mxu0 0.0
      %1427 = vmatprep.subr.mxu0 0.0
      %1428 = vmatpush1.msra.mxu0 0.0
      %1429 = vmatprep.subr.mxu0 0.0
      %1430 = vmatpush1.msra.mxu0 0.0
      %1431 = vmatprep.subr.mxu0 0.0
      %1432 = vmatpush1.msra.mxu0 0.0
      %1433 = vmatprep.subr.mxu0 0.0
      %1434 = vmatpush1.msra.mxu0 0.0
      %1435 = vmatprep.subr.mxu0 0.0
      %1436 = vmatpush1.msra.mxu0 0.0
      %1437 = vmatprep.subr.mxu0 0.0
      %1438 = vmatpush1.msra.mxu0 0.0
      %1439 = vmatprep.subr.mxu0 0.0
      %1440 = vmatpush1.msra.mxu0 0.0
      %1441 = vmatprep.subr.mxu0 0.0
      %1442 = vmatpush1.msra.mxu0 0.0
      %1443 = vmatprep.mubr.f32.mxu0 0.0
      %1444 = vmatmul.mubr.f32.gmra.mrb[0].mxu0 %v1195
      %v1445 = vpop.f32.mrb[0].mxu0
      %v1446 = vadd.f32 0.0, %v1445
      %v1447 = vpop.f32.mrb[0].mxu0
      %v1448 = vadd.f32 0.0, %v1447
      %1449 = vmatprep.mubr.f32.mxu0 0.0
      %1450 = vmatmul.mubr.f32.gmra.mrb[0].mxu0 %v1198
      %v1451 = vpop.f32.mrb[0].mxu0
      %v1452 = vadd.f32 0.0, %v1451
      %v1453 = vpop.f32.mrb[0].mxu0
      %v1454 = vadd.f32 0.0, %v1453
      %1455 = vdwg.mxu0
      %1456 = vmatprep.subr.mxu0 %v1168
      %1457 = vmatpush1.msra.mxu0 %v1167
      %1458 = vmatprep.subr.mxu0 %v1176
      %1459 = vmatpush1.msra.mxu0 %v1175
      %1460 = vmatprep.subr.mxu0 %v1184
      %1461 = vmatpush1.msra.mxu0 %v1183
      %1462 = vmatprep.subr.mxu0 %v1223
      %1463 = vmatpush1.msra.mxu0 %v1220
      %1464 = vmatprep.subr.mxu0 0.0
      %1465 = vmatpush1.msra.mxu0 0.0
      %1466 = vmatprep.subr.mxu0 0.0
      %1467 = vmatpush1.msra.mxu0 0.0
      %1468 = vmatprep.subr.mxu0 0.0
      %1469 = vmatpush1.msra.mxu0 0.0
      %1470 = vmatprep.subr.mxu0 0.0
      %1471 = vmatpush1.msra.mxu0 0.0
      %1472 = vmatprep.subr.mxu0 0.0
      %1473 = vmatpush1.msra.mxu0 0.0
      %1474 = vmatprep.subr.mxu0 0.0
      %1475 = vmatpush1.msra.mxu0 0.0
      %1476 = vmatprep.subr.mxu0 0.0
      %1477 = vmatpush1.msra.mxu0 0.0
      %1478 = vmatprep.subr.mxu0 0.0
      %1479 = vmatpush1.msra.mxu0 0.0
      %1480 = vmatprep.subr.mxu0 0.0
      %1481 = vmatpush1.msra.mxu0 0.0
      %1482 = vmatprep.subr.mxu0 0.0
      %1483 = vmatpush1.msra.mxu0 0.0
      %1484 = vmatprep.subr.mxu0 0.0
      %1485 = vmatpush1.msra.mxu0 0.0
      %1486 = vmatprep.subr.mxu0 0.0
      %1487 = vmatpush1.msra.mxu0 0.0
      %1488 = vmatprep.subr.mxu0 0.0
      %1489 = vmatpush1.msra.mxu0 0.0
      %1490 = vmatprep.subr.mxu0 0.0
      %1491 = vmatpush1.msra.mxu0 0.0
      %1492 = vmatprep.subr.mxu0 0.0
      %1493 = vmatpush1.msra.mxu0 0.0
      %1494 = vmatprep.subr.mxu0 0.0
      %1495 = vmatpush1.msra.mxu0 0.0
      %1496 = vmatprep.subr.mxu0 0.0
      %1497 = vmatpush1.msra.mxu0 0.0
      %1498 = vmatprep.subr.mxu0 0.0
      %1499 = vmatpush1.msra.mxu0 0.0
      %1500 = vmatprep.subr.mxu0 0.0
      %1501 = vmatpush1.msra.mxu0 0.0
      %1502 = vmatprep.subr.mxu0 0.0
      %1503 = vmatpush1.msra.mxu0 0.0
      %1504 = vmatprep.subr.mxu0 0.0
      %1505 = vmatpush1.msra.mxu0 0.0
      %1506 = vmatprep.subr.mxu0 0.0
      %1507 = vmatpush1.msra.mxu0 0.0
      %1508 = vmatprep.subr.mxu0 0.0
      %1509 = vmatpush1.msra.mxu0 0.0
      %1510 = vmatprep.subr.mxu0 0.0
      %1511 = vmatpush1.msra.mxu0 0.0
      %1512 = vmatprep.subr.mxu0 0.0
      %1513 = vmatpush1.msra.mxu0 0.0
      %1514 = vmatprep.subr.mxu0 0.0
      %1515 = vmatpush1.msra.mxu0 0.0
      %1516 = vmatprep.subr.mxu0 0.0
      %1517 = vmatpush1.msra.mxu0 0.0
      %1518 = vmatprep.subr.mxu0 0.0
      %1519 = vmatpush1.msra.mxu0 0.0
      %1520 = vmatprep.mubr.f32.mxu0 0.0
      %1521 = vmatmul.mubr.f32.gmra.mrb[0].mxu0 %v1195
      %v1522 = vpop.f32.mrb[0].mxu0
      %v1523 = vadd.f32 0.0, %v1522
      %v1524 = vpop.f32.mrb[0].mxu0
      %v1525 = vadd.f32 0.0, %v1524
      %1526 = vmatprep.mubr.f32.mxu0 0.0
      %1527 = vmatmul.mubr.f32.gmra.mrb[0].mxu0 %v1198
      %v1528 = vpop.f32.mrb[0].mxu0
      %v1529 = vadd.f32 0.0, %v1528
      %v1530 = vpop.f32.mrb[0].mxu0
      %v1531 = vadd.f32 0.0, %v1530
      %1532 = vdwg.mxu0
      %v1533 = vld [vmem:[%s2] sm:$0xff]
      %v1534 = vld [vmem:[%s2 + $0x8] sm:$0xf]
      %1536 = vset.pattern.permute.xlu0 0
      %1537 = vperm.xlu0 %1536, %v1533
      %v1538 = vpop.permute.xlu0 %1537
      %1541 = vset.pattern.permute.xlu0 0
      %1542 = vperm.xlu0 %1541, %v1534
      %v1543 = vpop.permute.xlu0 %1542
      %v1545 = vmul.f32 %v1292, %v1538
      %v1546 = vmul.f32 %v1294, %v1538
      %v1547 = vmul.f32 %v1369, %v1538
      %v1548 = vmul.f32 %v1371, %v1538
      %v1549 = vmul.f32 %v1446, %v1538
      %v1550 = vmul.f32 %v1448, %v1538
      %v1551 = vmul.f32 %v1523, %v1538
      %v1552 = vmul.f32 %v1525, %v1538
      %v1553 = vmul.f32 %v1298, %v1543
      %v1554 = vmul.f32 %v1300, %v1543
      %v1555 = vmul.f32 %v1375, %v1543
      %v1556 = vmul.f32 %v1377, %v1543
      %v1557 = vmul.f32 %v1452, %v1543
      %v1558 = vmul.f32 %v1454, %v1543
      %v1559 = vmul.f32 %v1529, %v1543
      %v1560 = vmul.f32 %v1531, %v1543
      %v1561 = vld [vmem:[%s3] sm:$0xff]
      %v1562 = vld [vmem:[%s3 + $0x8] sm:$0xf]
      %1564 = vset.pattern.permute.xlu0 0
      %1565 = vperm.xlu0 %1564, %v1561
      %v1566 = vpop.permute.xlu0 %1565
      %1569 = vset.pattern.permute.xlu0 0
      %1570 = vperm.xlu0 %1569, %v1562
      %v1571 = vpop.permute.xlu0 %1570
      %v1573 = vadd.f32 %v1545, %v1566
      %v1574 = vadd.f32 %v1546, %v1566
      %v1575 = vadd.f32 %v1547, %v1566
      %v1576 = vadd.f32 %v1548, %v1566
      %v1577 = vadd.f32 %v1549, %v1566
      %v1578 = vadd.f32 %v1550, %v1566
      %v1579 = vadd.f32 %v1551, %v1566
      %v1580 = vadd.f32 %v1552, %v1566
      %v1581 = vadd.f32 %v1553, %v1571
      %v1582 = vadd.f32 %v1554, %v1571
      %v1583 = vadd.f32 %v1555, %v1571
      %v1584 = vadd.f32 %v1556, %v1571
      %v1585 = vadd.f32 %v1557, %v1571
      %v1586 = vadd.f32 %v1558, %v1571
      %v1587 = vadd.f32 %v1559, %v1571
      %v1588 = vadd.f32 %v1560, %v1571
      %v1589 = vmax.f32 %v1573, 0.0
      %v1590 = vmax.f32 %v1574, 0.0
      %v1591 = vmax.f32 %v1575, 0.0
      %v1592 = vmax.f32 %v1576, 0.0
      %v1593 = vmax.f32 %v1577, 0.0
      %v1594 = vmax.f32 %v1578, 0.0
      %v1595 = vmax.f32 %v1579, 0.0
      %v1596 = vmax.f32 %v1580, 0.0
      %v1597 = vmax.f32 %v1581, 0.0
      %v1598 = vmax.f32 %v1582, 0.0
      %v1599 = vmax.f32 %v1583, 0.0
      %v1600 = vmax.f32 %v1584, 0.0
      %v1601 = vmax.f32 %v1585, 0.0
      %v1602 = vmax.f32 %v1586, 0.0
      %v1603 = vmax.f32 %v1587, 0.0
      %v1604 = vmax.f32 %v1588, 0.0
      %1605 = vrot.lane.b32.xlu0 %v1589, 127
      %v1606 = vpop.permute.xlu0 %1605
      %1607 = vrot.lane.b32.xlu0 %v1597, 127
      %v1608 = vpop.permute.xlu0 %1607
      %1609 = vrot.lane.b32.xlu0 %v1590, 127
      %v1610 = vpop.permute.xlu0 %1609
      %1611 = vrot.lane.b32.xlu0 %v1598, 127
      %v1612 = vpop.permute.xlu0 %1611
      %1613 = vrot.lane.b32.xlu0 %v1591, 127
      %v1614 = vpop.permute.xlu0 %1613
      %1615 = vrot.lane.b32.xlu0 %v1599, 127
      %v1616 = vpop.permute.xlu0 %1615
      %1617 = vrot.lane.b32.xlu0 %v1592, 127
      %v1618 = vpop.permute.xlu0 %1617
      %1619 = vrot.lane.b32.xlu0 %v1600, 127
      %v1620 = vpop.permute.xlu0 %1619
      %1621 = vrot.lane.b32.xlu0 %v1593, 127
      %v1622 = vpop.permute.xlu0 %1621
      %1623 = vrot.lane.b32.xlu0 %v1601, 127
      %v1624 = vpop.permute.xlu0 %1623
      %1625 = vrot.lane.b32.xlu0 %v1594, 127
      %v1626 = vpop.permute.xlu0 %1625
      %1627 = vrot.lane.b32.xlu0 %v1602, 127
      %v1628 = vpop.permute.xlu0 %1627
      %1629 = vrot.lane.b32.xlu0 %v1595, 127
      %v1630 = vpop.permute.xlu0 %1629
      %1631 = vrot.lane.b32.xlu0 %v1603, 127
      %v1632 = vpop.permute.xlu0 %1631
      %1633 = vrot.lane.b32.xlu0 %v1596, 127
      %v1634 = vpop.permute.xlu0 %1633
      %1635 = vrot.lane.b32.xlu0 %v1604, 127
      %v1636 = vpop.permute.xlu0 %1635
      %v1637 = vsel %vm751, %v1630, %v1634
      %v1638 = vsel %vm751, %v1632, %v1636
      %v1639 = vsel %vm751, %v1626, %v1630
      %v1640 = vsel %vm751, %v1628, %v1632
      %v1641 = vsel %vm751, %v1622, %v1626
      %v1642 = vsel %vm751, %v1624, %v1628
      %v1643 = vsel %vm751, %v1618, %v1622
      %v1644 = vsel %vm751, %v1620, %v1624
      %v1645 = vsel %vm751, %v1614, %v1618
      %v1646 = vsel %vm751, %v1616, %v1620
      %v1647 = vsel %vm751, %v1610, %v1614
      %v1648 = vsel %vm751, %v1612, %v1616
      %v1649 = vsel %vm751, %v1606, %v1610
      %v1650 = vsel %vm751, %v1608, %v1612
      %v1651 = vsel %vm751, %v1634, %v1606
      %v1652 = vsel %vm751, %v1636, %v1608
      %v1653 = vmax.f32 %v1589, %v1649
      %v1654 = vmax.f32 %v1590, %v1647
      %v1655 = vmax.f32 %v1591, %v1645
      %v1656 = vmax.f32 %v1592, %v1643
      %v1657 = vmax.f32 %v1593, %v1641
      %v1658 = vmax.f32 %v1594, %v1639
      %v1659 = vmax.f32 %v1595, %v1637
      %v1660 = vmax.f32 %v1596, %v1651
      %v1661 = vmax.f32 %v1597, %v1650
      %v1662 = vmax.f32 %v1598, %v1648
      %v1663 = vmax.f32 %v1599, %v1646
      %v1664 = vmax.f32 %v1600, %v1644
      %v1665 = vmax.f32 %v1601, %v1642
      %v1666 = vmax.f32 %v1602, %v1640
      %v1667 = vmax.f32 %v1603, %v1638
      %v1668 = vmax.f32 %v1604, %v1652
      %1669 = vrot.lane.b32.xlu0 %v1653, 96
      %v1670 = vpop.permute.xlu0 %1669
      %1671 = vrot.lane.b32.xlu0 %v1661, 96
      %v1672 = vpop.permute.xlu0 %1671
      %1673 = vrot.lane.b32.xlu0 %v1654, 96
      %v1674 = vpop.permute.xlu0 %1673
      %1675 = vrot.lane.b32.xlu0 %v1662, 96
      %v1676 = vpop.permute.xlu0 %1675
      %1677 = vrot.lane.b32.xlu0 %v1655, 96
      %v1678 = vpop.permute.xlu0 %1677
      %1679 = vrot.lane.b32.xlu0 %v1663, 96
      %v1680 = vpop.permute.xlu0 %1679
      %1681 = vrot.lane.b32.xlu0 %v1656, 96
      %v1682 = vpop.permute.xlu0 %1681
      %1683 = vrot.lane.b32.xlu0 %v1664, 96
      %v1684 = vpop.permute.xlu0 %1683
      %1685 = vrot.lane.b32.xlu0 %v1657, 96
      %v1686 = vpop.permute.xlu0 %1685
      %1687 = vrot.lane.b32.xlu0 %v1665, 96
      %v1688 = vpop.permute.xlu0 %1687
      %1689 = vrot.lane.b32.xlu0 %v1658, 96
      %v1690 = vpop.permute.xlu0 %1689
      %1691 = vrot.lane.b32.xlu0 %v1666, 96
      %v1692 = vpop.permute.xlu0 %1691
      %1693 = vrot.lane.b32.xlu0 %v1659, 96
      %v1694 = vpop.permute.xlu0 %1693
      %1695 = vrot.lane.b32.xlu0 %v1667, 96
      %v1696 = vpop.permute.xlu0 %1695
      %1697 = vrot.lane.b32.xlu0 %v1660, 96
      %v1698 = vpop.permute.xlu0 %1697
      %1699 = vrot.lane.b32.xlu0 %v1668, 96
      %v1700 = vpop.permute.xlu0 %1699
      %v1701 = vsel %vm979, %v1694, %v1698
      %v1702 = vsel %vm979, %v1696, %v1700
      %v1703 = vsel %vm979, %v1690, %v1694
      %v1704 = vsel %vm979, %v1692, %v1696
      %v1705 = vsel %vm979, %v1686, %v1690
      %v1706 = vsel %vm979, %v1688, %v1692
      %v1707 = vsel %vm979, %v1682, %v1686
      %v1708 = vsel %vm979, %v1684, %v1688
      %v1709 = vsel %vm979, %v1678, %v1682
      %v1710 = vsel %vm979, %v1680, %v1684
      %v1711 = vsel %vm979, %v1674, %v1678
      %v1712 = vsel %vm979, %v1676, %v1680
      %v1713 = vsel %vm979, %v1670, %v1674
      %v1714 = vsel %vm979, %v1672, %v1676
      %v1715 = vsel %vm979, %v1698, %v1670
      %v1716 = vsel %vm979, %v1700, %v1672
      %v1717 = vmax.f32 %v1653, %v1713
      %v1718 = vmax.f32 %v1654, %v1711
      %v1719 = vmax.f32 %v1655, %v1709
      %v1720 = vmax.f32 %v1656, %v1707
      %v1721 = vmax.f32 %v1657, %v1705
      %v1722 = vmax.f32 %v1658, %v1703
      %v1723 = vmax.f32 %v1659, %v1701
      %v1724 = vmax.f32 %v1660, %v1715
      %v1725 = vmax.f32 %v1661, %v1714
      %v1726 = vmax.f32 %v1662, %v1712
      %v1727 = vmax.f32 %v1663, %v1710
      %v1728 = vmax.f32 %v1664, %v1708
      %v1729 = vmax.f32 %v1665, %v1706
      %v1730 = vmax.f32 %v1666, %v1704
      %v1731 = vmax.f32 %v1667, %v1702
      %v1732 = vmax.f32 %v1668, %v1716
      %1733 = vst [vmem:[%s224] sm:$0xff] %v1717
      %1734 = vst [vmem:[%s224 + $0x8] sm:$0xff] %v1718
      %1735 = vst [vmem:[%s224 + $0x10] sm:$0xff] %v1719
      %1736 = vst [vmem:[%s224 + $0x18] sm:$0xff] %v1720
      %1737 = vst [vmem:[%s224 + $0x20] sm:$0xff] %v1721
      %1738 = vst [vmem:[%s224 + $0x28] sm:$0xff] %v1722
      %1739 = vst [vmem:[%s224 + $0x30] sm:$0xff] %v1723
      %1740 = vst [vmem:[%s224 + $0x38] sm:$0xff] %v1724
      %1741 = vst [vmem:[%s224 + $0x40] sm:$0xf] %v1725
      %1742 = vst [vmem:[%s224 + $0x48] sm:$0xf] %v1726
      %1743 = vst [vmem:[%s224 + $0x50] sm:$0xf] %v1727
      %1744 = vst [vmem:[%s224 + $0x58] sm:$0xf] %v1728
      %1745 = vst [vmem:[%s224 + $0x60] sm:$0xf] %v1729
      %1746 = vst [vmem:[%s224 + $0x68] sm:$0xf] %v1730
      %1747 = vst [vmem:[%s224 + $0x70] sm:$0xf] %v1731
      %1748 = vst [vmem:[%s224 + $0x78] sm:$0xf] %v1732
      %p1749 = scmp.lt.s32.totalorder %s16, 1
      %s1750 = scalar_select %p1749, %s16, 1
      %s1751 = smul.addr %s1750, 16
      %s1752 = smul.addr %s1751, 8
      %s1753 = scalar_lea.vmem %s5, %s1752
      // Predicated region
      $region41: #{classify_forward.2} parent=39 // pred_check
        %p1754 = pneg %p144
      $region42: #{classify_forward.2} parent=39 // pred_check_branch
        %1756 = sbr.rel (%p1754) target = $region44
      $region43: #{classify_forward.2} parent=39 // pred_region
        _
      $region44: #{classify_forward.2} parent=39 // pred_fallthru
        _
    $region40: #{classify_forward.2} parent=5 // pred_fallthru
      _
    %p1757 = scmp.le.s32.totalorder 2, %s11
    // Predicated region
    $region45: #{classify_forward.2} parent=5 // pred_check
      %p1758 = pneg %p1757
    $region46: #{classify_forward.2} parent=5 // pred_check_branch
      %1760 = sbr.rel (%p1758) target = $region48
    $region47: #{classify_forward.2} parent=5 // pred_region
      %s1761 = ssub.s32 %s11, 2
      // Predicated region
      $region49: #{classify_forward.2} parent=47 // pred_check
        %p1762 = pneg %p150
      $region50: #{classify_forward.2} parent=47 // pred_check_branch
        %1764 = sbr.rel (%p1762) target = $region52
      $region51: #{classify_forward.2} parent=47 // pred_region
        %p1765 = scmp.lt.s32.totalorder %s17, 1
        %s1766 = scalar_select %p1765, %s17, 1
        %s1767 = smul.addr %s1766, 16
        %s1768 = smul.addr %s1767, 8
        %s1769 = scalar_lea.vmem %s5, %s1768
      $region52: #{classify_forward.2} parent=47 // pred_fallthru
        _
    $region48: #{classify_forward.2} parent=5 // pred_fallthru
      _
  $region6: #{classify_forward.2} parent=0 // loop_footer
    %s15 = sadd.s32 1, %s11
  $region7: #{classify_forward.2} parent=0 // loop_footer_branch
    %10 = sbr.rel target = $region3
  $region8: #{classify_forward.2} parent=0 // loop_exit
    _

// kernel: classify_forward.3
$region0: #{classify_forward.3}
  #allocation0 [shape = 'u32[]', space=smem, size = 0x4, offset = 0x4, fixed_abs, tag = 'smem constant byte address 0x4 - core index']
  #allocation1 [shape = 'u32[144,128]{1,0:T(1,128)}', space=vmem, size = 0x12000, scoped, tag = 'internal scratch']
  #allocation2 [shape = 'f32[108,256]{1,0:T(8,128)}', space=vmem, size = 0x1c000, scoped, tag = 'scratch operand']
  #allocation3 [shape = 'f32[180,256]{1,0:T(8,128)}', space=vmem, size = 0x2e000, scoped, tag = 'scratch operand']
  %s0 = inlined_call_operand.vmem [shape: f32[2,12,256], index: 0, kind: input, shape index: {}]
  %s1 = inlined_call_operand.vmem [shape: f32[20,108], index: 1, kind: input, shape index: {}]
  %s2 = inlined_call_operand.vmem [shape: f32[20,1], index: 2, kind: input, shape index: {}]
  %s3 = inlined_call_operand.vmem [shape: f32[20,1], index: 3, kind: input, shape index: {}]
  %s4 = inlined_call_operand.vmem [shape: f32[32,180], index: 4, kind: input, shape index: {}]
  %s5 = inlined_call_operand.vmem [shape: f32[32,1], index: 5, kind: input, shape index: {}]
  %s6 = inlined_call_operand.vmem [shape: f32[32,1], index: 6, kind: input, shape index: {}]
  %s7 = inlined_call_operand.vmem [shape: f32[2,32,256], index: 7, kind: input, shape index: {}]
  %s8 = inlined_call_operand.vmem [shape: f32[1,2], index: 8, kind: input, shape index: {}]
  %s9 = inlined_call_operand.vmem [shape: f32[9,256], index: 9, kind: input, shape index: {}]
  %s10 = inlined_call_operand.hbm [shape: f32[2,1,2], index: 10, kind: output, shape index: {}]
  %s11 = sld [smem:[#allocation0]]
  $region73: #{classify_forward.3} parent=0
    _
  %s13 = ssub.s32 1, %s11
  %s14 = scalar_select 0, %s13, %s11
  $region1: #{classify_forward.3} parent=0
    #allocation4 [shape = 'u8[1024]{0}', space=vmem, size = 0x400, scoped, tag = 'output window, operand 0']
    #allocation5 [shape = 's32[2]{0}', space=sflag, size = 0x8, scoped, tag = 'scoped memory for classify_forward.3']
    %15 = vsyncpa [#allocation5], 0
    %s16 = scalar_lea.sflag [#allocation5], 1
    %17 = vsyncpa %s16, 0
    loop: start=0, step=1, limit=4
    $region2: #{classify_forward.3} parent=1 // loop_pre_header
      _
    $region3: #{classify_forward.3} parent=1 // loop_header
      %s19 = sphi 0, %s23
      %p20 = scmp.ge.s32.totalorder %s19, 4
      %s29 = sphi 0, %s31
      %s32 = sphi 0, %s29
      %s33 = sphi 0, %s32
      %s49 = sphi 0, %s33
      %s53 = sphi 0, %s53
      %s55 = sphi 0, %s53
      %s56 = sphi 0, %s55
      %s70 = sphi 0, %s56
      %s74 = sphi 0, %s74
      %s76 = sphi 0, %s74
      %s77 = sphi 0, %s76
      %s91 = sphi 0, %s77
      %s95 = sphi 0, %s95
      %s97 = sphi 0, %s95
      %s98 = sphi 0, %s97
      %s112 = sphi 0, %s98
      %s116 = sphi 0, %s116
      %s118 = sphi 0, %s116
      %s119 = sphi 0, %s118
      %s133 = sphi 0, %s119
      %s137 = sphi 0, %s137
      %s139 = sphi 0, %s137
      %s140 = sphi 0, %s139
      %s154 = sphi 0, %s140
      %s158 = sphi 0, %s158
      %s160 = sphi 0, %s158
      %s161 = sphi 0, %s160
      %s175 = sphi 0, %s161
      %s179 = sphi 0, %s179
      %s181 = sphi 0, %s179
      %s182 = sphi 0, %s181
      %s196 = sphi 0, %s182
      %s200 = sphi 0, %s200
      %s202 = sphi 0, %s200
      %s203 = sphi 0, %s202
      %s217 = sphi 0, %s203
      %s221 = sphi 0, %s221
      %s223 = sphi 0, %s221
      %s224 = sphi 0, %s223
      %s238 = sphi 0, %s224
      %s244 = sphi 0, %s246
      %s247 = sphi 0, %s244
      %s248 = sphi 0, %s247
      %s264 = sphi 0, %s248
    $region4: #{classify_forward.3} parent=1 // loop_header_branch
      %22 = sbr.rel (%p20) target = $region8
    $region5: #{classify_forward.3} parent=1 // loop_body
      %s24 = ssub.s32 %s19, 1
      %s25 = ssub.s32 %s19, 2
      %s26 = sadd.s32 %s19, 1
      %s27 = ssub.s32 %s19, %s26
      %p28 = scmp.eq.s32.totalorder %s27, 0
      %s30 = sadd.s32 %s29, 1
      %s31 = scalar_select %p28, %s29, %s30
      %p34 = pneg %p28
      %p35 = scmp.eq.s32.totalorder %s19, 1
      %p36 = por %p34, %p35
      %p37 = scmp.ne.s32.totalorder %s29, %s32
      %p38 = scmp.eq.s32.totalorder %s19, 0
      %p39 = por %p37, %p38
      %p40 = scmp.ne.s32.totalorder %s29, %s32
      %p41 = scmp.eq.s32.totalorder %s24, 1
      %p42 = por %p40, %p41
      %p43 = scmp.ne.s32.totalorder %s32, %s33
      %p44 = scmp.eq.s32.totalorder %s24, 0
      %p45 = por %p43, %p44
      %p46 = scmp.ne.s32.totalorder %s32, %s33
      %p47 = scmp.eq.s32.totalorder %s25, 1
      %p48 = por %p46, %p47
      %p50 = scmp.ne.s32.totalorder %s33, %s49
      %p51 = scmp.eq.s32.totalorder %s25, 0
      %p52 = por %p50, %p51
      %s54 = sadd.s32 %s53, 1
      %p57 = scmp.eq.s32.totalorder %s19, 1
      %p58 = scmp.ne.s32.totalorder %s53, %s55
      %p59 = scmp.eq.s32.totalorder %s19, 0
      %p60 = por %p58, %p59
      %p61 = scmp.ne.s32.totalorder %s53, %s55
      %p62 = scmp.eq.s32.totalorder %s24, 1
      %p63 = por %p61, %p62
      %p64 = scmp.ne.s32.totalorder %s55, %s56
      %p65 = scmp.eq.s32.totalorder %s24, 0
      %p66 = por %p64, %p65
      %p67 = scmp.ne.s32.totalorder %s55, %s56
      %p68 = scmp.eq.s32.totalorder %s25, 1
      %p69 = por %p67, %p68
      %p71 = scmp.ne.s32.totalorder %s56, %s70
      %p72 = scmp.eq.s32.totalorder %s25, 0
      %p73 = por %p71, %p72
      %s75 = sadd.s32 %s74, 1
      %p78 = scmp.eq.s32.totalorder %s19, 1
      %p79 = scmp.ne.s32.totalorder %s74, %s76
      %p80 = scmp.eq.s32.totalorder %s19, 0
      %p81 = por %p79, %p80
      %p82 = scmp.ne.s32.totalorder %s74, %s76
      %p83 = scmp.eq.s32.totalorder %s24, 1
      %p84 = por %p82, %p83
      %p85 = scmp.ne.s32.totalorder %s76, %s77
      %p86 = scmp.eq.s32.totalorder %s24, 0
      %p87 = por %p85, %p86
      %p88 = scmp.ne.s32.totalorder %s76, %s77
      %p89 = scmp.eq.s32.totalorder %s25, 1
      %p90 = por %p88, %p89
      %p92 = scmp.ne.s32.totalorder %s77, %s91
      %p93 = scmp.eq.s32.totalorder %s25, 0
      %p94 = por %p92, %p93
      %s96 = sadd.s32 %s95, 1
      %p99 = scmp.eq.s32.totalorder %s19, 1
      %p100 = scmp.ne.s32.totalorder %s95, %s97
      %p101 = scmp.eq.s32.totalorder %s19, 0
      %p102 = por %p100, %p101
      %p103 = scmp.ne.s32.totalorder %s95, %s97
      %p104 = scmp.eq.s32.totalorder %s24, 1
      %p105 = por %p103, %p104
      %p106 = scmp.ne.s32.totalorder %s97, %s98
      %p107 = scmp.eq.s32.totalorder %s24, 0
      %p108 = por %p106, %p107
      %p109 = scmp.ne.s32.totalorder %s97, %s98
      %p110 = scmp.eq.s32.totalorder %s25, 1
      %p111 = por %p109, %p110
      %p113 = scmp.ne.s32.totalorder %s98, %s112
      %p114 = scmp.eq.s32.totalorder %s25, 0
      %p115 = por %p113, %p114
      %s117 = sadd.s32 %s116, 1
      %p120 = scmp.eq.s32.totalorder %s19, 1
      %p121 = scmp.ne.s32.totalorder %s116, %s118
      %p122 = scmp.eq.s32.totalorder %s19, 0
      %p123 = por %p121, %p122
      %p124 = scmp.ne.s32.totalorder %s116, %s118
      %p125 = scmp.eq.s32.totalorder %s24, 1
      %p126 = por %p124, %p125
      %p127 = scmp.ne.s32.totalorder %s118, %s119
      %p128 = scmp.eq.s32.totalorder %s24, 0
      %p129 = por %p127, %p128
      %p130 = scmp.ne.s32.totalorder %s118, %s119
      %p131 = scmp.eq.s32.totalorder %s25, 1
      %p132 = por %p130, %p131
      %p134 = scmp.ne.s32.totalorder %s119, %s133
      %p135 = scmp.eq.s32.totalorder %s25, 0
      %p136 = por %p134, %p135
      %s138 = sadd.s32 %s137, 1
      %p141 = scmp.eq.s32.totalorder %s19, 1
      %p142 = scmp.ne.s32.totalorder %s137, %s139
      %p143 = scmp.eq.s32.totalorder %s19, 0
      %p144 = por %p142, %p143
      %p145 = scmp.ne.s32.totalorder %s137, %s139
      %p146 = scmp.eq.s32.totalorder %s24, 1
      %p147 = por %p145, %p146
      %p148 = scmp.ne.s32.totalorder %s139, %s140
      %p149 = scmp.eq.s32.totalorder %s24, 0
      %p150 = por %p148, %p149
      %p151 = scmp.ne.s32.totalorder %s139, %s140
      %p152 = scmp.eq.s32.totalorder %s25, 1
      %p153 = por %p151, %p152
      %p155 = scmp.ne.s32.totalorder %s140, %s154
      %p156 = scmp.eq.s32.totalorder %s25, 0
      %p157 = por %p155, %p156
      %s159 = sadd.s32 %s158, 1
      %p162 = scmp.eq.s32.totalorder %s19, 1
      %p163 = scmp.ne.s32.totalorder %s158, %s160
      %p164 = scmp.eq.s32.totalorder %s19, 0
      %p165 = por %p163, %p164
      %p166 = scmp.ne.s32.totalorder %s158, %s160
      %p167 = scmp.eq.s32.totalorder %s24, 1
      %p168 = por %p166, %p167
      %p169 = scmp.ne.s32.totalorder %s160, %s161
      %p170 = scmp.eq.s32.totalorder %s24, 0
      %p171 = por %p169, %p170
      %p172 = scmp.ne.s32.totalorder %s160, %s161
      %p173 = scmp.eq.s32.totalorder %s25, 1
      %p174 = por %p172, %p173
      %p176 = scmp.ne.s32.totalorder %s161, %s175
      %p177 = scmp.eq.s32.totalorder %s25, 0
      %p178 = por %p176, %p177
      %s180 = sadd.s32 %s179, 1
      %p183 = scmp.eq.s32.totalorder %s19, 1
      %p184 = scmp.ne.s32.totalorder %s179, %s181
      %p185 = scmp.eq.s32.totalorder %s19, 0
      %p186 = por %p184, %p185
      %p187 = scmp.ne.s32.totalorder %s179, %s181
      %p188 = scmp.eq.s32.totalorder %s24, 1
      %p189 = por %p187, %p188
      %p190 = scmp.ne.s32.totalorder %s181, %s182
      %p191 = scmp.eq.s32.totalorder %s24, 0
      %p192 = por %p190, %p191
      %p193 = scmp.ne.s32.totalorder %s181, %s182
      %p194 = scmp.eq.s32.totalorder %s25, 1
      %p195 = por %p193, %p194
      %p197 = scmp.ne.s32.totalorder %s182, %s196
      %p198 = scmp.eq.s32.totalorder %s25, 0
      %p199 = por %p197, %p198
      %s201 = sadd.s32 %s200, 1
      %p204 = scmp.eq.s32.totalorder %s19, 1
      %p205 = scmp.ne.s32.totalorder %s200, %s202
      %p206 = scmp.eq.s32.totalorder %s19, 0
      %p207 = por %p205, %p206
      %p208 = scmp.ne.s32.totalorder %s200, %s202
      %p209 = scmp.eq.s32.totalorder %s24, 1
      %p210 = por %p208, %p209
      %p211 = scmp.ne.s32.totalorder %s202, %s203
      %p212 = scmp.eq.s32.totalorder %s24, 0
      %p213 = por %p211, %p212
      %p214 = scmp.ne.s32.totalorder %s202, %s203
      %p215 = scmp.eq.s32.totalorder %s25, 1
      %p216 = por %p214, %p215
      %p218 = scmp.ne.s32.totalorder %s203, %s217
      %p219 = scmp.eq.s32.totalorder %s25, 0
      %p220 = por %p218, %p219
      %s222 = sadd.s32 %s221, 1
      %p225 = scmp.eq.s32.totalorder %s19, 1
      %p226 = scmp.ne.s32.totalorder %s221, %s223
      %p227 = scmp.eq.s32.totalorder %s19, 0
      %p228 = por %p226, %p227
      %p229 = scmp.ne.s32.totalorder %s221, %s223
      %p230 = scmp.eq.s32.totalorder %s24, 1
      %p231 = por %p229, %p230
      %p232 = scmp.ne.s32.totalorder %s223, %s224
      %p233 = scmp.eq.s32.totalorder %s24, 0
      %p234 = por %p232, %p233
      %p235 = scmp.ne.s32.totalorder %s223, %s224
      %p236 = scmp.eq.s32.totalorder %s25, 1
      %p237 = por %p235, %p236
      %p239 = scmp.ne.s32.totalorder %s224, %s238
      %p240 = scmp.eq.s32.totalorder %s25, 0
      %p241 = por %p239, %p240
      %s242 = ssub.s32 %s19, %s26
      %p243 = scmp.eq.s32.totalorder %s242, 0
      %s245 = sadd.s32 %s244, 1
      %s246 = scalar_select %p243, %s244, %s245
      %p249 = pneg %p243
      %p250 = scmp.eq.s32.totalorder %s19, 1
      %p251 = por %p249, %p250
      %p252 = scmp.ne.s32.totalorder %s244, %s247
      %p253 = scmp.eq.s32.totalorder %s19, 0
      %p254 = por %p252, %p253
      %p255 = scmp.ne.s32.totalorder %s244, %s247
      %p256 = scmp.eq.s32.totalorder %s24, 1
      %p257 = por %p255, %p256
      %p258 = scmp.ne.s32.totalorder %s247, %s248
      %p259 = scmp.eq.s32.totalorder %s24, 0
      %p260 = por %p258, %p259
      %p261 = scmp.ne.s32.totalorder %s247, %s248
      %p262 = scmp.eq.s32.totalorder %s25, 1
      %p263 = por %p261, %p262
      %p265 = scmp.ne.s32.totalorder %s248, %s264
      %p266 = scmp.eq.s32.totalorder %s25, 0
      %p267 = por %p265, %p266
      %p268 = scmp.le.s32.totalorder 1, %s19
      %p269 = scmp.lt.s32.totalorder %s19, 3
      %p270 = pnand %p268, %p269
      %p271 = pneg %p270
      // Predicated region
      $region9: #{classify_forward.3} parent=5 // pred_check
        _
      $region10: #{classify_forward.3} parent=5 // pred_check_branch
        %273 = sbr.rel (%p270) target = $region12
      $region11: #{classify_forward.3} parent=5 // pred_region
        %s274 = ssub.s32 %s19, 1
        // Predicated region
        $region13: #{classify_forward.3} parent=11 // pred_check
          %p275 = pneg %p66
        $region14: #{classify_forward.3} parent=11 // pred_check_branch
          %277 = sbr.rel (%p275) target = $region16
        $region15: #{classify_forward.3} parent=11 // pred_region
          _
        $region16: #{classify_forward.3} parent=11 // pred_fallthru
          _
        // Predicated region
        $region17: #{classify_forward.3} parent=11 // pred_check
          %p278 = pneg %p87
        $region18: #{classify_forward.3} parent=11 // pred_check_branch
          %280 = sbr.rel (%p278) target = $region20
        $region19: #{classify_forward.3} parent=11 // pred_region
          _
        $region20: #{classify_forward.3} parent=11 // pred_fallthru
          _
        // Predicated region
        $region21: #{classify_forward.3} parent=11 // pred_check
          %p281 = pneg %p108
        $region22: #{classify_forward.3} parent=11 // pred_check_branch
          %283 = sbr.rel (%p281) target = $region24
        $region23: #{classify_forward.3} parent=11 // pred_region
          _
        $region24: #{classify_forward.3} parent=11 // pred_fallthru
          _
        // Predicated region
        $region25: #{classify_forward.3} parent=11 // pred_check
          %p284 = pneg %p129
        $region26: #{classify_forward.3} parent=11 // pred_check_branch
          %286 = sbr.rel (%p284) target = $region28
        $region27: #{classify_forward.3} parent=11 // pred_region
          _
        $region28: #{classify_forward.3} parent=11 // pred_fallthru
          _
        // Predicated region
        $region29: #{classify_forward.3} parent=11 // pred_check
          %p287 = pneg %p150
        $region30: #{classify_forward.3} parent=11 // pred_check_branch
          %289 = sbr.rel (%p287) target = $region32
        $region31: #{classify_forward.3} parent=11 // pred_region
          _
        $region32: #{classify_forward.3} parent=11 // pred_fallthru
          _
        // Predicated region
        $region33: #{classify_forward.3} parent=11 // pred_check
          %p290 = pneg %p171
        $region34: #{classify_forward.3} parent=11 // pred_check_branch
          %292 = sbr.rel (%p290) target = $region36
        $region35: #{classify_forward.3} parent=11 // pred_region
          _
        $region36: #{classify_forward.3} parent=11 // pred_fallthru
          _
        // Predicated region
        $region37: #{classify_forward.3} parent=11 // pred_check
          %p293 = pneg %p192
        $region38: #{classify_forward.3} parent=11 // pred_check_branch
          %295 = sbr.rel (%p293) target = $region40
        $region39: #{classify_forward.3} parent=11 // pred_region
          _
        $region40: #{classify_forward.3} parent=11 // pred_fallthru
          _
        // Predicated region
        $region41: #{classify_forward.3} parent=11 // pred_check
          %p296 = pneg %p213
        $region42: #{classify_forward.3} parent=11 // pred_check_branch
          %298 = sbr.rel (%p296) target = $region44
        $region43: #{classify_forward.3} parent=11 // pred_region
          _
        $region44: #{classify_forward.3} parent=11 // pred_fallthru
          _
        // Predicated region
        $region45: #{classify_forward.3} parent=11 // pred_check
          %p299 = pneg %p234
        $region46: #{classify_forward.3} parent=11 // pred_check_branch
          %301 = sbr.rel (%p299) target = $region48
        $region47: #{classify_forward.3} parent=11 // pred_region
          _
        $region48: #{classify_forward.3} parent=11 // pred_fallthru
          _
      $region12: #{classify_forward.3} parent=5 // pred_fallthru
        _
      %p302 = scmp.lt.s32.totalorder %s19, 2
      // Predicated region
      $region49: #{classify_forward.3} parent=5 // pred_check
        %p303 = pneg %p302
      $region50: #{classify_forward.3} parent=5 // pred_check_branch
        %305 = sbr.rel (%p303) target = $region52
      $region51: #{classify_forward.3} parent=5 // pred_region
        // Predicated region
        $region53: #{classify_forward.3} parent=51 // pred_check
          %p306 = pneg %p39
        $region54: #{classify_forward.3} parent=51 // pred_check_branch
          %308 = sbr.rel (%p306) target = $region56
        $region55: #{classify_forward.3} parent=51 // pred_region
          %p309 = scmp.lt.s32.totalorder %s19, 1
          %s310 = scalar_select %p309, %s19, 1
          %s311 = smul.addr %s310, 4
          %s312 = smul.addr %s311, 8
          %s313 = scalar_lea.vmem %s0, %s312
        $region56: #{classify_forward.3} parent=51 // pred_fallthru
          _
      $region52: #{classify_forward.3} parent=5 // pred_fallthru
        _
      %p314 = scmp.le.s32.totalorder 1, %s19
      %p315 = scmp.lt.s32.totalorder %s19, 3
      %p316 = pnand %p314, %p315
      %p317 = pneg %p316
      // Predicated region
      $region57: #{classify_forward.3} parent=5 // pred_check
        _
      $region58: #{classify_forward.3} parent=5 // pred_check_branch
        %319 = sbr.rel (%p316) target = $region60
      $region59: #{classify_forward.3} parent=5 // pred_region
        %s320 = ssub.s32 %s19, 1
        %p321 = scmp.lt.s32.totalorder %s24, 1
        %s322 = scalar_select %p321, %s24, 1
        %s323 = smul.addr %s322, 4
        %s324 = smul.addr %s323, 8
        %s325 = scalar_lea.vmem %s0, %s324
        %p326 = pneg %p45
        %p327 = pneg %p42
        %p328 = pneg %p66
        %p329 = pneg %p63
        %p330 = pneg %p87
        %p331 = pneg %p84
        %p332 = pneg %p108
        %p333 = pneg %p105
        %p334 = pneg %p129
        %p335 = pneg %p126
        %p336 = pneg %p150
        %p337 = pneg %p147
        %p338 = pneg %p171
        %p339 = pneg %p168
        %p340 = pneg %p192
        %p341 = pneg %p189
        %p342 = pneg %p213
        %p343 = pneg %p210
        %p344 = pneg %p234
        %p345 = pneg %p231
        %p346 = pneg %p260
        %p347 = pneg %p257
        %s348 = sand.u32 %s247, 1
        %s349 = scalar_lea.sflag [#allocation5], %s348
        %s350 = sand.u32 %s247, 1
        %s351 = scalar_lea.vmem [#allocation4], %s350
        %p352 = scmp.lt.s32.totalorder %s24, 1
        %s353 = scalar_select %p352, %s24, 1
        %s354 = smul.addr %s353, 4
        %s355 = smul.addr %s354, 8
        %s356 = scalar_lea.vmem %s0, %s355
        %v357 = vld [vmem:[%s356] sm:$0xff]
        %v358 = vld [vmem:[%s356 + $0x8] sm:$0xff]
        %v359 = vld [vmem:[%s356 + $0x10] sm:$0xf]
        %v360 = vld [vmem:[%s356 + $0x18] sm:$0xf]
        %361 = vrot.lane.b32.xlu0 %v357, 17
        %v362 = vpop.permute.xlu0 %361
        %363 = vrot.lane.b32.xlu0 %v359, 17
        %v364 = vpop.permute.xlu0 %363
        %365 = vrot.lane.b32.xlu0 %v358, 17
        %v366 = vpop.permute.xlu0 %365
        %367 = vrot.lane.b32.xlu0 %v360, 17
        %v368 = vpop.permute.xlu0 %367
        %v369 = vlaneseq
        %v370 = vand.u32 %v369, 127
        %vm371 = vcmp.lt.s32.totalorder %v370, 17
        %v372 = vsel %vm371, %v362, %v366
        %v373 = vsel %vm371, %v364, %v368
        %v374 = vsel %vm371, %v366, %v362
        %v375 = vsel %vm371, %v368, %v364
        %v376 = vld [vmem:[%s9] ss:$8 sm:$0x3]
        %v378 = vlaneseq
        %v379 = vshrl.u32 %v378, 7
        %v380 = vsub.s32 0, %v379
        %v381 = vrot.slane %v376, %v380
        %v382 = vlaneseq
        %v383 = vshrl.u32 %v382, 7
        %v384 = vsub.s32 1, %v383
        %v385 = vrot.slane %v376, %v384
        %v388 = vmul.f32 %v374, %v381
        %v389 = vmul.f32 %v372, %v385
        %v390 = vmul.f32 %v375, %v381
        %v391 = vmul.f32 %v373, %v385
        %392 = vst [vmem:[#allocation2] sm:$0xff] %v388
        %393 = vst [vmem:[#allocation2 + $0x8] sm:$0xff] %v389
        %394 = vst [vmem:[#allocation2 + $0x10] sm:$0xf] %v390
        %395 = vst [vmem:[#allocation2 + $0x18] sm:$0xf] %v391
        %396 = vrot.lane.b32.xlu0 %v357, 16
        %v397 = vpop.permute.xlu0 %396
        %398 = vrot.lane.b32.xlu0 %v359, 16
        %v399 = vpop.permute.xlu0 %398
        %400 = vrot.lane.b32.xlu0 %v358, 16
        %v401 = vpop.permute.xlu0 %400
        %402 = vrot.lane.b32.xlu0 %v360, 16
        %v403 = vpop.permute.xlu0 %402
        %vm404 = vcmp.lt.s32.totalorder %v370, 16
        %v405 = vsel %vm404, %v397, %v401
        %v406 = vsel %vm404, %v399, %v403
        %v407 = vsel %vm404, %v401, %v397
        %v408 = vsel %vm404, %v403, %v399
        %s409 = scalar_lea.vmem %s9, 1
        %v410 = vld [vmem:[%s409] ss:$8 sm:$0x3]
        %v412 = vlaneseq
        %v413 = vshrl.u32 %v412, 7
        %v414 = vsub.s32 0, %v413
        %v415 = vrot.slane %v410, %v414
        %v416 = vlaneseq
        %v417 = vshrl.u32 %v416, 7
        %v418 = vsub.s32 1, %v417
        %v419 = vrot.slane %v410, %v418
        %v422 = vmul.f32 %v407, %v415
        %v423 = vmul.f32 %v405, %v419
        %v424 = vmul.f32 %v408, %v415
        %v425 = vmul.f32 %v406, %v419
        %vm430 = vcmask 1043456
        %v431 = vrot.slane %v422, 4
        %v432 = vrot.slane %v423, 4
        %v433 = vrot.slane %v424, 4
        %v434 = vsel %vm430, %v431, %v433
        %v435 = vrot.slane %v425, 4
        %v436 = vsel %vm430, %v432, %v435
        %441 = vst [vmem:[#allocation2 + $0x10] sm:$0xf0] %v431
        %442 = vst [vmem:[#allocation2 + $0x18] sm:$0xf0] %v432
        %443 = vst [vmem:[#allocation2 + $0x20] sm:$0xff] %v434
        %444 = vst [vmem:[#allocation2 + $0x28] sm:$0xff] %v436
        %445 = vrot.lane.b32.xlu0 %v357, 15
        %v446 = vpop.permute.xlu0 %445
        %447 = vrot.lane.b32.xlu0 %v359, 15
        %v448 = vpop.permute.xlu0 %447
        %449 = vrot.lane.b32.xlu0 %v358, 15
        %v450 = vpop.permute.xlu0 %449
        %451 = vrot.lane.b32.xlu0 %v360, 15
        %v452 = vpop.permute.xlu0 %451
        %vm453 = vcmp.lt.s32.totalorder %v370, 15
        %v454 = vsel %vm453, %v446, %v450
        %v455 = vsel %vm453, %v448, %v452
        %v456 = vsel %vm453, %v450, %v446
        %v457 = vsel %vm453, %v452, %v448
        %s458 = scalar_lea.vmem %s9, 2
        %v459 = vld [vmem:[%s458] ss:$8 sm:$0x3]
        %v461 = vlaneseq
        %v462 = vshrl.u32 %v461, 7
        %v463 = vsub.s32 0, %v462
        %v464 = vrot.slane %v459, %v463
        %v465 = vlaneseq
        %v466 = vshrl.u32 %v465, 7
        %v467 = vsub.s32 1, %v466
        %v468 = vrot.slane %v459, %v467
        %v471 = vmul.f32 %v456, %v464
        %v472 = vmul.f32 %v454, %v468
        %v473 = vmul.f32 %v457, %v464
        %v474 = vmul.f32 %v455, %v468
        %475 = vst [vmem:[#allocation2 + $0x30] sm:$0xff] %v471
        %476 = vst [vmem:[#allocation2 + $0x38] sm:$0xff] %v472
        %477 = vst [vmem:[#allocation2 + $0x40] sm:$0xf] %v473
        %478 = vst [vmem:[#allocation2 + $0x48] sm:$0xf] %v474
        %479 = vrot.lane.b32.xlu0 %v357, 1
        %v480 = vpop.permute.xlu0 %479
        %481 = vrot.lane.b32.xlu0 %v359, 1
        %v482 = vpop.permute.xlu0 %481
        %483 = vrot.lane.b32.xlu0 %v358, 1
        %v484 = vpop.permute.xlu0 %483
        %485 = vrot.lane.b32.xlu0 %v360, 1
        %v486 = vpop.permute.xlu0 %485
        %vm487 = vcmp.lt.s32.totalorder %v370, 1
        %v488 = vsel %vm487, %v480, %v484
        %v489 = vsel %vm487, %v482, %v486
        %v490 = vsel %vm487, %v484, %v480
        %v491 = vsel %vm487, %v486, %v482
        %s492 = scalar_lea.vmem %s9, 3
        %v493 = vld [vmem:[%s492] ss:$8 sm:$0x3]
        %v495 = vlaneseq
        %v496 = vshrl.u32 %v495, 7
        %v497 = vsub.s32 0, %v496
        %v498 = vrot.slane %v493, %v497
        %v499 = vlaneseq
        %v500 = vshrl.u32 %v499, 7
        %v501 = vsub.s32 1, %v500
        %v502 = vrot.slane %v493, %v501
        %v505 = vmul.f32 %v490, %v498
        %v506 = vmul.f32 %v488, %v502
        %v507 = vmul.f32 %v491, %v498
        %v508 = vmul.f32 %v489, %v502
        %v513 = vrot.slane %v505, 4
        %v514 = vrot.slane %v506, 4
        %v515 = vrot.slane %v507, 4
        %v516 = vsel %vm430, %v513, %v515
        %v517 = vrot.slane %v508, 4
        %v518 = vsel %vm430, %v514, %v517
        %523 = vst [vmem:[#allocation2 + $0x40] sm:$0xf0] %v513
        %524 = vst [vmem:[#allocation2 + $0x48] sm:$0xf0] %v514
        %525 = vst [vmem:[#allocation2 + $0x50] sm:$0xff] %v516
        %526 = vst [vmem:[#allocation2 + $0x58] sm:$0xff] %v518
        %s527 = scalar_lea.vmem %s9, 4
        %v528 = vld [vmem:[%s527] ss:$8 sm:$0x3]
        %v530 = vlaneseq
        %v531 = vshrl.u32 %v530, 7
        %v532 = vsub.s32 0, %v531
        %v533 = vrot.slane %v528, %v532
        %v534 = vlaneseq
        %v535 = vshrl.u32 %v534, 7
        %v536 = vsub.s32 1, %v535
        %v537 = vrot.slane %v528, %v536
        %v540 = vmul.f32 %v357, %v533
        %v541 = vmul.f32 %v358, %v537
        %v542 = vmul.f32 %v359, %v533
        %v543 = vmul.f32 %v360, %v537
        %544 = vst [vmem:[#allocation2 + $0x60] sm:$0xff] %v540
        %545 = vst [vmem:[#allocation2 + $0x68] sm:$0xff] %v541
        %546 = vst [vmem:[#allocation2 + $0x70] sm:$0xf] %v542
        %547 = vst [vmem:[#allocation2 + $0x78] sm:$0xf] %v543
        %548 = vrot.lane.b32.xlu0 %v357, 127
        %v549 = vpop.permute.xlu0 %548
        %550 = vrot.lane.b32.xlu0 %v359, 127
        %v551 = vpop.permute.xlu0 %550
        %552 = vrot.lane.b32.xlu0 %v358, 127
        %v553 = vpop.permute.xlu0 %552
        %554 = vrot.lane.b32.xlu0 %v360, 127
        %v555 = vpop.permute.xlu0 %554
        %vm556 = vcmp.lt.s32.totalorder %v370, 127
        %v557 = vsel %vm556, %v549, %v553
        %v558 = vsel %vm556, %v551, %v555
        %v559 = vsel %vm556, %v553, %v549
        %v560 = vsel %vm556, %v555, %v551
        %s561 = scalar_lea.vmem %s9, 5
        %v562 = vld [vmem:[%s561] ss:$8 sm:$0x3]
        %v564 = vlaneseq
        %v565 = vshrl.u32 %v564, 7
        %v566 = vsub.s32 0, %v565
        %v567 = vrot.slane %v562, %v566
        %v568 = vlaneseq
        %v569 = vshrl.u32 %v568, 7
        %v570 = vsub.s32 1, %v569
        %v571 = vrot.slane %v562, %v570
        %v574 = vmul.f32 %v557, %v567
        %v575 = vmul.f32 %v559, %v571
        %v576 = vmul.f32 %v558, %v567
        %v577 = vmul.f32 %v560, %v571
        %v582 = vrot.slane %v574, 4
        %v583 = vrot.slane %v575, 4
        %v584 = vrot.slane %v576, 4
        %v585 = vsel %vm430, %v582, %v584
        %v586 = vrot.slane %v577, 4
        %v587 = vsel %vm430, %v583, %v586
        %592 = vst [vmem:[#allocation2 + $0x70] sm:$0xf0] %v582
        %593 = vst [vmem:[#allocation2 + $0x78] sm:$0xf0] %v583
        %594 = vst [vmem:[#allocation2 + $0x80] sm:$0xff] %v585
        %595 = vst [vmem:[#allocation2 + $0x88] sm:$0xff] %v587
        %596 = vrot.lane.b32.xlu0 %v357, 113
        %v597 = vpop.permute.xlu0 %596
        %598 = vrot.lane.b32.xlu0 %v359, 113
        %v599 = vpop.permute.xlu0 %598
        %600 = vrot.lane.b32.xlu0 %v358, 113
        %v601 = vpop.permute.xlu0 %600
        %602 = vrot.lane.b32.xlu0 %v360, 113
        %v603 = vpop.permute.xlu0 %602
        %vm604 = vcmp.lt.s32.totalorder %v370, 113
        %v605 = vsel %vm604, %v597, %v601
        %v606 = vsel %vm604, %v599, %v603
        %v607 = vsel %vm604, %v601, %v597
        %v608 = vsel %vm604, %v603, %v599
        %s609 = scalar_lea.vmem %s9, 6
        %v610 = vld [vmem:[%s609] ss:$8 sm:$0x3]
        %v612 = vlaneseq
        %v613 = vshrl.u32 %v612, 7
        %v614 = vsub.s32 0, %v613
        %v615 = vrot.slane %v610, %v614
        %v616 = vlaneseq
        %v617 = vshrl.u32 %v616, 7
        %v618 = vsub.s32 1, %v617
        %v619 = vrot.slane %v610, %v618
        %v622 = vmul.f32 %v605, %v615
        %v623 = vmul.f32 %v607, %v619
        %v624 = vmul.f32 %v606, %v615
        %v625 = vmul.f32 %v608, %v619
        %626 = vst [vmem:[#allocation2 + $0x90] sm:$0xff] %v622
        %627 = vst [vmem:[#allocation2 + $0x98] sm:$0xff] %v623
        %628 = vst [vmem:[#allocation2 + $0xa0] sm:$0xf] %v624
        %629 = vst [vmem:[#allocation2 + $0xa8] sm:$0xf] %v625
        %630 = vrot.lane.b32.xlu0 %v357, 112
        %v631 = vpop.permute.xlu0 %630
        %632 = vrot.lane.b32.xlu0 %v359, 112
        %v633 = vpop.permute.xlu0 %632
        %634 = vrot.lane.b32.xlu0 %v358, 112
        %v635 = vpop.permute.xlu0 %634
        %636 = vrot.lane.b32.xlu0 %v360, 112
        %v637 = vpop.permute.xlu0 %636
        %vm638 = vcmp.lt.s32.totalorder %v370, 112
        %v639 = vsel %vm638, %v631, %v635
        %v640 = vsel %vm638, %v633, %v637
        %v641 = vsel %vm638, %v635, %v631
        %v642 = vsel %vm638, %v637, %v633
        %s643 = scalar_lea.vmem %s9, 7
        %v644 = vld [vmem:[%s643] ss:$8 sm:$0x3]
        %v646 = vlaneseq
        %v647 = vshrl.u32 %v646, 7
        %v648 = vsub.s32 0, %v647
        %v649 = vrot.slane %v644, %v648
        %v650 = vlaneseq
        %v651 = vshrl.u32 %v650, 7
        %v652 = vsub.s32 1, %v651
        %v653 = vrot.slane %v644, %v652
        %v656 = vmul.f32 %v639, %v649
        %v657 = vmul.f32 %v641, %v653
        %v658 = vmul.f32 %v640, %v649
        %v659 = vmul.f32 %v642, %v653
        %v664 = vrot.slane %v656, 4
        %v665 = vrot.slane %v657, 4
        %v666 = vrot.slane %v658, 4
        %v667 = vsel %vm430, %v664, %v666
        %v668 = vrot.slane %v659, 4
        %v669 = vsel %vm430, %v665, %v668
        %674 = vst [vmem:[#allocation2 + $0xa0] sm:$0xf0] %v664
        %675 = vst [vmem:[#allocation2 + $0xa8] sm:$0xf0] %v665
        %676 = vst [vmem:[#allocation2 + $0xb0] sm:$0xff] %v667
        %677 = vst [vmem:[#allocation2 + $0xb8] sm:$0xff] %v669
        %678 = vrot.lane.b32.xlu0 %v357, 111
        %v679 = vpop.permute.xlu0 %678
        %680 = vrot.lane.b32.xlu0 %v359, 111
        %v681 = vpop.permute.xlu0 %680
        %682 = vrot.lane.b32.xlu0 %v358, 111
        %v683 = vpop.permute.xlu0 %682
        %684 = vrot.lane.b32.xlu0 %v360, 111
        %v685 = vpop.permute.xlu0 %684
        %vm686 = vcmp.lt.s32.totalorder %v370, 111
        %v687 = vsel %vm686, %v679, %v683
        %v688 = vsel %vm686, %v681, %v685
        %v689 = vsel %vm686, %v683, %v679
        %v690 = vsel %vm686, %v685, %v681
        %s691 = scalar_lea.vmem %s9, 16
        %v692 = vld [vmem:[%s691] ss:$8 sm:$0x3]
        %v694 = vlaneseq
        %v695 = vshrl.u32 %v694, 7
        %v696 = vsub.s32 0, %v695
        %v697 = vrot.slane %v692, %v696
        %v698 = vlaneseq
        %v699 = vshrl.u32 %v698, 7
        %v700 = vsub.s32 1, %v699
        %v701 = vrot.slane %v692, %v700
        %v704 = vmul.f32 %v687, %v697
        %v705 = vmul.f32 %v689, %v701
        %v706 = vmul.f32 %v688, %v697
        %v707 = vmul.f32 %v690, %v701
        %708 = vst [vmem:[#allocation2 + $0xc0] sm:$0xff] %v704
        %709 = vst [vmem:[#allocation2 + $0xc8] sm:$0xff] %v705
        %710 = vst [vmem:[#allocation2 + $0xd0] sm:$0xf] %v706
        %711 = vst [vmem:[#allocation2 + $0xd8] sm:$0xf] %v707
        %v712 = vld [vmem:[%s1] sm:$0xff]
        %v713 = vld [vmem:[%s1 + $0x8] sm:$0xff]
        %v714 = vld [vmem:[%s1 + $0x10] sm:$0xf]
        %v715 = vld [vmem:[#allocation2] sm:$0xff]
        %v716 = vld [vmem:[#allocation2 + $0x8] sm:$0xff]
        %v717 = vld [vmem:[#allocation2 + $0x10] sm:$0xff]
        %v718 = vld [vmem:[#allocation2 + $0x18] sm:$0xff]
        %v719 = vld [vmem:[#allocation2 + $0x20] sm:$0xff]
        %v720 = vld [vmem:[#allocation2 + $0x28] sm:$0xff]
        %v721 = vld [vmem:[#allocation2 + $0x30] sm:$0xff]
        %v722 = vld [vmem:[#allocation2 + $0x38] sm:$0xff]
        %v723 = vld [vmem:[#allocation2 + $0x40] sm:$0xff]
        %v724 = vld [vmem:[#allocation2 + $0x48] sm:$0xff]
        %v725 = vld [vmem:[#allocation2 + $0x50] sm:$0xff]
        %v726 = vld [vmem:[#allocation2 + $0x58] sm:$0xff]
        %v727 = vld [vmem:[#allocation2 + $0x60] sm:$0xff]
        %v728 = vld [vmem:[#allocation2 + $0x68] sm:$0xff]
        %v729 = vld [vmem:[#allocation2 + $0x70] sm:$0xff]
        %v730 = vld [vmem:[#allocation2 + $0x78] sm:$0xff]
        %v731 = vld [vmem:[#allocation2 + $0x80] sm:$0xff]
        %v732 = vld [vmem:[#allocation2 + $0x88] sm:$0xff]
        %v733 = vld [vmem:[#allocation2 + $0x90] sm:$0xff]
        %v734 = vld [vmem:[#allocation2 + $0x98] sm:$0xff]
        %v735 = vld [vmem:[#allocation2 + $0xa0] sm:$0xff]
        %v736 = vld [vmem:[#allocation2 + $0xa8] sm:$0xff]
        %v737 = vld [vmem:[#allocation2 + $0xb0] sm:$0xff]
        %v738 = vld [vmem:[#allocation2 + $0xb8] sm:$0xff]
        %v739 = vld [vmem:[#allocation2 + $0xc0] sm:$0xff]
        %v740 = vld [vmem:[#allocation2 + $0xc8] sm:$0xff]
        %v741 = vld [vmem:[#allocation2 + $0xd0] sm:$0xf]
        %v742 = vld [vmem:[#allocation2 + $0xd8] sm:$0xf]
        %vm743 = vcmask 883712
        %v745 = vsel %vm743, %v712, 0
        %v748 = vsel %vm743, %v713, 0
        %v751 = vsel %vm743, %v714, 0
        %v754 = vsel %vm430, %v741, 0
        %v757 = vsel %vm430, %v742, 0
        %759 = vmatprep.subr.mxu0 %v716
        %760 = vmatpush1.msra.mxu0 %v715
        %761 = vmatprep.subr.mxu0 %v718
        %762 = vmatpush1.msra.mxu0 %v717
        %763 = vmatprep.subr.mxu0 %v720
        %764 = vmatpush1.msra.mxu0 %v719
        %765 = vmatprep.subr.mxu0 %v722
        %766 = vmatpush1.msra.mxu0 %v721
        %767 = vmatprep.subr.mxu0 %v724
        %768 = vmatpush1.msra.mxu0 %v723
        %769 = vmatprep.subr.mxu0 %v726
        %770 = vmatpush1.msra.mxu0 %v725
        %771 = vmatprep.subr.mxu0 %v728
        %772 = vmatpush1.msra.mxu0 %v727
        %773 = vmatprep.subr.mxu0 %v730
        %774 = vmatpush1.msra.mxu0 %v729
        %775 = vmatprep.subr.mxu0 %v732
        %776 = vmatpush1.msra.mxu0 %v731
        %777 = vmatprep.subr.mxu0 %v734
        %778 = vmatpush1.msra.mxu0 %v733
        %779 = vmatprep.subr.mxu0 %v736
        %780 = vmatpush1.msra.mxu0 %v735
        %781 = vmatprep.subr.mxu0 %v738
        %782 = vmatpush1.msra.mxu0 %v737
        %783 = vmatprep.subr.mxu0 %v740
        %784 = vmatpush1.msra.mxu0 %v739
        %785 = vmatprep.subr.mxu0 %v757
        %786 = vmatpush1.msra.mxu0 %v754
        %787 = vmatprep.subr.mxu0 0.0
        %788 = vmatpush1.msra.mxu0 0.0
        %789 = vmatprep.subr.mxu0 0.0
        %790 = vmatpush1.msra.mxu0 0.0
        %791 = vmatprep.subr.mxu0 0.0
        %792 = vmatpush1.msra.mxu0 0.0
        %793 = vmatprep.subr.mxu0 0.0
        %794 = vmatpush1.msra.mxu0 0.0
        %795 = vmatprep.subr.mxu0 0.0
        %796 = vmatpush1.msra.mxu0 0.0
        %797 = vmatprep.subr.mxu0 0.0
        %798 = vmatpush1.msra.mxu0 0.0
        %799 = vmatprep.subr.mxu0 0.0
        %800 = vmatpush1.msra.mxu0 0.0
        %801 = vmatprep.subr.mxu0 0.0
        %802 = vmatpush1.msra.mxu0 0.0
        %803 = vmatprep.subr.mxu0 0.0
        %804 = vmatpush1.msra.mxu0 0.0
        %805 = vmatprep.subr.mxu0 0.0
        %806 = vmatpush1.msra.mxu0 0.0
        %807 = vmatprep.subr.mxu0 0.0
        %808 = vmatpush1.msra.mxu0 0.0
        %809 = vmatprep.subr.mxu0 0.0
        %810 = vmatpush1.msra.mxu0 0.0
        %811 = vmatprep.subr.mxu0 0.0
        %812 = vmatpush1.msra.mxu0 0.0
        %813 = vmatprep.subr.mxu0 0.0
        %814 = vmatpush1.msra.mxu0 0.0
        %815 = vmatprep.subr.mxu0 0.0
        %816 = vmatpush1.msra.mxu0 0.0
        %817 = vmatprep.subr.mxu0 0.0
        %818 = vmatpush1.msra.mxu0 0.0
        %819 = vmatprep.subr.mxu0 0.0
        %820 = vmatpush1.msra.mxu0 0.0
        %821 = vmatprep.subr.mxu0 0.0
        %822 = vmatpush1.msra.mxu0 0.0
        %823 = vmatprep.mubr.f32.mxu0 0.0
        %824 = vmatmul.mubr.f32.gmra.mrb[0].mxu0 %v745
        %v825 = vpop.f32.mrb[0].mxu0
        %v826 = vadd.f32 0.0, %v825
        %v827 = vpop.f32.mrb[0].mxu0
        %v828 = vadd.f32 0.0, %v827
        %829 = vmatprep.mubr.f32.mxu0 0.0
        %830 = vmatmul.mubr.f32.gmra.mrb[0].mxu0 %v748
        %v831 = vpop.f32.mrb[0].mxu0
        %v832 = vadd.f32 0.0, %v831
        %v833 = vpop.f32.mrb[0].mxu0
        %v834 = vadd.f32 0.0, %v833
        %835 = vmatprep.mubr.f32.mxu0 0.0
        %836 = vmatmul.mubr.f32.gmra.mrb[0].mxu0 %v751
        %v837 = vpop.f32.mrb[0].mxu0
        %v838 = vadd.f32 0.0, %v837
        %v839 = vpop.f32.mrb[0].mxu0
        %v840 = vadd.f32 0.0, %v839
        %841 = vdwg.mxu0
        %v842 = vld [vmem:[%s2] sm:$0xff]
        %v843 = vld [vmem:[%s2 + $0x8] sm:$0xff]
        %v844 = vld [vmem:[%s2 + $0x10] sm:$0xf]
        %846 = vset.pattern.permute.xlu0 0
        %847 = vperm.xlu0 %846, %v842
        %v848 = vpop.permute.xlu0 %847
        %851 = vset.pattern.permute.xlu0 0
        %852 = vperm.xlu0 %851, %v843
        %v853 = vpop.permute.xlu0 %852
        %856 = vset.pattern.permute.xlu0 0
        %857 = vperm.xlu0 %856, %v844
        %v858 = vpop.permute.xlu0 %857
        %v860 = vmul.f32 %v826, %v848
        %v861 = vmul.f32 %v828, %v848
        %v862 = vmul.f32 %v832, %v853
        %v863 = vmul.f32 %v834, %v853
        %v864 = vmul.f32 %v838, %v858
        %v865 = vmul.f32 %v840, %v858
        %v866 = vld [vmem:[%s3] sm:$0xff]
        %v867 = vld [vmem:[%s3 + $0x8] sm:$0xff]
        %v868 = vld [vmem:[%s3 + $0x10] sm:$0xf]
        %870 = vset.pattern.permute.xlu0 0
        %871 = vperm.xlu0 %870, %v866
        %v872 = vpop.permute.xlu0 %871
        %875 = vset.pattern.permute.xlu0 0
        %876 = vperm.xlu0 %875, %v867
        %v877 = vpop.permute.xlu0 %876
        %880 = vset.pattern.permute.xlu0 0
        %881 = vperm.xlu0 %880, %v868
        %v882 = vpop.permute.xlu0 %881
        %v884 = vadd.f32 %v860, %v872
        %v885 = vadd.f32 %v861, %v872
        %v886 = vadd.f32 %v862, %v877
        %v887 = vadd.f32 %v863, %v877
        %v888 = vadd.f32 %v864, %v882
        %v889 = vadd.f32 %v865, %v882
        %v890 = vmax.f32 %v884, 0.0
        %v891 = vmax.f32 %v885, 0.0
        %v892 = vmax.f32 %v886, 0.0
        %v893 = vmax.f32 %v887, 0.0
        %v894 = vmax.f32 %v888, 0.0
        %v895 = vmax.f32 %v889, 0.0
        %896 = vrot.lane.b32.xlu0 %v890, 17
        %v897 = vpop.permute.xlu0 %896
        %898 = vrot.lane.b32.xlu0 %v892, 17
        %v899 = vpop.permute.xlu0 %898
        %900 = vrot.lane.b32.xlu0 %v894, 17
        %v901 = vpop.permute.xlu0 %900
        %902 = vrot.lane.b32.xlu0 %v891, 17
        %v903 = vpop.permute.xlu0 %902
        %904 = vrot.lane.b32.xlu0 %v893, 17
        %v905 = vpop.permute.xlu0 %904
        %906 = vrot.lane.b32.xlu0 %v895, 17
        %v907 = vpop.permute.xlu0 %906
        %v908 = vsel %vm371, %v897, %v903
        %v909 = vsel %vm371, %v899, %v905
        %v910 = vsel %vm371, %v901, %v907
        %v911 = vsel %vm371, %v903, %v897
        %v912 = vsel %vm371, %v905, %v899
        %v913 = vsel %vm371, %v907, %v901
        %v914 = vld [vmem:[%s9] ss:$8 sm:$0x3]
        %v916 = vlaneseq
        %v917 = vshrl.u32 %v916, 7
        %v918 = vsub.s32 0, %v917
        %v919 = vrot.slane %v914, %v918
        %v920 = vlaneseq
        %v921 = vshrl.u32 %v920, 7
        %v922 = vsub.s32 1, %v921
        %v923 = vrot.slane %v914, %v922
        %v926 = vmul.f32 %v911, %v919
        %v927 = vmul.f32 %v908, %v923
        %v928 = vmul.f32 %v912, %v919
        %v929 = vmul.f32 %v909, %v923
        %v930 = vmul.f32 %v913, %v919
        %v931 = vmul.f32 %v910, %v923
        %932 = vst [vmem:[#allocation3] sm:$0xff] %v926
        %933 = vst [vmem:[#allocation3 + $0x8] sm:$0xff] %v927
        %934 = vst [vmem:[#allocation3 + $0x10] sm:$0xff] %v928
        %935 = vst [vmem:[#allocation3 + $0x18] sm:$0xff] %v929
        %936 = vst [vmem:[#allocation3 + $0x20] sm:$0xf] %v930
        %937 = vst [vmem:[#allocation3 + $0x28] sm:$0xf] %v931
        %938 = vrot.lane.b32.xlu0 %v890, 16
        %v939 = vpop.permute.xlu0 %938
        %940 = vrot.lane.b32.xlu0 %v892, 16
        %v941 = vpop.permute.xlu0 %940
        %942 = vrot.lane.b32.xlu0 %v894, 16
        %v943 = vpop.permute.xlu0 %942
        %944 = vrot.lane.b32.xlu0 %v891, 16
        %v945 = vpop.permute.xlu0 %944
        %946 = vrot.lane.b32.xlu0 %v893, 16
        %v947 = vpop.permute.xlu0 %946
        %948 = vrot.lane.b32.xlu0 %v895, 16
        %v949 = vpop.permute.xlu0 %948
        %v950 = vsel %vm404, %v939, %v945
        %v951 = vsel %vm404, %v941, %v947
        %v952 = vsel %vm404, %v943, %v949
        %v953 = vsel %vm404, %v945, %v939
        %v954 = vsel %vm404, %v947, %v941
        %v955 = vsel %vm404, %v949, %v943
        %v956 = vld [vmem:[%s409] ss:$8 sm:$0x3]
        %v958 = vlaneseq
        %v959 = vshrl.u32 %v958, 7
        %v960 = vsub.s32 0, %v959
        %v961 = vrot.slane %v956, %v960
        %v962 = vlaneseq
        %v963 = vshrl.u32 %v962, 7
        %v964 = vsub.s32 1, %v963
        %v965 = vrot.slane %v956, %v964
        %v968 = vmul.f32 %v953, %v961
        %v969 = vmul.f32 %v950, %v965
        %v970 = vmul.f32 %v954, %v961
        %v971 = vmul.f32 %v951, %v965
        %v972 = vmul.f32 %v955, %v961
        %v973 = vmul.f32 %v952, %v965
        %v980 = vrot.slane %v968, 4
        %v981 = vrot.slane %v969, 4
        %v982 = vrot.slane %v970, 4
        %v983 = vsel %vm430, %v980, %v982
        %v984 = vrot.slane %v971, 4
        %v985 = vsel %vm430, %v981, %v984
        %v986 = vrot.slane %v972, 4
        %v987 = vsel %vm430, %v982, %v986
        %v988 = vrot.slane %v973, 4
        %v989 = vsel %vm430, %v984, %v988
        %996 = vst [vmem:[#allocation3 + $0x20] sm:$0xf0] %v980
        %997 = vst [vmem:[#allocation3 + $0x28] sm:$0xf0] %v981
        %998 = vst [vmem:[#allocation3 + $0x30] sm:$0xff] %v983
        %999 = vst [vmem:[#allocation3 + $0x38] sm:$0xff] %v985
        %1000 = vst [vmem:[#allocation3 + $0x40] sm:$0xff] %v987
        %1001 = vst [vmem:[#allocation3 + $0x48] sm:$0xff] %v989
        %1002 = vrot.lane.b32.xlu0 %v890, 15
        %v1003 = vpop.permute.xlu0 %1002
        %1004 = vrot.lane.b32.xlu0 %v892, 15
        %v1005 = vpop.permute.xlu0 %1004
        %1006 = vrot.lane.b32.xlu0 %v894, 15
        %v1007 = vpop.permute.xlu0 %1006
        %1008 = vrot.lane.b32.xlu0 %v891, 15
        %v1009 = vpop.permute.xlu0 %1008
        %1010 = vrot.lane.b32.xlu0 %v893, 15
        %v1011 = vpop.permute.xlu0 %1010
        %1012 = vrot.lane.b32.xlu0 %v895, 15
        %v1013 = vpop.permute.xlu0 %1012
        %v1014 = vsel %vm453, %v1003, %v1009
        %v1015 = vsel %vm453, %v1005, %v1011
        %v1016 = vsel %vm453, %v1007, %v1013
        %v1017 = vsel %vm453, %v1009, %v1003
        %v1018 = vsel %vm453, %v1011, %v1005
        %v1019 = vsel %vm453, %v1013, %v1007
        %v1020 = vld [vmem:[%s458] ss:$8 sm:$0x3]
        %v1022 = vlaneseq
        %v1023 = vshrl.u32 %v1022, 7
        %v1024 = vsub.s32 0, %v1023
        %v1025 = vrot.slane %v1020, %v1024
        %v1026 = vlaneseq
        %v1027 = vshrl.u32 %v1026, 7
        %v1028 = vsub.s32 1, %v1027
        %v1029 = vrot.slane %v1020, %v1028
        %v1032 = vmul.f32 %v1017, %v1025
        %v1033 = vmul.f32 %v1014, %v1029
        %v1034 = vmul.f32 %v1018, %v1025
        %v1035 = vmul.f32 %v1015, %v1029
        %v1036 = vmul.f32 %v1019, %v1025
        %v1037 = vmul.f32 %v1016, %v1029
        %1038 = vst [vmem:[#allocation3 + $0x50] sm:$0xff] %v1032
        %1039 = vst [vmem:[#allocation3 + $0x58] sm:$0xff] %v1033
        %1040 = vst [vmem:[#allocation3 + $0x60] sm:$0xff] %v1034
        %1041 = vst [vmem:[#allocation3 + $0x68] sm:$0xff] %v1035
        %1042 = vst [vmem:[#allocation3 + $0x70] sm:$0xf] %v1036
        %1043 = vst [vmem:[#allocation3 + $0x78] sm:$0xf] %v1037
        %1044 = vrot.lane.b32.xlu0 %v890, 1
        %v1045 = vpop.permute.xlu0 %1044
        %1046 = vrot.lane.b32.xlu0 %v892, 1
        %v1047 = vpop.permute.xlu0 %1046
        %1048 = vrot.lane.b32.xlu0 %v894, 1
        %v1049 = vpop.permute.xlu0 %1048
        %1050 = vrot.lane.b32.xlu0 %v891, 1
        %v1051 = vpop.permute.xlu0 %1050
        %1052 = vrot.lane.b32.xlu0 %v893, 1
        %v1053 = vpop.permute.xlu0 %1052
        %1054 = vrot.lane.b32.xlu0 %v895, 1
        %v1055 = vpop.permute.xlu0 %1054
        %v1056 = vsel %vm487, %v1045, %v1051
        %v1057 = vsel %vm487, %v1047, %v1053
        %v1058 = vsel %vm487, %v1049, %v1055
        %v1059 = vsel %vm487, %v1051, %v1045
        %v1060 = vsel %vm487, %v1053, %v1047
        %v1061 = vsel %vm487, %v1055, %v1049
        %v1062 = vld [vmem:[%s492] ss:$8 sm:$0x3]
        %v1064 = vlaneseq
        %v1065 = vshrl.u32 %v1064, 7
        %v1066 = vsub.s32 0, %v1065
        %v1067 = vrot.slane %v1062, %v1066
        %v1068 = vlaneseq
        %v1069 = vshrl.u32 %v1068, 7
        %v1070 = vsub.s32 1, %v1069
        %v1071 = vrot.slane %v1062, %v1070
        %v1074 = vmul.f32 %v1059, %v1067
        %v1075 = vmul.f32 %v1056, %v1071
        %v1076 = vmul.f32 %v1060, %v1067
        %v1077 = vmul.f32 %v1057, %v1071
        %v1078 = vmul.f32 %v1061, %v1067
        %v1079 = vmul.f32 %v1058, %v1071
        %v1086 = vrot.slane %v1074, 4
        %v1087 = vrot.slane %v1075, 4
        %v1088 = vrot.slane %v1076, 4
        %v1089 = vsel %vm430, %v1086, %v1088
        %v1090 = vrot.slane %v1077, 4
        %v1091 = vsel %vm430, %v1087, %v1090
        %v1092 = vrot.slane %v1078, 4
        %v1093 = vsel %vm430, %v1088, %v1092
        %v1094 = vrot.slane %v1079, 4
        %v1095 = vsel %vm430, %v1090, %v1094
        %1102 = vst [vmem:[#allocation3 + $0x70] sm:$0xf0] %v1086
        %1103 = vst [vmem:[#allocation3 + $0x78] sm:$0xf0] %v1087
        %1104 = vst [vmem:[#allocation3 + $0x80] sm:$0xff] %v1089
        %1105 = vst [vmem:[#allocation3 + $0x88] sm:$0xff] %v1091
        %1106 = vst [vmem:[#allocation3 + $0x90] sm:$0xff] %v1093
        %1107 = vst [vmem:[#allocation3 + $0x98] sm:$0xff] %v1095
        %v1108 = vld [vmem:[%s527] ss:$8 sm:$0x3]
        %v1110 = vlaneseq
        %v1111 = vshrl.u32 %v1110, 7
        %v1112 = vsub.s32 0, %v1111
        %v1113 = vrot.slane %v1108, %v1112
        %v1114 = vlaneseq
        %v1115 = vshrl.u32 %v1114, 7
        %v1116 = vsub.s32 1, %v1115
        %v1117 = vrot.slane %v1108, %v1116
        %v1120 = vmul.f32 %v890, %v1113
        %v1121 = vmul.f32 %v891, %v1117
        %v1122 = vmul.f32 %v892, %v1113
        %v1123 = vmul.f32 %v893, %v1117
        %v1124 = vmul.f32 %v894, %v1113
        %v1125 = vmul.f32 %v895, %v1117
        %1126 = vst [vmem:[#allocation3 + $0xa0] sm:$0xff] %v1120
        %1127 = vst [vmem:[#allocation3 + $0xa8] sm:$0xff] %v1121
        %1128 = vst [vmem:[#allocation3 + $0xb0] sm:$0xff] %v1122
        %1129 = vst [vmem:[#allocation3 + $0xb8] sm:$0xff] %v1123
        %1130 = vst [vmem:[#allocation3 + $0xc0] sm:$0xf] %v1124
        %1131 = vst [vmem:[#allocation3 + $0xc8] sm:$0xf] %v1125
        %1132 = vrot.lane.b32.xlu0 %v890, 127
        %v1133 = vpop.permute.xlu0 %1132
        %1134 = vrot.lane.b32.xlu0 %v892, 127
        %v1135 = vpop.permute.xlu0 %1134
        %1136 = vrot.lane.b32.xlu0 %v894, 127
        %v1137 = vpop.permute.xlu0 %1136
        %1138 = vrot.lane.b32.xlu0 %v891, 127
        %v1139 = vpop.permute.xlu0 %1138
        %1140 = vrot.lane.b32.xlu0 %v893, 127
        %v1141 = vpop.permute.xlu0 %1140
        %1142 = vrot.lane.b32.xlu0 %v895, 127
        %v1143 = vpop.permute.xlu0 %1142
        %v1144 = vsel %vm556, %v1133, %v1139
        %v1145 = vsel %vm556, %v1135, %v1141
        %v1146 = vsel %vm556, %v1137, %v1143
        %v1147 = vsel %vm556, %v1139, %v1133
        %v1148 = vsel %vm556, %v1141, %v1135
        %v1149 = vsel %vm556, %v1143, %v1137
        %v1150 = vld [vmem:[%s561] ss:$8 sm:$0x3]
        %v1152 = vlaneseq
        %v1153 = vshrl.u32 %v1152, 7
        %v1154 = vsub.s32 0, %v1153
        %v1155 = vrot.slane %v1150, %v1154
        %v1156 = vlaneseq
        %v1157 = vshrl.u32 %v1156, 7
        %v1158 = vsub.s32 1, %v1157
        %v1159 = vrot.slane %v1150, %v1158
        %v1162 = vmul.f32 %v1144, %v1155
        %v1163 = vmul.f32 %v1147, %v1159
        %v1164 = vmul.f32 %v1145, %v1155
        %v1165 = vmul.f32 %v1148, %v1159
        %v1166 = vmul.f32 %v1146, %v1155
        %v1167 = vmul.f32 %v1149, %v1159
        %v1174 = vrot.slane %v1162, 4
        %v1175 = vrot.slane %v1163, 4
        %v1176 = vrot.slane %v1164, 4
        %v1177 = vsel %vm430, %v1174, %v1176
        %v1178 = vrot.slane %v1165, 4
        %v1179 = vsel %vm430, %v1175, %v1178
        %v1180 = vrot.slane %v1166, 4
        %v1181 = vsel %vm430, %v1176, %v1180
        %v1182 = vrot.slane %v1167, 4
        %v1183 = vsel %vm430, %v1178, %v1182
        %1190 = vst [vmem:[#allocation3 + $0xc0] sm:$0xf0] %v1174
        %1191 = vst [vmem:[#allocation3 + $0xc8] sm:$0xf0] %v1175
        %1192 = vst [vmem:[#allocation3 + $0xd0] sm:$0xff] %v1177
        %1193 = vst [vmem:[#allocation3 + $0xd8] sm:$0xff] %v1179
        %1194 = vst [vmem:[#allocation3 + $0xe0] sm:$0xff] %v1181
        %1195 = vst [vmem:[#allocation3 + $0xe8] sm:$0xff] %v1183
        %1196 = vrot.lane.b32.xlu0 %v890, 113
        %v1197 = vpop.permute.xlu0 %1196
        %1198 = vrot.lane.b32.xlu0 %v892, 113
        %v1199 = vpop.permute.xlu0 %1198
        %1200 = vrot.lane.b32.xlu0 %v894, 113
        %v1201 = vpop.permute.xlu0 %1200
        %1202 = vrot.lane.b32.xlu0 %v891, 113
        %v1203 = vpop.permute.xlu0 %1202
        %1204 = vrot.lane.b32.xlu0 %v893, 113
        %v1205 = vpop.permute.xlu0 %1204
        %1206 = vrot.lane.b32.xlu0 %v895, 113
        %v1207 = vpop.permute.xlu0 %1206
        %v1208 = vsel %vm604, %v1197, %v1203
        %v1209 = vsel %vm604, %v1199, %v1205
        %v1210 = vsel %vm604, %v1201, %v1207
        %v1211 = vsel %vm604, %v1203, %v1197
        %v1212 = vsel %vm604, %v1205, %v1199
        %v1213 = vsel %vm604, %v1207, %v1201
        %v1214 = vld [vmem:[%s609] ss:$8 sm:$0x3]
        %v1216 = vlaneseq
        %v1217 = vshrl.u32 %v1216, 7
        %v1218 = vsub.s32 0, %v1217
        %v1219 = vrot.slane %v1214, %v1218
        %v1220 = vlaneseq
        %v1221 = vshrl.u32 %v1220, 7
        %v1222 = vsub.s32 1, %v1221
        %v1223 = vrot.slane %v1214, %v1222
        %v1226 = vmul.f32 %v1208, %v1219
        %v1227 = vmul.f32 %v1211, %v1223
        %v1228 = vmul.f32 %v1209, %v1219
        %v1229 = vmul.f32 %v1212, %v1223
        %v1230 = vmul.f32 %v1210, %v1219
        %v1231 = vmul.f32 %v1213, %v1223
        %1232 = vst [vmem:[#allocation3 + $0xf0] sm:$0xff] %v1226
        %1233 = vst [vmem:[#allocation3 + $0xf8] sm:$0xff] %v1227
        %1234 = vst [vmem:[#allocation3 + $0x100] sm:$0xff] %v1228
        %1235 = vst [vmem:[#allocation3 + $0x108] sm:$0xff] %v1229
        %1236 = vst [vmem:[#allocation3 + $0x110] sm:$0xf] %v1230
        %1237 = vst [vmem:[#allocation3 + $0x118] sm:$0xf] %v1231
        %1238 = vrot.lane.b32.xlu0 %v890, 112
        %v1239 = vpop.permute.xlu0 %1238
        %1240 = vrot.lane.b32.xlu0 %v892, 112
        %v1241 = vpop.permute.xlu0 %1240
        %1242 = vrot.lane.b32.xlu0 %v894, 112
        %v1243 = vpop.permute.xlu0 %1242
        %1244 = vrot.lane.b32.xlu0 %v891, 112
        %v1245 = vpop.permute.xlu0 %1244
        %1246 = vrot.lane.b32.xlu0 %v893, 112
        %v1247 = vpop.permute.xlu0 %1246
        %1248 = vrot.lane.b32.xlu0 %v895, 112
        %v1249 = vpop.permute.xlu0 %1248
        %v1250 = vsel %vm638, %v1239, %v1245
        %v1251 = vsel %vm638, %v1241, %v1247
        %v1252 = vsel %vm638, %v1243, %v1249
        %v1253 = vsel %vm638, %v1245, %v1239
        %v1254 = vsel %vm638, %v1247, %v1241
        %v1255 = vsel %vm638, %v1249, %v1243
        %v1256 = vld [vmem:[%s643] ss:$8 sm:$0x3]
        %v1258 = vlaneseq
        %v1259 = vshrl.u32 %v1258, 7
        %v1260 = vsub.s32 0, %v1259
        %v1261 = vrot.slane %v1256, %v1260
        %v1262 = vlaneseq
        %v1263 = vshrl.u32 %v1262, 7
        %v1264 = vsub.s32 1, %v1263
        %v1265 = vrot.slane %v1256, %v1264
        %v1268 = vmul.f32 %v1250, %v1261
        %v1269 = vmul.f32 %v1253, %v1265
        %v1270 = vmul.f32 %v1251, %v1261
        %v1271 = vmul.f32 %v1254, %v1265
        %v1272 = vmul.f32 %v1252, %v1261
        %v1273 = vmul.f32 %v1255, %v1265
        %v1280 = vrot.slane %v1268, 4
        %v1281 = vrot.slane %v1269, 4
        %v1282 = vrot.slane %v1270, 4
        %v1283 = vsel %vm430, %v1280, %v1282
        %v1284 = vrot.slane %v1271, 4
        %v1285 = vsel %vm430, %v1281, %v1284
        %v1286 = vrot.slane %v1272, 4
        %v1287 = vsel %vm430, %v1282, %v1286
        %v1288 = vrot.slane %v1273, 4
        %v1289 = vsel %vm430, %v1284, %v1288
        %1296 = vst [vmem:[#allocation3 + $0x110] sm:$0xf0] %v1280
        %1297 = vst [vmem:[#allocation3 + $0x118] sm:$0xf0] %v1281
        %1298 = vst [vmem:[#allocation3 + $0x120] sm:$0xff] %v1283
        %1299 = vst [vmem:[#allocation3 + $0x128] sm:$0xff] %v1285
        %1300 = vst [vmem:[#allocation3 + $0x130] sm:$0xff] %v1287
        %1301 = vst [vmem:[#allocation3 + $0x138] sm:$0xff] %v1289
        %1302 = vrot.lane.b32.xlu0 %v890, 111
        %v1303 = vpop.permute.xlu0 %1302
        %1304 = vrot.lane.b32.xlu0 %v892, 111
        %v1305 = vpop.permute.xlu0 %1304
        %1306 = vrot.lane.b32.xlu0 %v894, 111
        %v1307 = vpop.permute.xlu0 %1306
        %1308 = vrot.lane.b32.xlu0 %v891, 111
        %v1309 = vpop.permute.xlu0 %1308
        %1310 = vrot.lane.b32.xlu0 %v893, 111
        %v1311 = vpop.permute.xlu0 %1310
        %1312 = vrot.lane.b32.xlu0 %v895, 111
        %v1313 = vpop.permute.xlu0 %1312
        %v1314 = vsel %vm686, %v1303, %v1309
        %v1315 = vsel %vm686, %v1305, %v1311
        %v1316 = vsel %vm686, %v1307, %v1313
        %v1317 = vsel %vm686, %v1309, %v1303
        %v1318 = vsel %vm686, %v1311, %v1305
        %v1319 = vsel %vm686, %v1313, %v1307
        %v1320 = vld [vmem:[%s691] ss:$8 sm:$0x3]
        %v1322 = vlaneseq
        %v1323 = vshrl.u32 %v1322, 7
        %v1324 = vsub.s32 0, %v1323
        %v1325 = vrot.slane %v1320, %v1324
        %v1326 = vlaneseq
        %v1327 = vshrl.u32 %v1326, 7
        %v1328 = vsub.s32 1, %v1327
        %v1329 = vrot.slane %v1320, %v1328
        %v1332 = vmul.f32 %v1314, %v1325
        %v1333 = vmul.f32 %v1317, %v1329
        %v1334 = vmul.f32 %v1315, %v1325
        %v1335 = vmul.f32 %v1318, %v1329
        %v1336 = vmul.f32 %v1316, %v1325
        %v1337 = vmul.f32 %v1319, %v1329
        %1338 = vst [vmem:[#allocation3 + $0x140] sm:$0xff] %v1332
        %1339 = vst [vmem:[#allocation3 + $0x148] sm:$0xff] %v1333
        %1340 = vst [vmem:[#allocation3 + $0x150] sm:$0xff] %v1334
        %1341 = vst [vmem:[#allocation3 + $0x158] sm:$0xff] %v1335
        %1342 = vst [vmem:[#allocation3 + $0x160] sm:$0xf] %v1336
        %1343 = vst [vmem:[#allocation3 + $0x168] sm:$0xf] %v1337
        %v1344 = vld [vmem:[%s4] sm:$0xff]
        %v1345 = vld [vmem:[%s4 + $0x8] sm:$0xff]
        %v1346 = vld [vmem:[%s4 + $0x10] sm:$0xff]
        %v1347 = vld [vmem:[%s4 + $0x18] sm:$0xff]
        %v1348 = vld [vmem:[%s4 + $0x20] sm:$0xff]
        %v1349 = vld [vmem:[%s4 + $0x28] sm:$0xff]
        %v1350 = vld [vmem:[%s4 + $0x30] sm:$0xff]
        %v1351 = vld [vmem:[%s4 + $0x38] sm:$0xff]
        %v1352 = vld [vmem:[#allocation3] sm:$0xff]
        %v1353 = vld [vmem:[#allocation3 + $0x8] sm:$0xff]
        %v1354 = vld [vmem:[#allocation3 + $0x10] sm:$0xff]
        %v1355 = vld [vmem:[#allocation3 + $0x18] sm:$0xff]
        %v1356 = vld [vmem:[#allocation3 + $0x20] sm:$0xff]
        %v1357 = vld [vmem:[#allocation3 + $0x28] sm:$0xff]
        %v1358 = vld [vmem:[#allocation3 + $0x30] sm:$0xff]
        %v1359 = vld [vmem:[#allocation3 + $0x38] sm:$0xff]
        %v1360 = vld [vmem:[#allocation3 + $0x40] sm:$0xff]
        %v1361 = vld [vmem:[#allocation3 + $0x48] sm:$0xff]
        %v1362 = vld [vmem:[#allocation3 + $0x50] sm:$0xff]
        %v1363 = vld [vmem:[#allocation3 + $0x58] sm:$0xff]
        %v1364 = vld [vmem:[#allocation3 + $0x60] sm:$0xff]
        %v1365 = vld [vmem:[#allocation3 + $0x68] sm:$0xff]
        %v1366 = vld [vmem:[#allocation3 + $0x70] sm:$0xff]
        %v1367 = vld [vmem:[#allocation3 + $0x78] sm:$0xff]
        %v1368 = vld [vmem:[#allocation3 + $0x80] sm:$0xff]
        %v1369 = vld [vmem:[#allocation3 + $0x88] sm:$0xff]
        %v1370 = vld [vmem:[#allocation3 + $0x90] sm:$0xff]
        %v1371 = vld [vmem:[#allocation3 + $0x98] sm:$0xff]
        %v1372 = vld [vmem:[#allocation3 + $0xa0] sm:$0xff]
        %v1373 = vld [vmem:[#allocation3 + $0xa8] sm:$0xff]
        %v1374 = vld [vmem:[#allocation3 + $0xb0] sm:$0xff]
        %v1375 = vld [vmem:[#allocation3 + $0xb8] sm:$0xff]
        %v1376 = vld [vmem:[#allocation3 + $0xc0] sm:$0xff]
        %v1377 = vld [vmem:[#allocation3 + $0xc8] sm:$0xff]
        %v1378 = vld [vmem:[#allocation3 + $0xd0] sm:$0xff]
        %v1379 = vld [vmem:[#allocation3 + $0xd8] sm:$0xff]
        %v1380 = vld [vmem:[#allocation3 + $0xe0] sm:$0xff]
        %v1381 = vld [vmem:[#allocation3 + $0xe8] sm:$0xff]
        %v1382 = vld [vmem:[#allocation3 + $0xf0] sm:$0xff]
        %v1383 = vld [vmem:[#allocation3 + $0xf8] sm:$0xff]
        %v1384 = vld [vmem:[#allocation3 + $0x100] sm:$0xff]
        %v1385 = vld [vmem:[#allocation3 + $0x108] sm:$0xff]
        %v1386 = vld [vmem:[#allocation3 + $0x110] sm:$0xff]
        %v1387 = vld [vmem:[#allocation3 + $0x118] sm:$0xff]
        %v1388 = vld [vmem:[#allocation3 + $0x120] sm:$0xff]
        %v1389 = vld [vmem:[#allocation3 + $0x128] sm:$0xff]
        %v1390 = vld [vmem:[#allocation3 + $0x130] sm:$0xff]
        %v1391 = vld [vmem:[#allocation3 + $0x138] sm:$0xff]
        %v1392 = vld [vmem:[#allocation3 + $0x140] sm:$0xff]
        %v1393 = vld [vmem:[#allocation3 + $0x148] sm:$0xff]
        %v1394 = vld [vmem:[#allocation3 + $0x150] sm:$0xff]
        %v1395 = vld [vmem:[#allocation3 + $0x158] sm:$0xff]
        %v1396 = vld [vmem:[#allocation3 + $0x160] sm:$0xf]
        %v1397 = vld [vmem:[#allocation3 + $0x168] sm:$0xf]
        %vm1398 = vcmask 424960
        %v1400 = vsel %vm1398, %v1345, 0
        %v1403 = vsel %vm1398, %v1347, 0
        %v1406 = vsel %vm1398, %v1349, 0
        %v1409 = vsel %vm1398, %v1351, 0
        %v1412 = vsel %vm430, %v1396, 0
        %v1415 = vsel %vm430, %v1397, 0
        %1417 = vmatprep.subr.mxu0 %v1353
        %1418 = vmatpush1.msra.mxu0 %v1352
        %1419 = vmatprep.subr.mxu0 %v1355
        %1420 = vmatpush1.msra.mxu0 %v1354
        %1421 = vmatprep.subr.mxu0 %v1357
        %1422 = vmatpush1.msra.mxu0 %v1356
        %1423 = vmatprep.subr.mxu0 %v1359
        %1424 = vmatpush1.msra.mxu0 %v1358
        %1425 = vmatprep.subr.mxu0 %v1361
        %1426 = vmatpush1.msra.mxu0 %v1360
        %1427 = vmatprep.subr.mxu0 %v1363
        %1428 = vmatpush1.msra.mxu0 %v1362
        %1429 = vmatprep.subr.mxu0 %v1365
        %1430 = vmatpush1.msra.mxu0 %v1364
        %1431 = vmatprep.subr.mxu0 %v1367
        %1432 = vmatpush1.msra.mxu0 %v1366
        %1433 = vmatprep.subr.mxu0 %v1369
        %1434 = vmatpush1.msra.mxu0 %v1368
        %1435 = vmatprep.subr.mxu0 %v1371
        %1436 = vmatpush1.msra.mxu0 %v1370
        %1437 = vmatprep.subr.mxu0 %v1373
        %1438 = vmatpush1.msra.mxu0 %v1372
        %1439 = vmatprep.subr.mxu0 %v1375
        %1440 = vmatpush1.msra.mxu0 %v1374
        %1441 = vmatprep.subr.mxu0 %v1377
        %1442 = vmatpush1.msra.mxu0 %v1376
        %1443 = vmatprep.subr.mxu0 %v1379
        %1444 = vmatpush1.msra.mxu0 %v1378
        %1445 = vmatprep.subr.mxu0 %v1381
        %1446 = vmatpush1.msra.mxu0 %v1380
        %1447 = vmatprep.subr.mxu0 %v1383
        %1448 = vmatpush1.msra.mxu0 %v1382
        %1449 = vmatprep.subr.mxu0 %v1385
        %1450 = vmatpush1.msra.mxu0 %v1384
        %1451 = vmatprep.subr.mxu0 %v1387
        %1452 = vmatpush1.msra.mxu0 %v1386
        %1453 = vmatprep.subr.mxu0 %v1389
        %1454 = vmatpush1.msra.mxu0 %v1388
        %1455 = vmatprep.subr.mxu0 %v1391
        %1456 = vmatpush1.msra.mxu0 %v1390
        %1457 = vmatprep.subr.mxu0 %v1393
        %1458 = vmatpush1.msra.mxu0 %v1392
        %1459 = vmatprep.subr.mxu0 %v1395
        %1460 = vmatpush1.msra.mxu0 %v1394
        %1461 = vmatprep.subr.mxu0 %v1415
        %1462 = vmatpush1.msra.mxu0 %v1412
        %1463 = vmatprep.subr.mxu0 0.0
        %1464 = vmatpush1.msra.mxu0 0.0
        %1465 = vmatprep.subr.mxu0 0.0
        %1466 = vmatpush1.msra.mxu0 0.0
        %1467 = vmatprep.subr.mxu0 0.0
        %1468 = vmatpush1.msra.mxu0 0.0
        %1469 = vmatprep.subr.mxu0 0.0
        %1470 = vmatpush1.msra.mxu0 0.0
        %1471 = vmatprep.subr.mxu0 0.0
        %1472 = vmatpush1.msra.mxu0 0.0
        %1473 = vmatprep.subr.mxu0 0.0
        %1474 = vmatpush1.msra.mxu0 0.0
        %1475 = vmatprep.subr.mxu0 0.0
        %1476 = vmatpush1.msra.mxu0 0.0
        %1477 = vmatprep.subr.mxu0 0.0
        %1478 = vmatpush1.msra.mxu0 0.0
        %1479 = vmatprep.subr.mxu0 0.0
        %1480 = vmatpush1.msra.mxu0 0.0
        %1481 = vmatprep.mubr.f32.mxu0 %v1400
        %1482 = vmatmul.mubr.f32.gmra.mrb[0].mxu0 %v1344
        %v1483 = vpop.f32.mrb[0].mxu0
        %v1484 = vadd.f32 0.0, %v1483
        %v1485 = vpop.f32.mrb[0].mxu0
        %v1486 = vadd.f32 0.0, %v1485
        %1487 = vmatprep.mubr.f32.mxu0 %v1403
        %1488 = vmatmul.mubr.f32.gmra.mrb[0].mxu0 %v1346
        %v1489 = vpop.f32.mrb[0].mxu0
        %v1490 = vadd.f32 0.0, %v1489
        %v1491 = vpop.f32.mrb[0].mxu0
        %v1492 = vadd.f32 0.0, %v1491
        %1493 = vmatprep.mubr.f32.mxu0 %v1406
        %1494 = vmatmul.mubr.f32.gmra.mrb[0].mxu0 %v1348
        %v1495 = vpop.f32.mrb[0].mxu0
        %v1496 = vadd.f32 0.0, %v1495
        %v1497 = vpop.f32.mrb[0].mxu0
        %v1498 = vadd.f32 0.0, %v1497
        %1499 = vmatprep.mubr.f32.mxu0 %v1409
        %1500 = vmatmul.mubr.f32.gmra.mrb[0].mxu0 %v1350
        %v1501 = vpop.f32.mrb[0].mxu0
        %v1502 = vadd.f32 0.0, %v1501
        %v1503 = vpop.f32.mrb[0].mxu0
        %v1504 = vadd.f32 0.0, %v1503
        %1505 = vdwg.mxu0
        %v1506 = vld [vmem:[%s5] sm:$0xff]
        %v1507 = vld [vmem:[%s5 + $0x8] sm:$0xff]
        %v1508 = vld [vmem:[%s5 + $0x10] sm:$0xff]
        %v1509 = vld [vmem:[%s5 + $0x18] sm:$0xff]
        %1511 = vset.pattern.permute.xlu0 0
        %1512 = vperm.xlu0 %1511, %v1506
        %v1513 = vpop.permute.xlu0 %1512
        %1516 = vset.pattern.permute.xlu0 0
        %1517 = vperm.xlu0 %1516, %v1507
        %v1518 = vpop.permute.xlu0 %1517
        %1521 = vset.pattern.permute.xlu0 0
        %1522 = vperm.xlu0 %1521, %v1508
        %v1523 = vpop.permute.xlu0 %1522
        %1526 = vset.pattern.permute.xlu0 0
        %1527 = vperm.xlu0 %1526, %v1509
        %v1528 = vpop.permute.xlu0 %1527
        %v1530 = vmul.f32 %v1484, %v1513
        %v1531 = vmul.f32 %v1486, %v1513
        %v1532 = vmul.f32 %v1490, %v1518
        %v1533 = vmul.f32 %v1492, %v1518
        %v1534 = vmul.f32 %v1496, %v1523
        %v1535 = vmul.f32 %v1498, %v1523
        %v1536 = vmul.f32 %v1502, %v1528
        %v1537 = vmul.f32 %v1504, %v1528
        %v1538 = vld [vmem:[%s6] sm:$0xff]
        %v1539 = vld [vmem:[%s6 + $0x8] sm:$0xff]
        %v1540 = vld [vmem:[%s6 + $0x10] sm:$0xff]
        %v1541 = vld [vmem:[%s6 + $0x18] sm:$0xff]
        %1543 = vset.pattern.permute.xlu0 0
        %1544 = vperm.xlu0 %1543, %v1538
        %v1545 = vpop.permute.xlu0 %1544
        %1548 = vset.pattern.permute.xlu0 0
        %1549 = vperm.xlu0 %1548, %v1539
        %v1550 = vpop.permute.xlu0 %1549
        %1553 = vset.pattern.permute.xlu0 0
        %1554 = vperm.xlu0 %1553, %v1540
        %v1555 = vpop.permute.xlu0 %1554
        %1558 = vset.pattern.permute.xlu0 0
        %1559 = vperm.xlu0 %1558, %v1541
        %v1560 = vpop.permute.xlu0 %1559
        %v1562 = vadd.f32 %v1530, %v1545
        %v1563 = vadd.f32 %v1531, %v1545
        %v1564 = vadd.f32 %v1532, %v1550
        %v1565 = vadd.f32 %v1533, %v1550
        %v1566 = vadd.f32 %v1534, %v1555
        %v1567 = vadd.f32 %v1535, %v1555
        %v1568 = vadd.f32 %v1536, %v1560
        %v1569 = vadd.f32 %v1537, %v1560
        %v1570 = vmax.f32 %v1562, 0.0
        %v1571 = vmax.f32 %v1563, 0.0
        %v1572 = vmax.f32 %v1564, 0.0
        %v1573 = vmax.f32 %v1565, 0.0
        %v1574 = vmax.f32 %v1566, 0.0
        %v1575 = vmax.f32 %v1567, 0.0
        %v1576 = vmax.f32 %v1568, 0.0
        %v1577 = vmax.f32 %v1569, 0.0
        %v1578 = vld [vmem:[%s7] sm:$0xff]
        %v1579 = vld [vmem:[%s7 + $0x8] sm:$0xff]
        %v1580 = vld [vmem:[%s7 + $0x10] sm:$0xff]
        %v1581 = vld [vmem:[%s7 + $0x18] sm:$0xff]
        %v1582 = vld [vmem:[%s7 + $0x20] sm:$0xff]
        %v1583 = vld [vmem:[%s7 + $0x28] sm:$0xff]
        %v1584 = vld [vmem:[%s7 + $0x30] sm:$0xff]
        %v1585 = vld [vmem:[%s7 + $0x38] sm:$0xff]
        %v1586 = vmul.f32 %v1570, %v1578
        %v1587 = vmul.f32 %v1571, %v1579
        %v1588 = vmul.f32 %v1572, %v1580
        %v1589 = vmul.f32 %v1573, %v1581
        %v1590 = vmul.f32 %v1574, %v1582
        %v1591 = vmul.f32 %v1575, %v1583
        %v1592 = vmul.f32 %v1576, %v1584
        %v1593 = vmul.f32 %v1577, %v1585
        %v1594 = vadd.f32 %v1586, %v1587
        %1595 = vadd.xlane.f32.xlu0 %v1594
        %v1596 = vpop.xlane.xlu0 %1595
        %v1597 = vadd.f32 %v1588, %v1589
        %1598 = vadd.xlane.f32.xlu0 %v1597
        %v1599 = vpop.xlane.xlu0 %1598
        %v1600 = vadd.f32 %v1590, %v1591
        %1601 = vadd.xlane.f32.xlu0 %v1600
        %v1602 = vpop.xlane.xlu0 %1601
        %v1603 = vadd.f32 %v1592, %v1593
        %1604 = vadd.xlane.f32.xlu0 %v1603
        %v1605 = vpop.xlane.xlu0 %1604
        %v1606 = vadd.f32 %v1596, %v1599
        %v1607 = vadd.f32 %v1606, %v1602
        %v1608 = vadd.f32 %v1607, %v1605
        %v1609 = vrot.slane %v1608, 4
        %v1610 = vadd.f32 %v1608, %v1609
        %v1611 = vrot.slane %v1610, 2
        %v1612 = vadd.f32 %v1610, %v1611
        %v1613 = vrot.slane %v1612, 1
        %v1614 = vadd.f32 %v1612, %v1613
        %s1615 = scalar_lea.vmem %s7, 64
        %v1616 = vld [vmem:[%s1615] sm:$0xff]
        %v1617 = vld [vmem:[%s1615 + $0x8] sm:$0xff]
        %v1618 = vld [vmem:[%s1615 + $0x10] sm:$0xff]
        %v1619 = vld [vmem:[%s1615 + $0x18] sm:$0xff]
        %v1620 = vld [vmem:[%s1615 + $0x20] sm:$0xff]
        %v1621 = vld [vmem:[%s1615 + $0x28] sm:$0xff]
        %v1622 = vld [vmem:[%s1615 + $0x30] sm:$0xff]
        %v1623 = vld [vmem:[%s1615 + $0x38] sm:$0xff]
        %v1624 = vmul.f32 %v1570, %v1616
        %v1625 = vmul.f32 %v1571, %v1617
        %v1626 = vmul.f32 %v1572, %v1618
        %v1627 = vmul.f32 %v1573, %v1619
        %v1628 = vmul.f32 %v1574, %v1620
        %v1629 = vmul.f32 %v1575, %v1621
        %v1630 = vmul.f32 %v1576, %v1622
        %v1631 = vmul.f32 %v1577, %v1623
        %v1632 = vadd.f32 %v1624, %v1625
        %1633 = vadd.xlane.f32.xlu0 %v1632
        %v1634 = vpop.xlane.xlu0 %1633
        %v1635 = vadd.f32 %v1626, %v1627
        %1636 = vadd.xlane.f32.xlu0 %v1635
        %v1637 = vpop.xlane.xlu0 %1636
        %v1638 = vadd.f32 %v1628, %v1629
        %1639 = vadd.xlane.f32.xlu0 %v1638
        %v1640 = vpop.xlane.xlu0 %1639
        %v1641 = vadd.f32 %v1630, %v1631
        %1642 = vadd.xlane.f32.xlu0 %v1641
        %v1643 = vpop.xlane.xlu0 %1642
        %v1644 = vadd.f32 %v1634, %v1637
        %v1645 = vadd.f32 %v1644, %v1640
        %v1646 = vadd.f32 %v1645, %v1643
        %v1647 = vrot.slane %v1646, 4
        %v1648 = vadd.f32 %v1646, %v1647
        %v1649 = vrot.slane %v1648, 2
        %v1650 = vadd.f32 %v1648, %v1649
        %v1651 = vrot.slane %v1650, 1
        %v1652 = vadd.f32 %v1650, %v1651
        %vm1653 = vcmask 7168
        %v1654 = vsel %vm1653, %v1614, %v1652
        %v1655 = vld [vmem:[%s8] sm:$0x1]
        %v1656 = vadd.f32 %v1654, %v1655
        %vm1657 = vcmask 8192
        %1658 = vst.msk [vmem:[%s351] sm:$0x1] %vm1657, %v1656
        %s1659 = sand.u32 %s247, 1
        %s1660 = scalar_lea.sflag [#allocation5], %s1659
        %s1661 = sand.u32 %s247, 1
        %s1662 = scalar_lea.vmem [#allocation4], %s1661
        // Predicated region
        $region61: #{classify_forward.3} parent=59 // pred_check
          %p1663 = pneg %p257
        $region62: #{classify_forward.3} parent=59 // pred_check_branch
          %1665 = sbr.rel (%p1663) target = $region64
        $region63: #{classify_forward.3} parent=59 // pred_region
          %s1667 = ssub.s32 16, 16
          %1668 = vsyncadd %s1660, %s1667
          %s1669 = smul.addr %s24, 16
          %s1670 = scalar_lea.hbm %s10, %s1669
          %s1672 = sshll.u32 %s1662, 4
          %s1673 = int_to_ptr.vmem [resolvable:$true] %s1672
          %1675 = dma.vmem_to_hbm [thread:$0]  %s1673, 16, %s1670, %s1660
        $region64: #{classify_forward.3} parent=59 // pred_fallthru
          _
      $region60: #{classify_forward.3} parent=5 // pred_fallthru
        _
      %p1676 = scmp.le.s32.totalorder 2, %s19
      // Predicated region
      $region65: #{classify_forward.3} parent=5 // pred_check
        %p1677 = pneg %p1676
      $region66: #{classify_forward.3} parent=5 // pred_check_branch
        %1679 = sbr.rel (%p1677) target = $region68
      $region67: #{classify_forward.3} parent=5 // pred_region
        %s1680 = ssub.s32 %s19, 2
        // Predicated region
        $region69: #{classify_forward.3} parent=67 // pred_check
          %p1681 = pneg %p263
        $region70: #{classify_forward.3} parent=67 // pred_check_branch
          %1683 = sbr.rel (%p1681) target = $region72
        $region71: #{classify_forward.3} parent=67 // pred_region
          %s1684 = sand.u32 %s248, 1
          %s1685 = scalar_lea.sflag [#allocation5], %s1684
          %s1686 = sand.u32 %s248, 1
          %s1687 = scalar_lea.vmem [#allocation4], %s1686
          %1688 = dma.done %s1685, 16
        $region72: #{classify_forward.3} parent=67 // pred_fallthru
          _
      $region68: #{classify_forward.3} parent=5 // pred_fallthru
        _
    $region6: #{classify_forward.3} parent=1 // loop_footer
      %s23 = sadd.s32 1, %s19
    $region7: #{classify_forward.3} parent=1 // loop_footer_branch
      %18 = sbr.rel target = $region3
    $region8: #{classify_forward.3} parent=1 // loop_exit
      _
    %1689 = vsyncpa [#allocation5], 1
    %s1690 = scalar_lea.sflag [#allocation5], 1
    %1691 = vsyncpa %s1690, 1

</llo_original>
